<compile_context>
chip_gen: v5e
topology: v5e:2x2
jax: 0.10.0
libtpu: 0.0.40
codegen_flags: <defaults>
</compile_context>

<pallas_src>
import jax
import jax.numpy as jnp
from jax import lax
from jax.experimental import pallas as pl
from jax.experimental.pallas import tpu as pltpu

IMG_DIM = 2048
TXT_DIM = 768
HID_DIM = 512
NUM_CLASSES = 4          # len(CLASS_NAMES)
NCLS_PAD = 128           # lane-dense padded classifier width
TB_MAX = 512             # max batch tile (safe on v5e/v6e/v7x VMEM)


def _round_up(x, m):
    return ((x + m - 1) // m) * m


def _pick_tiling(batch):
    """Balanced batch tiling: (tile_rows, padded_batch)."""
    b_min = _round_up(batch, 8)                       # f32 sublane minimum
    # >= 2 grid steps when there is enough work so both v7x TensorCores get a tile.
    min_steps = 2 if b_min >= 16 else 1
    steps = max(pl.cdiv(b_min, TB_MAX), min_steps)
    align = 16 if b_min >= 16 else 8                  # keep bf16 intermediates packed
    tb = _round_up(pl.cdiv(b_min, steps), align)
    return tb, steps * tb


def _fusion_head_kernel(img_ref, txt_ref,
                        w_img_ref, b_img_ref,
                        w_txt_ref, b_txt_ref,
                        w_cls_img_ref, w_cls_txt_ref, b_cls_ref,
                        out_ref):
    # Branch Linear + ReLU (Dropout identity in eval). Features arrive f32 and are
    # cast to bf16 on the VPU (hidden under the MXU/DMA slots); f32 accumulation.
    h_img = jnp.dot(img_ref[...].astype(jnp.bfloat16), w_img_ref[...],
                    preferred_element_type=jnp.float32) + b_img_ref[...]
    h_img = jnp.maximum(h_img, 0.0)

    h_txt = jnp.dot(txt_ref[...].astype(jnp.bfloat16), w_txt_ref[...],
                    preferred_element_type=jnp.float32) + b_txt_ref[...]
    h_txt = jnp.maximum(h_txt, 0.0)

    # F.normalize(x, p=2, dim=1, eps=1e-12), deferred past the classifier matmul:
    #   (h / ||h||) @ W == (h @ W) / ||h||
    # rsqrt(max(sum(h^2), eps^2)) == 1 / max(||h||, eps)  (single EUP op, zero-safe).
    eps2 = 1e-24
    inv_img = lax.rsqrt(jnp.maximum(
        jnp.sum(h_img * h_img, axis=-1, keepdims=True), eps2))
    inv_txt = lax.rsqrt(jnp.maximum(
        jnp.sum(h_txt * h_txt, axis=-1, keepdims=True), eps2))

    # Classifier Linear(1024, num_classes) on concat([n_img, n_txt]) realized as a
    # split bf16 matmul over the image/text halves; lane-dense padded to 128 outputs.
    logits_img = jnp.dot(h_img.astype(jnp.bfloat16), w_cls_img_ref[...],
                         preferred_element_type=jnp.float32)
    logits_txt = jnp.dot(h_txt.astype(jnp.bfloat16), w_cls_txt_ref[...],
                         preferred_element_type=jnp.float32)
    out_ref[...] = (logits_img * inv_img + logits_txt * inv_txt
                    + b_cls_ref[...]).astype(out_ref.dtype)


def prepare_params(params):
    """One-time (model-load) weight formatting: bf16 casts + lane padding."""
    pad_n = NCLS_PAD - NUM_CLASSES
    return {
        "w_img": params["w_img"].astype(jnp.bfloat16),
        "b_img": params["b_img"].astype(jnp.float32).reshape(1, HID_DIM),
        "w_txt": params["w_txt"].astype(jnp.bfloat16),
        "b_txt": params["b_txt"].astype(jnp.float32).reshape(1, HID_DIM),
        "w_cls_img": jnp.pad(params["w_cls_img"].astype(jnp.float32),
                             ((0, 0), (0, pad_n))).astype(jnp.bfloat16),
        "w_cls_txt": jnp.pad(params["w_cls_txt"].astype(jnp.float32),
                             ((0, 0), (0, pad_n))).astype(jnp.bfloat16),
        "b_cls": jnp.pad(params["b_cls"].astype(jnp.float32).reshape(1, NUM_CLASSES),
                         ((0, 0), (0, pad_n))),
    }


def garbage_classifier_head(img_feat, txt_feat, prepped):
    """img_feat: [B, 2048] f32, txt_feat: [B, 768] f32 -> logits [B, 4] f32.

    `prepped` is the output of prepare_params() (done once at load time).
    """
    B = img_feat.shape[0]
    tb, b_pad = _pick_tiling(B)

    img_x = img_feat.astype(jnp.float32)
    txt_x = txt_feat.astype(jnp.float32)
    if b_pad != B:
        img_x = jnp.pad(img_x, ((0, b_pad - B), (0, 0)))
        txt_x = jnp.pad(txt_x, ((0, b_pad - B), (0, 0)))

    grid = (b_pad // tb,)

    def feat_spec(d):
        return pl.BlockSpec((tb, d), lambda i: (i, 0))

    def const_spec(shape):
        # Weights/biases: same block every grid step -> DMA'd once, VMEM-resident.
        return pl.BlockSpec(shape, lambda i: (0, 0))

    out = pl.pallas_call(
        _fusion_head_kernel,
        out_shape=jax.ShapeDtypeStruct((b_pad, NCLS_PAD), jnp.float32),
        grid=grid,
        in_specs=[
            feat_spec(IMG_DIM),                    # img features   (tb, 2048) f32
            feat_spec(TXT_DIM),                    # txt features   (tb, 768)  f32
            const_spec((IMG_DIM, HID_DIM)),        # w_img          bf16
            const_spec((1, HID_DIM)),              # b_img          f32
            const_spec((TXT_DIM, HID_DIM)),        # w_txt          bf16
            const_spec((1, HID_DIM)),              # b_txt          f32
            const_spec((HID_DIM, NCLS_PAD)),       # w_cls (img half) bf16
            const_spec((HID_DIM, NCLS_PAD)),       # w_cls (txt half) bf16
            const_spec((1, NCLS_PAD)),             # b_cls          f32
        ],
        out_specs=pl.BlockSpec((tb, NCLS_PAD), lambda i: (i, 0)),
        compiler_params=pltpu.CompilerParams(
            dimension_semantics=("parallel",),     # megacore batch split on v7x
            vmem_limit_bytes=48 * 1024 * 1024,
        ),
    )(img_x, txt_x,
      prepped["w_img"], prepped["b_img"],
      prepped["w_txt"], prepped["b_txt"],
      prepped["w_cls_img"], prepped["w_cls_txt"], prepped["b_cls"])

    return out[:B, :NUM_CLASSES]


def _reference_head(img_feat, txt_feat, params):
    # Mirrors the kernel's bf16 quantization (features/branch weights/classifier)
    # so the comparison isolates kernel correctness rather than dtype choice.
    h_img = jnp.maximum(
        jnp.dot(img_feat.astype(jnp.bfloat16), params["w_img"].astype(jnp.bfloat16),
                preferred_element_type=jnp.float32) + params["b_img"], 0.0)
    h_txt = jnp.maximum(
        jnp.dot(txt_feat.astype(jnp.bfloat16), params["w_txt"].astype(jnp.bfloat16),
                preferred_element_type=jnp.float32) + params["b_txt"], 0.0)
    eps = 1e-12
    n_img = h_img / jnp.maximum(jnp.linalg.norm(h_img, axis=-1, keepdims=True), eps)
    n_txt = h_txt / jnp.maximum(jnp.linalg.norm(h_txt, axis=-1, keepdims=True), eps)
    return (jnp.dot(n_img.astype(jnp.bfloat16),
                    params["w_cls_img"].astype(jnp.bfloat16),
                    preferred_element_type=jnp.float32)
            + jnp.dot(n_txt.astype(jnp.bfloat16),
                      params["w_cls_txt"].astype(jnp.bfloat16),
                      preferred_element_type=jnp.float32)
            + params["b_cls"])


def init_params(key):
    ks = jax.random.split(key, 6)
    # Weights stored as [in, out] (transpose of nn.Linear's [out, in]).
    return {
        "w_img": jax.random.normal(ks[0], (IMG_DIM, HID_DIM), jnp.float32) * 0.02,
        "b_img": jax.random.normal(ks[1], (1, HID_DIM), jnp.float32) * 0.02,
        "w_txt": jax.random.normal(ks[2], (TXT_DIM, HID_DIM), jnp.float32) * 0.02,
        "b_txt": jax.random.normal(ks[3], (1, HID_DIM), jnp.float32) * 0.02,
        # Classifier Linear(1024, 4) split into image-half / text-half.
        "w_cls_img": jax.random.normal(ks[4], (HID_DIM, NUM_CLASSES), jnp.float32) * 0.02,
        "w_cls_txt": jax.random.normal(ks[5], (HID_DIM, NUM_CLASSES), jnp.float32) * 0.02,
        "b_cls": jnp.zeros((1, NUM_CLASSES), jnp.float32),
    }


if __name__ == "__main__":
    key = jax.random.PRNGKey(0)
    k_img, k_txt, k_param = jax.random.split(key, 3)

    B = 2
    # Stand-ins for the pretrained backbone outputs:
    img_feat = jax.random.normal(k_img, (B, IMG_DIM), jnp.float32)   # ResNet50 features
    txt_feat = jax.random.normal(k_txt, (B, TXT_DIM), jnp.float32)   # DistilBERT CLS feats

    params = init_params(k_param)
    prepped = prepare_params(params)          # one-time, model-load-time weight prep

    out = garbage_classifier_head(img_feat, txt_feat, prepped)
    out = jax.block_until_ready(out)

    ref = _reference_head(img_feat, txt_feat, params)
    assert out.shape == (B, NUM_CLASSES)
    # bf16 matmuls -> looser tolerance than a pure-f32 head.
    assert jnp.allclose(out, ref, atol=2e-2, rtol=2e-2), "mismatch vs reference"

    print("KERNEL_OK")
</pallas_src>

<mosaic_0001>
module attributes {stable_mosaic.version = 11 : i64} {
  func.func @_fusion_head_kernel(%arg0: i32, %arg1: memref<8x2048xf32, #tpu.memory_space<vmem>>, %arg2: memref<8x768xf32, #tpu.memory_space<vmem>>, %arg3: memref<2048x512xbf16, #tpu.memory_space<vmem>>, %arg4: memref<1x512xf32, #tpu.memory_space<vmem>>, %arg5: memref<768x512xbf16, #tpu.memory_space<vmem>>, %arg6: memref<1x512xf32, #tpu.memory_space<vmem>>, %arg7: memref<512x128xbf16, #tpu.memory_space<vmem>>, %arg8: memref<512x128xbf16, #tpu.memory_space<vmem>>, %arg9: memref<1x128xf32, #tpu.memory_space<vmem>>, %arg10: memref<8x128xf32, #tpu.memory_space<vmem>>) attributes {dimension_semantics = [#tpu.dimension_semantics<parallel>], iteration_bounds = array<i64: 1>, scalar_prefetch = 0 : i64, scratch_operands = 0 : i64, tpu.core_type = #tpu.core_type<tc>, window_params = [{transform_indices = @transform_0, window_bounds = array<i64: 8, 2048>}, {transform_indices = @transform_1, window_bounds = array<i64: 8, 768>}, {pipeline_mode = #tpu.pipeline_mode<synchronous>, transform_indices = @transform_2, window_bounds = array<i64: 2048, 512>}, {pipeline_mode = #tpu.pipeline_mode<synchronous>, transform_indices = @transform_3, window_bounds = array<i64: 1, 512>}, {pipeline_mode = #tpu.pipeline_mode<synchronous>, transform_indices = @transform_4, window_bounds = array<i64: 768, 512>}, {pipeline_mode = #tpu.pipeline_mode<synchronous>, transform_indices = @transform_5, window_bounds = array<i64: 1, 512>}, {pipeline_mode = #tpu.pipeline_mode<synchronous>, transform_indices = @transform_6, window_bounds = array<i64: 512, 128>}, {pipeline_mode = #tpu.pipeline_mode<synchronous>, transform_indices = @transform_7, window_bounds = array<i64: 512, 128>}, {pipeline_mode = #tpu.pipeline_mode<synchronous>, transform_indices = @transform_8, window_bounds = array<i64: 1, 128>}, {transform_indices = @transform_9, window_bounds = array<i64: 8, 128>}]} {
    %c0 = arith.constant 0 : index
    %c0_0 = arith.constant 0 : index
    %0 = vector.load %arg1[%c0, %c0_0] : memref<8x2048xf32, #tpu.memory_space<vmem>>, vector<8x2048xf32>
    %1 = arith.truncf %0 : vector<8x2048xf32> to vector<8x2048xbf16>
    %c0_1 = arith.constant 0 : index
    %c0_2 = arith.constant 0 : index
    %2 = vector.load %arg3[%c0_1, %c0_2] : memref<2048x512xbf16, #tpu.memory_space<vmem>>, vector<2048x512xbf16>
    %cst = arith.constant dense<0.000000e+00> : vector<8x512xf32>
    %3 = tpu.matmul %1, %2, %cst {dimension_numbers = #tpu.dot_dimension_numbers<[1], [0], [0], [1], [0, 0, 1, 1], [], []>} : vector<8x2048xbf16>, vector<2048x512xbf16>, vector<8x512xf32> -> vector<8x512xf32>
    %c0_3 = arith.constant 0 : index
    %c0_4 = arith.constant 0 : index
    %4 = vector.load %arg4[%c0_3, %c0_4] : memref<1x512xf32, #tpu.memory_space<vmem>>, vector<1x512xf32>
    %5 = vector.broadcast %4 : vector<1x512xf32> to vector<8x512xf32>
    %6 = arith.addf %3, %5 : vector<8x512xf32>
    %cst_5 = arith.constant 0.000000e+00 : f32
    %7 = vector.broadcast %cst_5 : f32 to vector<8x512xf32>
    %8 = arith.maximumf %6, %7 : vector<8x512xf32>
    %c0_6 = arith.constant 0 : index
    %c0_7 = arith.constant 0 : index
    %9 = vector.load %arg2[%c0_6, %c0_7] : memref<8x768xf32, #tpu.memory_space<vmem>>, vector<8x768xf32>
    %10 = arith.truncf %9 : vector<8x768xf32> to vector<8x768xbf16>
    %c0_8 = arith.constant 0 : index
    %c0_9 = arith.constant 0 : index
    %11 = vector.load %arg5[%c0_8, %c0_9] : memref<768x512xbf16, #tpu.memory_space<vmem>>, vector<768x512xbf16>
    %cst_10 = arith.constant dense<0.000000e+00> : vector<8x512xf32>
    %12 = tpu.matmul %10, %11, %cst_10 {dimension_numbers = #tpu.dot_dimension_numbers<[1], [0], [0], [1], [0, 0, 1, 1], [], []>} : vector<8x768xbf16>, vector<768x512xbf16>, vector<8x512xf32> -> vector<8x512xf32>
    %c0_11 = arith.constant 0 : index
    %c0_12 = arith.constant 0 : index
    %13 = vector.load %arg6[%c0_11, %c0_12] : memref<1x512xf32, #tpu.memory_space<vmem>>, vector<1x512xf32>
    %14 = vector.broadcast %13 : vector<1x512xf32> to vector<8x512xf32>
    %15 = arith.addf %12, %14 : vector<8x512xf32>
    %cst_13 = arith.constant 0.000000e+00 : f32
    %16 = vector.broadcast %cst_13 : f32 to vector<8x512xf32>
    %17 = arith.maximumf %15, %16 : vector<8x512xf32>
    %18 = arith.mulf %8, %8 : vector<8x512xf32>
    %cst_14 = arith.constant dense<0.000000e+00> : vector<8xf32>
    %19 = vector.multi_reduction <add>, %18, %cst_14 [1] : vector<8x512xf32> to vector<8xf32>
    %20 = vector.shape_cast %19 : vector<8xf32> to vector<8x1xf32>
    %cst_15 = arith.constant 1.000000e-24 : f32
    %21 = vector.broadcast %cst_15 : f32 to vector<8x1xf32>
    %22 = arith.maximumf %20, %21 : vector<8x1xf32>
    %23 = math.rsqrt %22 : vector<8x1xf32>
    %24 = arith.mulf %17, %17 : vector<8x512xf32>
    %cst_16 = arith.constant dense<0.000000e+00> : vector<8xf32>
    %25 = vector.multi_reduction <add>, %24, %cst_16 [1] : vector<8x512xf32> to vector<8xf32>
    %26 = vector.shape_cast %25 : vector<8xf32> to vector<8x1xf32>
    %cst_17 = arith.constant 1.000000e-24 : f32
    %27 = vector.broadcast %cst_17 : f32 to vector<8x1xf32>
    %28 = arith.maximumf %26, %27 : vector<8x1xf32>
    %29 = math.rsqrt %28 : vector<8x1xf32>
    %30 = arith.truncf %8 : vector<8x512xf32> to vector<8x512xbf16>
    %c0_18 = arith.constant 0 : index
    %c0_19 = arith.constant 0 : index
    %31 = vector.load %arg7[%c0_18, %c0_19] : memref<512x128xbf16, #tpu.memory_space<vmem>>, vector<512x128xbf16>
    %cst_20 = arith.constant dense<0.000000e+00> : vector<8x128xf32>
    %32 = tpu.matmul %30, %31, %cst_20 {dimension_numbers = #tpu.dot_dimension_numbers<[1], [0], [0], [1], [0, 0, 1, 1], [], []>} : vector<8x512xbf16>, vector<512x128xbf16>, vector<8x128xf32> -> vector<8x128xf32>
    %33 = arith.truncf %17 : vector<8x512xf32> to vector<8x512xbf16>
    %c0_21 = arith.constant 0 : index
    %c0_22 = arith.constant 0 : index
    %34 = vector.load %arg8[%c0_21, %c0_22] : memref<512x128xbf16, #tpu.memory_space<vmem>>, vector<512x128xbf16>
    %cst_23 = arith.constant dense<0.000000e+00> : vector<8x128xf32>
    %35 = tpu.matmul %33, %34, %cst_23 {dimension_numbers = #tpu.dot_dimension_numbers<[1], [0], [0], [1], [0, 0, 1, 1], [], []>} : vector<8x512xbf16>, vector<512x128xbf16>, vector<8x128xf32> -> vector<8x128xf32>
    %36 = vector.broadcast %23 : vector<8x1xf32> to vector<8x128xf32>
    %37 = arith.mulf %32, %36 : vector<8x128xf32>
    %38 = vector.broadcast %29 : vector<8x1xf32> to vector<8x128xf32>
    %39 = arith.mulf %35, %38 : vector<8x128xf32>
    %40 = arith.addf %37, %39 : vector<8x128xf32>
    %c0_24 = arith.constant 0 : index
    %c0_25 = arith.constant 0 : index
    %41 = vector.load %arg9[%c0_24, %c0_25] : memref<1x128xf32, #tpu.memory_space<vmem>>, vector<1x128xf32>
    %42 = vector.broadcast %41 : vector<1x128xf32> to vector<8x128xf32>
    %43 = arith.addf %40, %42 : vector<8x128xf32>
    %c0_26 = arith.constant 0 : index
    %c0_27 = arith.constant 0 : index
    %44 = vector.load %arg10[%c0_26, %c0_27] : memref<8x128xf32, #tpu.memory_space<vmem>>, vector<8x128xf32>
    tpu.vector_store %arg10[%c0_26, %c0_27], %43 {strides = array<i32>} : memref<8x128xf32, #tpu.memory_space<vmem>>, vector<8x128xf32>,
    return
  }
  func.func @transform_0(%arg0: i32) -> (i32, i32) {
    %c0_i32 = arith.constant 0 : i32
    %c0_i32_0 = arith.constant 0 : i32
    return %arg0, %c0_i32 : i32, i32
  }
  func.func @transform_1(%arg0: i32) -> (i32, i32) {
    %c0_i32 = arith.constant 0 : i32
    %c0_i32_0 = arith.constant 0 : i32
    return %arg0, %c0_i32 : i32, i32
  }
  func.func @transform_2(%arg0: i32) -> (i32, i32) {
    %c0_i32 = arith.constant 0 : i32
    %c0_i32_0 = arith.constant 0 : i32
    %c0_i32_1 = arith.constant 0 : i32
    return %c0_i32, %c0_i32_0 : i32, i32
  }
  func.func @transform_3(%arg0: i32) -> (i32, i32) {
    %c0_i32 = arith.constant 0 : i32
    %c0_i32_0 = arith.constant 0 : i32
    %c0_i32_1 = arith.constant 0 : i32
    return %c0_i32, %c0_i32_0 : i32, i32
  }
  func.func @transform_4(%arg0: i32) -> (i32, i32) {
    %c0_i32 = arith.constant 0 : i32
    %c0_i32_0 = arith.constant 0 : i32
    %c0_i32_1 = arith.constant 0 : i32
    return %c0_i32, %c0_i32_0 : i32, i32
  }
  func.func @transform_5(%arg0: i32) -> (i32, i32) {
    %c0_i32 = arith.constant 0 : i32
    %c0_i32_0 = arith.constant 0 : i32
    %c0_i32_1 = arith.constant 0 : i32
    return %c0_i32, %c0_i32_0 : i32, i32
  }
  func.func @transform_6(%arg0: i32) -> (i32, i32) {
    %c0_i32 = arith.constant 0 : i32
    %c0_i32_0 = arith.constant 0 : i32
    %c0_i32_1 = arith.constant 0 : i32
    return %c0_i32, %c0_i32_0 : i32, i32
  }
  func.func @transform_7(%arg0: i32) -> (i32, i32) {
    %c0_i32 = arith.constant 0 : i32
    %c0_i32_0 = arith.constant 0 : i32
    %c0_i32_1 = arith.constant 0 : i32
    return %c0_i32, %c0_i32_0 : i32, i32
  }
  func.func @transform_8(%arg0: i32) -> (i32, i32) {
    %c0_i32 = arith.constant 0 : i32
    %c0_i32_0 = arith.constant 0 : i32
    %c0_i32_1 = arith.constant 0 : i32
    return %c0_i32, %c0_i32_0 : i32, i32
  }
  func.func @transform_9(%arg0: i32) -> (i32, i32) {
    %c0_i32 = arith.constant 0 : i32
    %c0_i32_0 = arith.constant 0 : i32
    return %arg0, %c0_i32 : i32, i32
  }
}

</mosaic_0001>

<llo_original>
// kernel: tpu_custom_call.1
$region0: #{tpu_custom_call.1}
  #allocation0 [shape = 'u32[]', space=smem, size = 0x4, offset = 0x4, fixed_abs, tag = 'smem constant byte address 0x4 - core index']
  #allocation1 [shape = 'u32[72,128]{1,0:T(1,128)}', space=vmem, size = 0x9000, scoped, tag = 'internal scratch']
  %s0 = inlined_call_operand.hbm [shape: f32[8,2048], index: 0, kind: input, shape index: {}]
  %s1 = inlined_call_operand.hbm [shape: f32[8,768], index: 1, kind: input, shape index: {}]
  %s2 = inlined_call_operand.hbm [shape: bf16[2048,512], index: 2, kind: input, shape index: {}]
  %s3 = inlined_call_operand.hbm [shape: f32[1,512], index: 3, kind: input, shape index: {}]
  %s4 = inlined_call_operand.hbm [shape: bf16[768,512], index: 4, kind: input, shape index: {}]
  %s5 = inlined_call_operand.hbm [shape: f32[1,512], index: 5, kind: input, shape index: {}]
  %s6 = inlined_call_operand.hbm [shape: bf16[512,128], index: 6, kind: input, shape index: {}]
  %s7 = inlined_call_operand.hbm [shape: bf16[512,128], index: 7, kind: input, shape index: {}]
  %s8 = inlined_call_operand.hbm [shape: f32[1,128], index: 8, kind: input, shape index: {}]
  %s9 = inlined_call_operand.hbm [shape: f32[8,128], index: 9, kind: output, shape index: {}]
  %s10 = sld [smem:[#allocation0]]
  $region82: #{tpu_custom_call.1} parent=0
    _
  %s12 = ssub.s32 1, %s10
  %s13 = scalar_select 0, %s12, %s10
  $region1: #{tpu_custom_call.1} parent=0
    #allocation2 [shape = 'u8[65536]{0}', space=vmem, size = 0x10000, scoped, tag = 'input window, operand 0, single buffered']
    #allocation3 [shape = 's32[1]{0}', space=sflag, size = 0x4, scoped, tag = 'scoped memory for tpu_custom_call.1']
    #allocation4 [shape = 's32[1]{0}', space=sflag, size = 0x4, scoped, tag = 'scoped memory for tpu_custom_call.1']
    #allocation5 [shape = 'u8[24576]{0}', space=vmem, size = 0x6000, scoped, tag = 'input window, operand 1, single buffered']
    #allocation6 [shape = 's32[1]{0}', space=sflag, size = 0x4, scoped, tag = 'scoped memory for tpu_custom_call.1']
    #allocation7 [shape = 'u8[2097152]{0}', space=vmem, size = 0x200000, scoped, tag = 'input window, operand 2, single buffered']
    #allocation8 [shape = 'u8[2048]{0}', space=vmem, size = 0x800, scoped, tag = 'input window, operand 3, single buffered']
    #allocation9 [shape = 's32[1]{0}', space=sflag, size = 0x4, scoped, tag = 'scoped memory for tpu_custom_call.1']
    #allocation10 [shape = 'u8[786432]{0}', space=vmem, size = 0xc0000, scoped, tag = 'input window, operand 4, single buffered']
    #allocation11 [shape = 'u8[2048]{0}', space=vmem, size = 0x800, scoped, tag = 'input window, operand 5, single buffered']
    #allocation12 [shape = 's32[1]{0}', space=sflag, size = 0x4, scoped, tag = 'scoped memory for tpu_custom_call.1']
    #allocation13 [shape = 'u8[131072]{0}', space=vmem, size = 0x20000, scoped, tag = 'input window, operand 6, single buffered']
    #allocation14 [shape = 'u8[131072]{0}', space=vmem, size = 0x20000, scoped, tag = 'input window, operand 7, single buffered']
    #allocation15 [shape = 's32[1]{0}', space=sflag, size = 0x4, scoped, tag = 'scoped memory for tpu_custom_call.1']
    #allocation16 [shape = 'u8[512]{0}', space=vmem, size = 0x400, scoped, tag = 'input window, operand 8, single buffered']
    #allocation17 [shape = 'u8[4096]{0}', space=vmem, size = 0x1000, scoped, tag = 'output window, operand 0, single buffered']
    %14 = vsyncpa [#allocation3], 0
    %15 = vsyncpa [#allocation6], 0
    %16 = vsyncpa [#allocation9], 0
    %17 = vsyncpa [#allocation12], 0
    %18 = vsyncpa [#allocation15], 0
    %19 = vsyncpa [#allocation4], 0
    // Predicated region
    $region2: #{tpu_custom_call.1} parent=1 // pred_check
      _
    $region3: #{tpu_custom_call.1} parent=1 // pred_check_branch
      %21 = sbr.rel (0) target = $region5
    $region4: #{tpu_custom_call.1} parent=1 // pred_region
      %23 = vsyncadd [#allocation3], 0
      %s25 = sshll.u32 %s0, 4
      %s26 = int_to_ptr.hbm [resolvable:$true] %s25
      %s27 = sshll.u32 [#allocation2], 4
      %s28 = int_to_ptr.vmem [resolvable:$true] %s27
      %30 = dma.hbm_to_vmem [thread:$0]  %s26, 2048, %s28, [#allocation3]
    $region5: #{tpu_custom_call.1} parent=1 // pred_fallthru
      _
    // Predicated region
    $region6: #{tpu_custom_call.1} parent=1 // pred_check
      _
    $region7: #{tpu_custom_call.1} parent=1 // pred_check_branch
      %32 = sbr.rel (0) target = $region9
    $region8: #{tpu_custom_call.1} parent=1 // pred_region
      %34 = vsyncadd [#allocation6], 0
      %s36 = sshll.u32 %s1, 4
      %s37 = int_to_ptr.hbm [resolvable:$true] %s36
      %s38 = sshll.u32 [#allocation5], 4
      %s39 = int_to_ptr.vmem [resolvable:$true] %s38
      %41 = dma.hbm_to_vmem [thread:$0]  %s37, 768, %s39, [#allocation6]
    $region9: #{tpu_custom_call.1} parent=1 // pred_fallthru
      _
    // Predicated region
    $region10: #{tpu_custom_call.1} parent=1 // pred_check
      _
    $region11: #{tpu_custom_call.1} parent=1 // pred_check_branch
      %43 = sbr.rel (0) target = $region13
    $region12: #{tpu_custom_call.1} parent=1 // pred_region
      %45 = vsyncadd [#allocation6], 0
      %s46 = sshll.u32 %s2, 4
      %s47 = int_to_ptr.hbm [resolvable:$true] %s46
      %s48 = sshll.u32 [#allocation7], 4
      %s49 = int_to_ptr.vmem [resolvable:$true] %s48
      %54 = dma.hbm_to_vmem [thread:$0]  %s47, 65536, %s49, [#allocation6], 256, 256, 16
    $region13: #{tpu_custom_call.1} parent=1 // pred_fallthru
      _
    // Predicated region
    $region14: #{tpu_custom_call.1} parent=1 // pred_check
      _
    $region15: #{tpu_custom_call.1} parent=1 // pred_check_branch
      %56 = sbr.rel (0) target = $region17
    $region16: #{tpu_custom_call.1} parent=1 // pred_region
      %58 = vsyncadd [#allocation9], 0
      %s60 = sshll.u32 %s3, 4
      %s61 = int_to_ptr.hbm [resolvable:$true] %s60
      %s62 = sshll.u32 [#allocation8], 4
      %s63 = int_to_ptr.vmem [resolvable:$true] %s62
      %65 = dma.hbm_to_vmem [thread:$0]  %s61, 64, %s63, [#allocation9]
    $region17: #{tpu_custom_call.1} parent=1 // pred_fallthru
      _
    // Predicated region
    $region18: #{tpu_custom_call.1} parent=1 // pred_check
      _
    $region19: #{tpu_custom_call.1} parent=1 // pred_check_branch
      %67 = sbr.rel (0) target = $region21
    $region20: #{tpu_custom_call.1} parent=1 // pred_region
      %69 = vsyncadd [#allocation9], 0
      %s70 = sshll.u32 %s4, 4
      %s71 = int_to_ptr.hbm [resolvable:$true] %s70
      %s72 = sshll.u32 [#allocation10], 4
      %s73 = int_to_ptr.vmem [resolvable:$true] %s72
      %78 = dma.hbm_to_vmem [thread:$0]  %s71, 24576, %s73, [#allocation9], 256, 256, 16
    $region21: #{tpu_custom_call.1} parent=1 // pred_fallthru
      _
    // Predicated region
    $region22: #{tpu_custom_call.1} parent=1 // pred_check
      _
    $region23: #{tpu_custom_call.1} parent=1 // pred_check_branch
      %80 = sbr.rel (0) target = $region25
    $region24: #{tpu_custom_call.1} parent=1 // pred_region
      %82 = vsyncadd [#allocation12], 0
      %s84 = sshll.u32 %s5, 4
      %s85 = int_to_ptr.hbm [resolvable:$true] %s84
      %s86 = sshll.u32 [#allocation11], 4
      %s87 = int_to_ptr.vmem [resolvable:$true] %s86
      %89 = dma.hbm_to_vmem [thread:$0]  %s85, 64, %s87, [#allocation12]
    $region25: #{tpu_custom_call.1} parent=1 // pred_fallthru
      _
    // Predicated region
    $region26: #{tpu_custom_call.1} parent=1 // pred_check
      _
    $region27: #{tpu_custom_call.1} parent=1 // pred_check_branch
      %91 = sbr.rel (0) target = $region29
    $region28: #{tpu_custom_call.1} parent=1 // pred_region
      %93 = vsyncadd [#allocation12], 0
      %s94 = sshll.u32 %s6, 4
      %s95 = int_to_ptr.hbm [resolvable:$true] %s94
      %s96 = sshll.u32 [#allocation13], 4
      %s97 = int_to_ptr.vmem [resolvable:$true] %s96
      %102 = dma.hbm_to_vmem [thread:$0]  %s95, 4096, %s97, [#allocation12], 64, 64, 4
    $region29: #{tpu_custom_call.1} parent=1 // pred_fallthru
      _
    // Predicated region
    $region30: #{tpu_custom_call.1} parent=1 // pred_check
      _
    $region31: #{tpu_custom_call.1} parent=1 // pred_check_branch
      %104 = sbr.rel (0) target = $region33
    $region32: #{tpu_custom_call.1} parent=1 // pred_region
      %106 = vsyncadd [#allocation15], 0
      %s107 = sshll.u32 %s7, 4
      %s108 = int_to_ptr.hbm [resolvable:$true] %s107
      %s109 = sshll.u32 [#allocation14], 4
      %s110 = int_to_ptr.vmem [resolvable:$true] %s109
      %115 = dma.hbm_to_vmem [thread:$0]  %s108, 4096, %s110, [#allocation15], 64, 64, 4
    $region33: #{tpu_custom_call.1} parent=1 // pred_fallthru
      _
    // Predicated region
    $region34: #{tpu_custom_call.1} parent=1 // pred_check
      _
    $region35: #{tpu_custom_call.1} parent=1 // pred_check_branch
      %117 = sbr.rel (0) target = $region37
    $region36: #{tpu_custom_call.1} parent=1 // pred_region
      %119 = vsyncadd [#allocation15], 0
      %s121 = sshll.u32 %s8, 4
      %s122 = int_to_ptr.hbm [resolvable:$true] %s121
      %s123 = sshll.u32 [#allocation16], 4
      %s124 = int_to_ptr.vmem [resolvable:$true] %s123
      %126 = dma.hbm_to_vmem [thread:$0]  %s122, 16, %s124, [#allocation15]
    $region37: #{tpu_custom_call.1} parent=1 // pred_fallthru
      _
    // Predicated region
    $region38: #{tpu_custom_call.1} parent=1 // pred_check
      _
    $region39: #{tpu_custom_call.1} parent=1 // pred_check_branch
      %128 = sbr.rel (0) target = $region41
    $region40: #{tpu_custom_call.1} parent=1 // pred_region
      %130 = dma.done [#allocation3], 2048
    $region41: #{tpu_custom_call.1} parent=1 // pred_fallthru
      _
    // Predicated region
    $region42: #{tpu_custom_call.1} parent=1 // pred_check
      _
    $region43: #{tpu_custom_call.1} parent=1 // pred_check_branch
      %132 = sbr.rel (0) target = $region45
    $region44: #{tpu_custom_call.1} parent=1 // pred_region
      %134 = dma.done [#allocation6], 768
    $region45: #{tpu_custom_call.1} parent=1 // pred_fallthru
      _
    // Predicated region
    $region46: #{tpu_custom_call.1} parent=1 // pred_check
      _
    $region47: #{tpu_custom_call.1} parent=1 // pred_check_branch
      %136 = sbr.rel (0) target = $region49
    $region48: #{tpu_custom_call.1} parent=1 // pred_region
      %138 = dma.done [#allocation6], 65536
    $region49: #{tpu_custom_call.1} parent=1 // pred_fallthru
      _
    // Predicated region
    $region50: #{tpu_custom_call.1} parent=1 // pred_check
      _
    $region51: #{tpu_custom_call.1} parent=1 // pred_check_branch
      %140 = sbr.rel (0) target = $region53
    $region52: #{tpu_custom_call.1} parent=1 // pred_region
      %142 = dma.done [#allocation9], 64
    $region53: #{tpu_custom_call.1} parent=1 // pred_fallthru
      _
    // Predicated region
    $region54: #{tpu_custom_call.1} parent=1 // pred_check
      _
    $region55: #{tpu_custom_call.1} parent=1 // pred_check_branch
      %144 = sbr.rel (0) target = $region57
    $region56: #{tpu_custom_call.1} parent=1 // pred_region
      %146 = dma.done [#allocation9], 24576
    $region57: #{tpu_custom_call.1} parent=1 // pred_fallthru
      _
    // Predicated region
    $region58: #{tpu_custom_call.1} parent=1 // pred_check
      _
    $region59: #{tpu_custom_call.1} parent=1 // pred_check_branch
      %148 = sbr.rel (0) target = $region61
    $region60: #{tpu_custom_call.1} parent=1 // pred_region
      %150 = dma.done [#allocation12], 64
    $region61: #{tpu_custom_call.1} parent=1 // pred_fallthru
      _
    // Predicated region
    $region62: #{tpu_custom_call.1} parent=1 // pred_check
      _
    $region63: #{tpu_custom_call.1} parent=1 // pred_check_branch
      %152 = sbr.rel (0) target = $region65
    $region64: #{tpu_custom_call.1} parent=1 // pred_region
      %154 = dma.done [#allocation12], 4096
    $region65: #{tpu_custom_call.1} parent=1 // pred_fallthru
      _
    // Predicated region
    $region66: #{tpu_custom_call.1} parent=1 // pred_check
      _
    $region67: #{tpu_custom_call.1} parent=1 // pred_check_branch
      %156 = sbr.rel (0) target = $region69
    $region68: #{tpu_custom_call.1} parent=1 // pred_region
      %158 = dma.done [#allocation15], 4096
    $region69: #{tpu_custom_call.1} parent=1 // pred_fallthru
      _
    // Predicated region
    $region70: #{tpu_custom_call.1} parent=1 // pred_check
      _
    $region71: #{tpu_custom_call.1} parent=1 // pred_check_branch
      %160 = sbr.rel (0) target = $region73
    $region72: #{tpu_custom_call.1} parent=1 // pred_region
      %162 = dma.done [#allocation15], 16
    $region73: #{tpu_custom_call.1} parent=1 // pred_fallthru
      _
    %v163 = vld [vmem:[#allocation2] sm:$0xff]
    %v164 = vld [vmem:[#allocation2 + $0x8] sm:$0xff]
    %v165 = vld [vmem:[#allocation2 + $0x10] sm:$0xff]
    %v166 = vld [vmem:[#allocation2 + $0x18] sm:$0xff]
    %v167 = vld [vmem:[#allocation2 + $0x20] sm:$0xff]
    %v168 = vld [vmem:[#allocation2 + $0x28] sm:$0xff]
    %v169 = vld [vmem:[#allocation2 + $0x30] sm:$0xff]
    %v170 = vld [vmem:[#allocation2 + $0x38] sm:$0xff]
    %v171 = vld [vmem:[#allocation2 + $0x40] sm:$0xff]
    %v172 = vld [vmem:[#allocation2 + $0x48] sm:$0xff]
    %v173 = vld [vmem:[#allocation2 + $0x50] sm:$0xff]
    %v174 = vld [vmem:[#allocation2 + $0x58] sm:$0xff]
    %v175 = vld [vmem:[#allocation2 + $0x60] sm:$0xff]
    %v176 = vld [vmem:[#allocation2 + $0x68] sm:$0xff]
    %v177 = vld [vmem:[#allocation2 + $0x70] sm:$0xff]
    %v178 = vld [vmem:[#allocation2 + $0x78] sm:$0xff]
    %v179 = vpack.c.bf16 %v163, %v163
    %v180 = vpack.c.bf16 %v164, %v164
    %v181 = vpack.c.bf16 %v165, %v165
    %v182 = vpack.c.bf16 %v166, %v166
    %v183 = vpack.c.bf16 %v167, %v167
    %v184 = vpack.c.bf16 %v168, %v168
    %v185 = vpack.c.bf16 %v169, %v169
    %v186 = vpack.c.bf16 %v170, %v170
    %v187 = vpack.c.bf16 %v171, %v171
    %v188 = vpack.c.bf16 %v172, %v172
    %v189 = vpack.c.bf16 %v173, %v173
    %v190 = vpack.c.bf16 %v174, %v174
    %v191 = vpack.c.bf16 %v175, %v175
    %v192 = vpack.c.bf16 %v176, %v176
    %v193 = vpack.c.bf16 %v177, %v177
    %v194 = vpack.c.bf16 %v178, %v178
    %v195 = vld [vmem:[#allocation7] sm:$0xff]
    %v196 = vld [vmem:[#allocation7 + $0x8] sm:$0xff]
    %v197 = vld [vmem:[#allocation7 + $0x10] sm:$0xff]
    %v198 = vld [vmem:[#allocation7 + $0x18] sm:$0xff]
    %v199 = vld [vmem:[#allocation7 + $0x20] sm:$0xff]
    %v200 = vld [vmem:[#allocation7 + $0x28] sm:$0xff]
    %v201 = vld [vmem:[#allocation7 + $0x30] sm:$0xff]
    %v202 = vld [vmem:[#allocation7 + $0x38] sm:$0xff]
    %v203 = vld [vmem:[#allocation7 + $0x40] sm:$0xff]
    %v204 = vld [vmem:[#allocation7 + $0x48] sm:$0xff]
    %v205 = vld [vmem:[#allocation7 + $0x50] sm:$0xff]
    %v206 = vld [vmem:[#allocation7 + $0x58] sm:$0xff]
    %v207 = vld [vmem:[#allocation7 + $0x60] sm:$0xff]
    %v208 = vld [vmem:[#allocation7 + $0x68] sm:$0xff]
    %v209 = vld [vmem:[#allocation7 + $0x70] sm:$0xff]
    %v210 = vld [vmem:[#allocation7 + $0x78] sm:$0xff]
    %v211 = vld [vmem:[#allocation7 + $0x80] sm:$0xff]
    %v212 = vld [vmem:[#allocation7 + $0x88] sm:$0xff]
    %v213 = vld [vmem:[#allocation7 + $0x90] sm:$0xff]
    %v214 = vld [vmem:[#allocation7 + $0x98] sm:$0xff]
    %v215 = vld [vmem:[#allocation7 + $0xa0] sm:$0xff]
    %v216 = vld [vmem:[#allocation7 + $0xa8] sm:$0xff]
    %v217 = vld [vmem:[#allocation7 + $0xb0] sm:$0xff]
    %v218 = vld [vmem:[#allocation7 + $0xb8] sm:$0xff]
    %v219 = vld [vmem:[#allocation7 + $0xc0] sm:$0xff]
    %v220 = vld [vmem:[#allocation7 + $0xc8] sm:$0xff]
    %v221 = vld [vmem:[#allocation7 + $0xd0] sm:$0xff]
    %v222 = vld [vmem:[#allocation7 + $0xd8] sm:$0xff]
    %v223 = vld [vmem:[#allocation7 + $0xe0] sm:$0xff]
    %v224 = vld [vmem:[#allocation7 + $0xe8] sm:$0xff]
    %v225 = vld [vmem:[#allocation7 + $0xf0] sm:$0xff]
    %v226 = vld [vmem:[#allocation7 + $0xf8] sm:$0xff]
    %v227 = vld [vmem:[#allocation7 + $0x100] sm:$0xff]
    %v228 = vld [vmem:[#allocation7 + $0x108] sm:$0xff]
    %v229 = vld [vmem:[#allocation7 + $0x110] sm:$0xff]
    %v230 = vld [vmem:[#allocation7 + $0x118] sm:$0xff]
    %v231 = vld [vmem:[#allocation7 + $0x120] sm:$0xff]
    %v232 = vld [vmem:[#allocation7 + $0x128] sm:$0xff]
    %v233 = vld [vmem:[#allocation7 + $0x130] sm:$0xff]
    %v234 = vld [vmem:[#allocation7 + $0x138] sm:$0xff]
    %v235 = vld [vmem:[#allocation7 + $0x140] sm:$0xff]
    %v236 = vld [vmem:[#allocation7 + $0x148] sm:$0xff]
    %v237 = vld [vmem:[#allocation7 + $0x150] sm:$0xff]
    %v238 = vld [vmem:[#allocation7 + $0x158] sm:$0xff]
    %v239 = vld [vmem:[#allocation7 + $0x160] sm:$0xff]
    %v240 = vld [vmem:[#allocation7 + $0x168] sm:$0xff]
    %v241 = vld [vmem:[#allocation7 + $0x170] sm:$0xff]
    %v242 = vld [vmem:[#allocation7 + $0x178] sm:$0xff]
    %v243 = vld [vmem:[#allocation7 + $0x180] sm:$0xff]
    %v244 = vld [vmem:[#allocation7 + $0x188] sm:$0xff]
    %v245 = vld [vmem:[#allocation7 + $0x190] sm:$0xff]
    %v246 = vld [vmem:[#allocation7 + $0x198] sm:$0xff]
    %v247 = vld [vmem:[#allocation7 + $0x1a0] sm:$0xff]
    %v248 = vld [vmem:[#allocation7 + $0x1a8] sm:$0xff]
    %v249 = vld [vmem:[#allocation7 + $0x1b0] sm:$0xff]
    %v250 = vld [vmem:[#allocation7 + $0x1b8] sm:$0xff]
    %v251 = vld [vmem:[#allocation7 + $0x1c0] sm:$0xff]
    %v252 = vld [vmem:[#allocation7 + $0x1c8] sm:$0xff]
    %v253 = vld [vmem:[#allocation7 + $0x1d0] sm:$0xff]
    %v254 = vld [vmem:[#allocation7 + $0x1d8] sm:$0xff]
    %v255 = vld [vmem:[#allocation7 + $0x1e0] sm:$0xff]
    %v256 = vld [vmem:[#allocation7 + $0x1e8] sm:$0xff]
    %v257 = vld [vmem:[#allocation7 + $0x1f0] sm:$0xff]
    %v258 = vld [vmem:[#allocation7 + $0x1f8] sm:$0xff]
    %v259 = vld [vmem:[#allocation7 + $0x200] sm:$0xff]
    %v260 = vld [vmem:[#allocation7 + $0x208] sm:$0xff]
    %v261 = vld [vmem:[#allocation7 + $0x210] sm:$0xff]
    %v262 = vld [vmem:[#allocation7 + $0x218] sm:$0xff]
    %v263 = vld [vmem:[#allocation7 + $0x220] sm:$0xff]
    %v264 = vld [vmem:[#allocation7 + $0x228] sm:$0xff]
    %v265 = vld [vmem:[#allocation7 + $0x230] sm:$0xff]
    %v266 = vld [vmem:[#allocation7 + $0x238] sm:$0xff]
    %v267 = vld [vmem:[#allocation7 + $0x240] sm:$0xff]
    %v268 = vld [vmem:[#allocation7 + $0x248] sm:$0xff]
    %v269 = vld [vmem:[#allocation7 + $0x250] sm:$0xff]
    %v270 = vld [vmem:[#allocation7 + $0x258] sm:$0xff]
    %v271 = vld [vmem:[#allocation7 + $0x260] sm:$0xff]
    %v272 = vld [vmem:[#allocation7 + $0x268] sm:$0xff]
    %v273 = vld [vmem:[#allocation7 + $0x270] sm:$0xff]
    %v274 = vld [vmem:[#allocation7 + $0x278] sm:$0xff]
    %v275 = vld [vmem:[#allocation7 + $0x280] sm:$0xff]
    %v276 = vld [vmem:[#allocation7 + $0x288] sm:$0xff]
    %v277 = vld [vmem:[#allocation7 + $0x290] sm:$0xff]
    %v278 = vld [vmem:[#allocation7 + $0x298] sm:$0xff]
    %v279 = vld [vmem:[#allocation7 + $0x2a0] sm:$0xff]
    %v280 = vld [vmem:[#allocation7 + $0x2a8] sm:$0xff]
    %v281 = vld [vmem:[#allocation7 + $0x2b0] sm:$0xff]
    %v282 = vld [vmem:[#allocation7 + $0x2b8] sm:$0xff]
    %v283 = vld [vmem:[#allocation7 + $0x2c0] sm:$0xff]
    %v284 = vld [vmem:[#allocation7 + $0x2c8] sm:$0xff]
    %v285 = vld [vmem:[#allocation7 + $0x2d0] sm:$0xff]
    %v286 = vld [vmem:[#allocation7 + $0x2d8] sm:$0xff]
    %v287 = vld [vmem:[#allocation7 + $0x2e0] sm:$0xff]
    %v288 = vld [vmem:[#allocation7 + $0x2e8] sm:$0xff]
    %v289 = vld [vmem:[#allocation7 + $0x2f0] sm:$0xff]
    %v290 = vld [vmem:[#allocation7 + $0x2f8] sm:$0xff]
    %v291 = vld [vmem:[#allocation7 + $0x300] sm:$0xff]
    %v292 = vld [vmem:[#allocation7 + $0x308] sm:$0xff]
    %v293 = vld [vmem:[#allocation7 + $0x310] sm:$0xff]
    %v294 = vld [vmem:[#allocation7 + $0x318] sm:$0xff]
    %v295 = vld [vmem:[#allocation7 + $0x320] sm:$0xff]
    %v296 = vld [vmem:[#allocation7 + $0x328] sm:$0xff]
    %v297 = vld [vmem:[#allocation7 + $0x330] sm:$0xff]
    %v298 = vld [vmem:[#allocation7 + $0x338] sm:$0xff]
    %v299 = vld [vmem:[#allocation7 + $0x340] sm:$0xff]
    %v300 = vld [vmem:[#allocation7 + $0x348] sm:$0xff]
    %v301 = vld [vmem:[#allocation7 + $0x350] sm:$0xff]
    %v302 = vld [vmem:[#allocation7 + $0x358] sm:$0xff]
    %v303 = vld [vmem:[#allocation7 + $0x360] sm:$0xff]
    %v304 = vld [vmem:[#allocation7 + $0x368] sm:$0xff]
    %v305 = vld [vmem:[#allocation7 + $0x370] sm:$0xff]
    %v306 = vld [vmem:[#allocation7 + $0x378] sm:$0xff]
    %v307 = vld [vmem:[#allocation7 + $0x380] sm:$0xff]
    %v308 = vld [vmem:[#allocation7 + $0x388] sm:$0xff]
    %v309 = vld [vmem:[#allocation7 + $0x390] sm:$0xff]
    %v310 = vld [vmem:[#allocation7 + $0x398] sm:$0xff]
    %v311 = vld [vmem:[#allocation7 + $0x3a0] sm:$0xff]
    %v312 = vld [vmem:[#allocation7 + $0x3a8] sm:$0xff]
    %v313 = vld [vmem:[#allocation7 + $0x3b0] sm:$0xff]
    %v314 = vld [vmem:[#allocation7 + $0x3b8] sm:$0xff]
    %v315 = vld [vmem:[#allocation7 + $0x3c0] sm:$0xff]
    %v316 = vld [vmem:[#allocation7 + $0x3c8] sm:$0xff]
    %v317 = vld [vmem:[#allocation7 + $0x3d0] sm:$0xff]
    %v318 = vld [vmem:[#allocation7 + $0x3d8] sm:$0xff]
    %v319 = vld [vmem:[#allocation7 + $0x3e0] sm:$0xff]
    %v320 = vld [vmem:[#allocation7 + $0x3e8] sm:$0xff]
    %v321 = vld [vmem:[#allocation7 + $0x3f0] sm:$0xff]
    %v322 = vld [vmem:[#allocation7 + $0x3f8] sm:$0xff]
    %v323 = vld [vmem:[#allocation7 + $0x400] sm:$0xff]
    %v324 = vld [vmem:[#allocation7 + $0x408] sm:$0xff]
    %v325 = vld [vmem:[#allocation7 + $0x410] sm:$0xff]
    %v326 = vld [vmem:[#allocation7 + $0x418] sm:$0xff]
    %v327 = vld [vmem:[#allocation7 + $0x420] sm:$0xff]
    %v328 = vld [vmem:[#allocation7 + $0x428] sm:$0xff]
    %v329 = vld [vmem:[#allocation7 + $0x430] sm:$0xff]
    %v330 = vld [vmem:[#allocation7 + $0x438] sm:$0xff]
    %v331 = vld [vmem:[#allocation7 + $0x440] sm:$0xff]
    %v332 = vld [vmem:[#allocation7 + $0x448] sm:$0xff]
    %v333 = vld [vmem:[#allocation7 + $0x450] sm:$0xff]
    %v334 = vld [vmem:[#allocation7 + $0x458] sm:$0xff]
    %v335 = vld [vmem:[#allocation7 + $0x460] sm:$0xff]
    %v336 = vld [vmem:[#allocation7 + $0x468] sm:$0xff]
    %v337 = vld [vmem:[#allocation7 + $0x470] sm:$0xff]
    %v338 = vld [vmem:[#allocation7 + $0x478] sm:$0xff]
    %v339 = vld [vmem:[#allocation7 + $0x480] sm:$0xff]
    %v340 = vld [vmem:[#allocation7 + $0x488] sm:$0xff]
    %v341 = vld [vmem:[#allocation7 + $0x490] sm:$0xff]
    %v342 = vld [vmem:[#allocation7 + $0x498] sm:$0xff]
    %v343 = vld [vmem:[#allocation7 + $0x4a0] sm:$0xff]
    %v344 = vld [vmem:[#allocation7 + $0x4a8] sm:$0xff]
    %v345 = vld [vmem:[#allocation7 + $0x4b0] sm:$0xff]
    %v346 = vld [vmem:[#allocation7 + $0x4b8] sm:$0xff]
    %v347 = vld [vmem:[#allocation7 + $0x4c0] sm:$0xff]
    %v348 = vld [vmem:[#allocation7 + $0x4c8] sm:$0xff]
    %v349 = vld [vmem:[#allocation7 + $0x4d0] sm:$0xff]
    %v350 = vld [vmem:[#allocation7 + $0x4d8] sm:$0xff]
    %v351 = vld [vmem:[#allocation7 + $0x4e0] sm:$0xff]
    %v352 = vld [vmem:[#allocation7 + $0x4e8] sm:$0xff]
    %v353 = vld [vmem:[#allocation7 + $0x4f0] sm:$0xff]
    %v354 = vld [vmem:[#allocation7 + $0x4f8] sm:$0xff]
    %v355 = vld [vmem:[#allocation7 + $0x500] sm:$0xff]
    %v356 = vld [vmem:[#allocation7 + $0x508] sm:$0xff]
    %v357 = vld [vmem:[#allocation7 + $0x510] sm:$0xff]
    %v358 = vld [vmem:[#allocation7 + $0x518] sm:$0xff]
    %v359 = vld [vmem:[#allocation7 + $0x520] sm:$0xff]
    %v360 = vld [vmem:[#allocation7 + $0x528] sm:$0xff]
    %v361 = vld [vmem:[#allocation7 + $0x530] sm:$0xff]
    %v362 = vld [vmem:[#allocation7 + $0x538] sm:$0xff]
    %v363 = vld [vmem:[#allocation7 + $0x540] sm:$0xff]
    %v364 = vld [vmem:[#allocation7 + $0x548] sm:$0xff]
    %v365 = vld [vmem:[#allocation7 + $0x550] sm:$0xff]
    %v366 = vld [vmem:[#allocation7 + $0x558] sm:$0xff]
    %v367 = vld [vmem:[#allocation7 + $0x560] sm:$0xff]
    %v368 = vld [vmem:[#allocation7 + $0x568] sm:$0xff]
    %v369 = vld [vmem:[#allocation7 + $0x570] sm:$0xff]
    %v370 = vld [vmem:[#allocation7 + $0x578] sm:$0xff]
    %v371 = vld [vmem:[#allocation7 + $0x580] sm:$0xff]
    %v372 = vld [vmem:[#allocation7 + $0x588] sm:$0xff]
    %v373 = vld [vmem:[#allocation7 + $0x590] sm:$0xff]
    %v374 = vld [vmem:[#allocation7 + $0x598] sm:$0xff]
    %v375 = vld [vmem:[#allocation7 + $0x5a0] sm:$0xff]
    %v376 = vld [vmem:[#allocation7 + $0x5a8] sm:$0xff]
    %v377 = vld [vmem:[#allocation7 + $0x5b0] sm:$0xff]
    %v378 = vld [vmem:[#allocation7 + $0x5b8] sm:$0xff]
    %v379 = vld [vmem:[#allocation7 + $0x5c0] sm:$0xff]
    %v380 = vld [vmem:[#allocation7 + $0x5c8] sm:$0xff]
    %v381 = vld [vmem:[#allocation7 + $0x5d0] sm:$0xff]
    %v382 = vld [vmem:[#allocation7 + $0x5d8] sm:$0xff]
    %v383 = vld [vmem:[#allocation7 + $0x5e0] sm:$0xff]
    %v384 = vld [vmem:[#allocation7 + $0x5e8] sm:$0xff]
    %v385 = vld [vmem:[#allocation7 + $0x5f0] sm:$0xff]
    %v386 = vld [vmem:[#allocation7 + $0x5f8] sm:$0xff]
    %v387 = vld [vmem:[#allocation7 + $0x600] sm:$0xff]
    %v388 = vld [vmem:[#allocation7 + $0x608] sm:$0xff]
    %v389 = vld [vmem:[#allocation7 + $0x610] sm:$0xff]
    %v390 = vld [vmem:[#allocation7 + $0x618] sm:$0xff]
    %v391 = vld [vmem:[#allocation7 + $0x620] sm:$0xff]
    %v392 = vld [vmem:[#allocation7 + $0x628] sm:$0xff]
    %v393 = vld [vmem:[#allocation7 + $0x630] sm:$0xff]
    %v394 = vld [vmem:[#allocation7 + $0x638] sm:$0xff]
    %v395 = vld [vmem:[#allocation7 + $0x640] sm:$0xff]
    %v396 = vld [vmem:[#allocation7 + $0x648] sm:$0xff]
    %v397 = vld [vmem:[#allocation7 + $0x650] sm:$0xff]
    %v398 = vld [vmem:[#allocation7 + $0x658] sm:$0xff]
    %v399 = vld [vmem:[#allocation7 + $0x660] sm:$0xff]
    %v400 = vld [vmem:[#allocation7 + $0x668] sm:$0xff]
    %v401 = vld [vmem:[#allocation7 + $0x670] sm:$0xff]
    %v402 = vld [vmem:[#allocation7 + $0x678] sm:$0xff]
    %v403 = vld [vmem:[#allocation7 + $0x680] sm:$0xff]
    %v404 = vld [vmem:[#allocation7 + $0x688] sm:$0xff]
    %v405 = vld [vmem:[#allocation7 + $0x690] sm:$0xff]
    %v406 = vld [vmem:[#allocation7 + $0x698] sm:$0xff]
    %v407 = vld [vmem:[#allocation7 + $0x6a0] sm:$0xff]
    %v408 = vld [vmem:[#allocation7 + $0x6a8] sm:$0xff]
    %v409 = vld [vmem:[#allocation7 + $0x6b0] sm:$0xff]
    %v410 = vld [vmem:[#allocation7 + $0x6b8] sm:$0xff]
    %v411 = vld [vmem:[#allocation7 + $0x6c0] sm:$0xff]
    %v412 = vld [vmem:[#allocation7 + $0x6c8] sm:$0xff]
    %v413 = vld [vmem:[#allocation7 + $0x6d0] sm:$0xff]
    %v414 = vld [vmem:[#allocation7 + $0x6d8] sm:$0xff]
    %v415 = vld [vmem:[#allocation7 + $0x6e0] sm:$0xff]
    %v416 = vld [vmem:[#allocation7 + $0x6e8] sm:$0xff]
    %v417 = vld [vmem:[#allocation7 + $0x6f0] sm:$0xff]
    %v418 = vld [vmem:[#allocation7 + $0x6f8] sm:$0xff]
    %v419 = vld [vmem:[#allocation7 + $0x700] sm:$0xff]
    %v420 = vld [vmem:[#allocation7 + $0x708] sm:$0xff]
    %v421 = vld [vmem:[#allocation7 + $0x710] sm:$0xff]
    %v422 = vld [vmem:[#allocation7 + $0x718] sm:$0xff]
    %v423 = vld [vmem:[#allocation7 + $0x720] sm:$0xff]
    %v424 = vld [vmem:[#allocation7 + $0x728] sm:$0xff]
    %v425 = vld [vmem:[#allocation7 + $0x730] sm:$0xff]
    %v426 = vld [vmem:[#allocation7 + $0x738] sm:$0xff]
    %v427 = vld [vmem:[#allocation7 + $0x740] sm:$0xff]
    %v428 = vld [vmem:[#allocation7 + $0x748] sm:$0xff]
    %v429 = vld [vmem:[#allocation7 + $0x750] sm:$0xff]
    %v430 = vld [vmem:[#allocation7 + $0x758] sm:$0xff]
    %v431 = vld [vmem:[#allocation7 + $0x760] sm:$0xff]
    %v432 = vld [vmem:[#allocation7 + $0x768] sm:$0xff]
    %v433 = vld [vmem:[#allocation7 + $0x770] sm:$0xff]
    %v434 = vld [vmem:[#allocation7 + $0x778] sm:$0xff]
    %v435 = vld [vmem:[#allocation7 + $0x780] sm:$0xff]
    %v436 = vld [vmem:[#allocation7 + $0x788] sm:$0xff]
    %v437 = vld [vmem:[#allocation7 + $0x790] sm:$0xff]
    %v438 = vld [vmem:[#allocation7 + $0x798] sm:$0xff]
    %v439 = vld [vmem:[#allocation7 + $0x7a0] sm:$0xff]
    %v440 = vld [vmem:[#allocation7 + $0x7a8] sm:$0xff]
    %v441 = vld [vmem:[#allocation7 + $0x7b0] sm:$0xff]
    %v442 = vld [vmem:[#allocation7 + $0x7b8] sm:$0xff]
    %v443 = vld [vmem:[#allocation7 + $0x7c0] sm:$0xff]
    %v444 = vld [vmem:[#allocation7 + $0x7c8] sm:$0xff]
    %v445 = vld [vmem:[#allocation7 + $0x7d0] sm:$0xff]
    %v446 = vld [vmem:[#allocation7 + $0x7d8] sm:$0xff]
    %v447 = vld [vmem:[#allocation7 + $0x7e0] sm:$0xff]
    %v448 = vld [vmem:[#allocation7 + $0x7e8] sm:$0xff]
    %v449 = vld [vmem:[#allocation7 + $0x7f0] sm:$0xff]
    %v450 = vld [vmem:[#allocation7 + $0x7f8] sm:$0xff]
    %v451 = vld [vmem:[#allocation7 + $0x800] sm:$0xff]
    %v452 = vld [vmem:[#allocation7 + $0x808] sm:$0xff]
    %v453 = vld [vmem:[#allocation7 + $0x810] sm:$0xff]
    %v454 = vld [vmem:[#allocation7 + $0x818] sm:$0xff]
    %v455 = vld [vmem:[#allocation7 + $0x820] sm:$0xff]
    %v456 = vld [vmem:[#allocation7 + $0x828] sm:$0xff]
    %v457 = vld [vmem:[#allocation7 + $0x830] sm:$0xff]
    %v458 = vld [vmem:[#allocation7 + $0x838] sm:$0xff]
    %v459 = vld [vmem:[#allocation7 + $0x840] sm:$0xff]
    %v460 = vld [vmem:[#allocation7 + $0x848] sm:$0xff]
    %v461 = vld [vmem:[#allocation7 + $0x850] sm:$0xff]
    %v462 = vld [vmem:[#allocation7 + $0x858] sm:$0xff]
    %v463 = vld [vmem:[#allocation7 + $0x860] sm:$0xff]
    %v464 = vld [vmem:[#allocation7 + $0x868] sm:$0xff]
    %v465 = vld [vmem:[#allocation7 + $0x870] sm:$0xff]
    %v466 = vld [vmem:[#allocation7 + $0x878] sm:$0xff]
    %v467 = vld [vmem:[#allocation7 + $0x880] sm:$0xff]
    %v468 = vld [vmem:[#allocation7 + $0x888] sm:$0xff]
    %v469 = vld [vmem:[#allocation7 + $0x890] sm:$0xff]
    %v470 = vld [vmem:[#allocation7 + $0x898] sm:$0xff]
    %v471 = vld [vmem:[#allocation7 + $0x8a0] sm:$0xff]
    %v472 = vld [vmem:[#allocation7 + $0x8a8] sm:$0xff]
    %v473 = vld [vmem:[#allocation7 + $0x8b0] sm:$0xff]
    %v474 = vld [vmem:[#allocation7 + $0x8b8] sm:$0xff]
    %v475 = vld [vmem:[#allocation7 + $0x8c0] sm:$0xff]
    %v476 = vld [vmem:[#allocation7 + $0x8c8] sm:$0xff]
    %v477 = vld [vmem:[#allocation7 + $0x8d0] sm:$0xff]
    %v478 = vld [vmem:[#allocation7 + $0x8d8] sm:$0xff]
    %v479 = vld [vmem:[#allocation7 + $0x8e0] sm:$0xff]
    %v480 = vld [vmem:[#allocation7 + $0x8e8] sm:$0xff]
    %v481 = vld [vmem:[#allocation7 + $0x8f0] sm:$0xff]
    %v482 = vld [vmem:[#allocation7 + $0x8f8] sm:$0xff]
    %v483 = vld [vmem:[#allocation7 + $0x900] sm:$0xff]
    %v484 = vld [vmem:[#allocation7 + $0x908] sm:$0xff]
    %v485 = vld [vmem:[#allocation7 + $0x910] sm:$0xff]
    %v486 = vld [vmem:[#allocation7 + $0x918] sm:$0xff]
    %v487 = vld [vmem:[#allocation7 + $0x920] sm:$0xff]
    %v488 = vld [vmem:[#allocation7 + $0x928] sm:$0xff]
    %v489 = vld [vmem:[#allocation7 + $0x930] sm:$0xff]
    %v490 = vld [vmem:[#allocation7 + $0x938] sm:$0xff]
    %v491 = vld [vmem:[#allocation7 + $0x940] sm:$0xff]
    %v492 = vld [vmem:[#allocation7 + $0x948] sm:$0xff]
    %v493 = vld [vmem:[#allocation7 + $0x950] sm:$0xff]
    %v494 = vld [vmem:[#allocation7 + $0x958] sm:$0xff]
    %v495 = vld [vmem:[#allocation7 + $0x960] sm:$0xff]
    %v496 = vld [vmem:[#allocation7 + $0x968] sm:$0xff]
    %v497 = vld [vmem:[#allocation7 + $0x970] sm:$0xff]
    %v498 = vld [vmem:[#allocation7 + $0x978] sm:$0xff]
    %v499 = vld [vmem:[#allocation7 + $0x980] sm:$0xff]
    %v500 = vld [vmem:[#allocation7 + $0x988] sm:$0xff]
    %v501 = vld [vmem:[#allocation7 + $0x990] sm:$0xff]
    %v502 = vld [vmem:[#allocation7 + $0x998] sm:$0xff]
    %v503 = vld [vmem:[#allocation7 + $0x9a0] sm:$0xff]
    %v504 = vld [vmem:[#allocation7 + $0x9a8] sm:$0xff]
    %v505 = vld [vmem:[#allocation7 + $0x9b0] sm:$0xff]
    %v506 = vld [vmem:[#allocation7 + $0x9b8] sm:$0xff]
    %v507 = vld [vmem:[#allocation7 + $0x9c0] sm:$0xff]
    %v508 = vld [vmem:[#allocation7 + $0x9c8] sm:$0xff]
    %v509 = vld [vmem:[#allocation7 + $0x9d0] sm:$0xff]
    %v510 = vld [vmem:[#allocation7 + $0x9d8] sm:$0xff]
    %v511 = vld [vmem:[#allocation7 + $0x9e0] sm:$0xff]
    %v512 = vld [vmem:[#allocation7 + $0x9e8] sm:$0xff]
    %v513 = vld [vmem:[#allocation7 + $0x9f0] sm:$0xff]
    %v514 = vld [vmem:[#allocation7 + $0x9f8] sm:$0xff]
    %v515 = vld [vmem:[#allocation7 + $0xa00] sm:$0xff]
    %v516 = vld [vmem:[#allocation7 + $0xa08] sm:$0xff]
    %v517 = vld [vmem:[#allocation7 + $0xa10] sm:$0xff]
    %v518 = vld [vmem:[#allocation7 + $0xa18] sm:$0xff]
    %v519 = vld [vmem:[#allocation7 + $0xa20] sm:$0xff]
    %v520 = vld [vmem:[#allocation7 + $0xa28] sm:$0xff]
    %v521 = vld [vmem:[#allocation7 + $0xa30] sm:$0xff]
    %v522 = vld [vmem:[#allocation7 + $0xa38] sm:$0xff]
    %v523 = vld [vmem:[#allocation7 + $0xa40] sm:$0xff]
    %v524 = vld [vmem:[#allocation7 + $0xa48] sm:$0xff]
    %v525 = vld [vmem:[#allocation7 + $0xa50] sm:$0xff]
    %v526 = vld [vmem:[#allocation7 + $0xa58] sm:$0xff]
    %v527 = vld [vmem:[#allocation7 + $0xa60] sm:$0xff]
    %v528 = vld [vmem:[#allocation7 + $0xa68] sm:$0xff]
    %v529 = vld [vmem:[#allocation7 + $0xa70] sm:$0xff]
    %v530 = vld [vmem:[#allocation7 + $0xa78] sm:$0xff]
    %v531 = vld [vmem:[#allocation7 + $0xa80] sm:$0xff]
    %v532 = vld [vmem:[#allocation7 + $0xa88] sm:$0xff]
    %v533 = vld [vmem:[#allocation7 + $0xa90] sm:$0xff]
    %v534 = vld [vmem:[#allocation7 + $0xa98] sm:$0xff]
    %v535 = vld [vmem:[#allocation7 + $0xaa0] sm:$0xff]
    %v536 = vld [vmem:[#allocation7 + $0xaa8] sm:$0xff]
    %v537 = vld [vmem:[#allocation7 + $0xab0] sm:$0xff]
    %v538 = vld [vmem:[#allocation7 + $0xab8] sm:$0xff]
    %v539 = vld [vmem:[#allocation7 + $0xac0] sm:$0xff]
    %v540 = vld [vmem:[#allocation7 + $0xac8] sm:$0xff]
    %v541 = vld [vmem:[#allocation7 + $0xad0] sm:$0xff]
    %v542 = vld [vmem:[#allocation7 + $0xad8] sm:$0xff]
    %v543 = vld [vmem:[#allocation7 + $0xae0] sm:$0xff]
    %v544 = vld [vmem:[#allocation7 + $0xae8] sm:$0xff]
    %v545 = vld [vmem:[#allocation7 + $0xaf0] sm:$0xff]
    %v546 = vld [vmem:[#allocation7 + $0xaf8] sm:$0xff]
    %v547 = vld [vmem:[#allocation7 + $0xb00] sm:$0xff]
    %v548 = vld [vmem:[#allocation7 + $0xb08] sm:$0xff]
    %v549 = vld [vmem:[#allocation7 + $0xb10] sm:$0xff]
    %v550 = vld [vmem:[#allocation7 + $0xb18] sm:$0xff]
    %v551 = vld [vmem:[#allocation7 + $0xb20] sm:$0xff]
    %v552 = vld [vmem:[#allocation7 + $0xb28] sm:$0xff]
    %v553 = vld [vmem:[#allocation7 + $0xb30] sm:$0xff]
    %v554 = vld [vmem:[#allocation7 + $0xb38] sm:$0xff]
    %v555 = vld [vmem:[#allocation7 + $0xb40] sm:$0xff]
    %v556 = vld [vmem:[#allocation7 + $0xb48] sm:$0xff]
    %v557 = vld [vmem:[#allocation7 + $0xb50] sm:$0xff]
    %v558 = vld [vmem:[#allocation7 + $0xb58] sm:$0xff]
    %v559 = vld [vmem:[#allocation7 + $0xb60] sm:$0xff]
    %v560 = vld [vmem:[#allocation7 + $0xb68] sm:$0xff]
    %v561 = vld [vmem:[#allocation7 + $0xb70] sm:$0xff]
    %v562 = vld [vmem:[#allocation7 + $0xb78] sm:$0xff]
    %v563 = vld [vmem:[#allocation7 + $0xb80] sm:$0xff]
    %v564 = vld [vmem:[#allocation7 + $0xb88] sm:$0xff]
    %v565 = vld [vmem:[#allocation7 + $0xb90] sm:$0xff]
    %v566 = vld [vmem:[#allocation7 + $0xb98] sm:$0xff]
    %v567 = vld [vmem:[#allocation7 + $0xba0] sm:$0xff]
    %v568 = vld [vmem:[#allocation7 + $0xba8] sm:$0xff]
    %v569 = vld [vmem:[#allocation7 + $0xbb0] sm:$0xff]
    %v570 = vld [vmem:[#allocation7 + $0xbb8] sm:$0xff]
    %v571 = vld [vmem:[#allocation7 + $0xbc0] sm:$0xff]
    %v572 = vld [vmem:[#allocation7 + $0xbc8] sm:$0xff]
    %v573 = vld [vmem:[#allocation7 + $0xbd0] sm:$0xff]
    %v574 = vld [vmem:[#allocation7 + $0xbd8] sm:$0xff]
    %v575 = vld [vmem:[#allocation7 + $0xbe0] sm:$0xff]
    %v576 = vld [vmem:[#allocation7 + $0xbe8] sm:$0xff]
    %v577 = vld [vmem:[#allocation7 + $0xbf0] sm:$0xff]
    %v578 = vld [vmem:[#allocation7 + $0xbf8] sm:$0xff]
    %v579 = vld [vmem:[#allocation7 + $0xc00] sm:$0xff]
    %v580 = vld [vmem:[#allocation7 + $0xc08] sm:$0xff]
    %v581 = vld [vmem:[#allocation7 + $0xc10] sm:$0xff]
    %v582 = vld [vmem:[#allocation7 + $0xc18] sm:$0xff]
    %v583 = vld [vmem:[#allocation7 + $0xc20] sm:$0xff]
    %v584 = vld [vmem:[#allocation7 + $0xc28] sm:$0xff]
    %v585 = vld [vmem:[#allocation7 + $0xc30] sm:$0xff]
    %v586 = vld [vmem:[#allocation7 + $0xc38] sm:$0xff]
    %v587 = vld [vmem:[#allocation7 + $0xc40] sm:$0xff]
    %v588 = vld [vmem:[#allocation7 + $0xc48] sm:$0xff]
    %v589 = vld [vmem:[#allocation7 + $0xc50] sm:$0xff]
    %v590 = vld [vmem:[#allocation7 + $0xc58] sm:$0xff]
    %v591 = vld [vmem:[#allocation7 + $0xc60] sm:$0xff]
    %v592 = vld [vmem:[#allocation7 + $0xc68] sm:$0xff]
    %v593 = vld [vmem:[#allocation7 + $0xc70] sm:$0xff]
    %v594 = vld [vmem:[#allocation7 + $0xc78] sm:$0xff]
    %v595 = vld [vmem:[#allocation7 + $0xc80] sm:$0xff]
    %v596 = vld [vmem:[#allocation7 + $0xc88] sm:$0xff]
    %v597 = vld [vmem:[#allocation7 + $0xc90] sm:$0xff]
    %v598 = vld [vmem:[#allocation7 + $0xc98] sm:$0xff]
    %v599 = vld [vmem:[#allocation7 + $0xca0] sm:$0xff]
    %v600 = vld [vmem:[#allocation7 + $0xca8] sm:$0xff]
    %v601 = vld [vmem:[#allocation7 + $0xcb0] sm:$0xff]
    %v602 = vld [vmem:[#allocation7 + $0xcb8] sm:$0xff]
    %v603 = vld [vmem:[#allocation7 + $0xcc0] sm:$0xff]
    %v604 = vld [vmem:[#allocation7 + $0xcc8] sm:$0xff]
    %v605 = vld [vmem:[#allocation7 + $0xcd0] sm:$0xff]
    %v606 = vld [vmem:[#allocation7 + $0xcd8] sm:$0xff]
    %v607 = vld [vmem:[#allocation7 + $0xce0] sm:$0xff]
    %v608 = vld [vmem:[#allocation7 + $0xce8] sm:$0xff]
    %v609 = vld [vmem:[#allocation7 + $0xcf0] sm:$0xff]
    %v610 = vld [vmem:[#allocation7 + $0xcf8] sm:$0xff]
    %v611 = vld [vmem:[#allocation7 + $0xd00] sm:$0xff]
    %v612 = vld [vmem:[#allocation7 + $0xd08] sm:$0xff]
    %v613 = vld [vmem:[#allocation7 + $0xd10] sm:$0xff]
    %v614 = vld [vmem:[#allocation7 + $0xd18] sm:$0xff]
    %v615 = vld [vmem:[#allocation7 + $0xd20] sm:$0xff]
    %v616 = vld [vmem:[#allocation7 + $0xd28] sm:$0xff]
    %v617 = vld [vmem:[#allocation7 + $0xd30] sm:$0xff]
    %v618 = vld [vmem:[#allocation7 + $0xd38] sm:$0xff]
    %v619 = vld [vmem:[#allocation7 + $0xd40] sm:$0xff]
    %v620 = vld [vmem:[#allocation7 + $0xd48] sm:$0xff]
    %v621 = vld [vmem:[#allocation7 + $0xd50] sm:$0xff]
    %v622 = vld [vmem:[#allocation7 + $0xd58] sm:$0xff]
    %v623 = vld [vmem:[#allocation7 + $0xd60] sm:$0xff]
    %v624 = vld [vmem:[#allocation7 + $0xd68] sm:$0xff]
    %v625 = vld [vmem:[#allocation7 + $0xd70] sm:$0xff]
    %v626 = vld [vmem:[#allocation7 + $0xd78] sm:$0xff]
    %v627 = vld [vmem:[#allocation7 + $0xd80] sm:$0xff]
    %v628 = vld [vmem:[#allocation7 + $0xd88] sm:$0xff]
    %v629 = vld [vmem:[#allocation7 + $0xd90] sm:$0xff]
    %v630 = vld [vmem:[#allocation7 + $0xd98] sm:$0xff]
    %v631 = vld [vmem:[#allocation7 + $0xda0] sm:$0xff]
    %v632 = vld [vmem:[#allocation7 + $0xda8] sm:$0xff]
    %v633 = vld [vmem:[#allocation7 + $0xdb0] sm:$0xff]
    %v634 = vld [vmem:[#allocation7 + $0xdb8] sm:$0xff]
    %v635 = vld [vmem:[#allocation7 + $0xdc0] sm:$0xff]
    %v636 = vld [vmem:[#allocation7 + $0xdc8] sm:$0xff]
    %v637 = vld [vmem:[#allocation7 + $0xdd0] sm:$0xff]
    %v638 = vld [vmem:[#allocation7 + $0xdd8] sm:$0xff]
    %v639 = vld [vmem:[#allocation7 + $0xde0] sm:$0xff]
    %v640 = vld [vmem:[#allocation7 + $0xde8] sm:$0xff]
    %v641 = vld [vmem:[#allocation7 + $0xdf0] sm:$0xff]
    %v642 = vld [vmem:[#allocation7 + $0xdf8] sm:$0xff]
    %v643 = vld [vmem:[#allocation7 + $0xe00] sm:$0xff]
    %v644 = vld [vmem:[#allocation7 + $0xe08] sm:$0xff]
    %v645 = vld [vmem:[#allocation7 + $0xe10] sm:$0xff]
    %v646 = vld [vmem:[#allocation7 + $0xe18] sm:$0xff]
    %v647 = vld [vmem:[#allocation7 + $0xe20] sm:$0xff]
    %v648 = vld [vmem:[#allocation7 + $0xe28] sm:$0xff]
    %v649 = vld [vmem:[#allocation7 + $0xe30] sm:$0xff]
    %v650 = vld [vmem:[#allocation7 + $0xe38] sm:$0xff]
    %v651 = vld [vmem:[#allocation7 + $0xe40] sm:$0xff]
    %v652 = vld [vmem:[#allocation7 + $0xe48] sm:$0xff]
    %v653 = vld [vmem:[#allocation7 + $0xe50] sm:$0xff]
    %v654 = vld [vmem:[#allocation7 + $0xe58] sm:$0xff]
    %v655 = vld [vmem:[#allocation7 + $0xe60] sm:$0xff]
    %v656 = vld [vmem:[#allocation7 + $0xe68] sm:$0xff]
    %v657 = vld [vmem:[#allocation7 + $0xe70] sm:$0xff]
    %v658 = vld [vmem:[#allocation7 + $0xe78] sm:$0xff]
    %v659 = vld [vmem:[#allocation7 + $0xe80] sm:$0xff]
    %v660 = vld [vmem:[#allocation7 + $0xe88] sm:$0xff]
    %v661 = vld [vmem:[#allocation7 + $0xe90] sm:$0xff]
    %v662 = vld [vmem:[#allocation7 + $0xe98] sm:$0xff]
    %v663 = vld [vmem:[#allocation7 + $0xea0] sm:$0xff]
    %v664 = vld [vmem:[#allocation7 + $0xea8] sm:$0xff]
    %v665 = vld [vmem:[#allocation7 + $0xeb0] sm:$0xff]
    %v666 = vld [vmem:[#allocation7 + $0xeb8] sm:$0xff]
    %v667 = vld [vmem:[#allocation7 + $0xec0] sm:$0xff]
    %v668 = vld [vmem:[#allocation7 + $0xec8] sm:$0xff]
    %v669 = vld [vmem:[#allocation7 + $0xed0] sm:$0xff]
    %v670 = vld [vmem:[#allocation7 + $0xed8] sm:$0xff]
    %v671 = vld [vmem:[#allocation7 + $0xee0] sm:$0xff]
    %v672 = vld [vmem:[#allocation7 + $0xee8] sm:$0xff]
    %v673 = vld [vmem:[#allocation7 + $0xef0] sm:$0xff]
    %v674 = vld [vmem:[#allocation7 + $0xef8] sm:$0xff]
    %v675 = vld [vmem:[#allocation7 + $0xf00] sm:$0xff]
    %v676 = vld [vmem:[#allocation7 + $0xf08] sm:$0xff]
    %v677 = vld [vmem:[#allocation7 + $0xf10] sm:$0xff]
    %v678 = vld [vmem:[#allocation7 + $0xf18] sm:$0xff]
    %v679 = vld [vmem:[#allocation7 + $0xf20] sm:$0xff]
    %v680 = vld [vmem:[#allocation7 + $0xf28] sm:$0xff]
    %v681 = vld [vmem:[#allocation7 + $0xf30] sm:$0xff]
    %v682 = vld [vmem:[#allocation7 + $0xf38] sm:$0xff]
    %v683 = vld [vmem:[#allocation7 + $0xf40] sm:$0xff]
    %v684 = vld [vmem:[#allocation7 + $0xf48] sm:$0xff]
    %v685 = vld [vmem:[#allocation7 + $0xf50] sm:$0xff]
    %v686 = vld [vmem:[#allocation7 + $0xf58] sm:$0xff]
    %v687 = vld [vmem:[#allocation7 + $0xf60] sm:$0xff]
    %v688 = vld [vmem:[#allocation7 + $0xf68] sm:$0xff]
    %v689 = vld [vmem:[#allocation7 + $0xf70] sm:$0xff]
    %v690 = vld [vmem:[#allocation7 + $0xf78] sm:$0xff]
    %v691 = vld [vmem:[#allocation7 + $0xf80] sm:$0xff]
    %v692 = vld [vmem:[#allocation7 + $0xf88] sm:$0xff]
    %v693 = vld [vmem:[#allocation7 + $0xf90] sm:$0xff]
    %v694 = vld [vmem:[#allocation7 + $0xf98] sm:$0xff]
    %v695 = vld [vmem:[#allocation7 + $0xfa0] sm:$0xff]
    %v696 = vld [vmem:[#allocation7 + $0xfa8] sm:$0xff]
    %v697 = vld [vmem:[#allocation7 + $0xfb0] sm:$0xff]
    %v698 = vld [vmem:[#allocation7 + $0xfb8] sm:$0xff]
    %v699 = vld [vmem:[#allocation7 + $0xfc0] sm:$0xff]
    %v700 = vld [vmem:[#allocation7 + $0xfc8] sm:$0xff]
    %v701 = vld [vmem:[#allocation7 + $0xfd0] sm:$0xff]
    %v702 = vld [vmem:[#allocation7 + $0xfd8] sm:$0xff]
    %v703 = vld [vmem:[#allocation7 + $0xfe0] sm:$0xff]
    %v704 = vld [vmem:[#allocation7 + $0xfe8] sm:$0xff]
    %v705 = vld [vmem:[#allocation7 + $0xff0] sm:$0xff]
    %v706 = vld [vmem:[#allocation7 + $0xff8] sm:$0xff]
    %v707 = vld [vmem:[#allocation8] sm:$0xf]
    %v709 = vperm.slane %v707, 0
    %v710 = vperm.slane %v707, 1
    %v711 = vperm.slane %v707, 2
    %v712 = vperm.slane %v707, 3
    %v1229 = vunpack.c.l.b16 %v195
    %v1230 = vunpack.c.h.b16 %v195
    %v1231 = vunpack.c.l.b16 %v196
    %v1232 = vunpack.c.h.b16 %v196
    %v1233 = vunpack.c.l.b16 %v197
    %v1234 = vunpack.c.h.b16 %v197
    %v1235 = vunpack.c.l.b16 %v198
    %v1236 = vunpack.c.h.b16 %v198
    %v1237 = vunpack.c.l.b16 %v199
    %v1238 = vunpack.c.h.b16 %v199
    %v1239 = vunpack.c.l.b16 %v200
    %v1240 = vunpack.c.h.b16 %v200
    %v1241 = vunpack.c.l.b16 %v201
    %v1242 = vunpack.c.h.b16 %v201
    %v1243 = vunpack.c.l.b16 %v202
    %v1244 = vunpack.c.h.b16 %v202
    %v1245 = vunpack.c.l.b16 %v203
    %v1246 = vunpack.c.h.b16 %v203
    %v1247 = vunpack.c.l.b16 %v204
    %v1248 = vunpack.c.h.b16 %v204
    %v1249 = vunpack.c.l.b16 %v205
    %v1250 = vunpack.c.h.b16 %v205
    %v1251 = vunpack.c.l.b16 %v206
    %v1252 = vunpack.c.h.b16 %v206
    %v1253 = vunpack.c.l.b16 %v207
    %v1254 = vunpack.c.h.b16 %v207
    %v1255 = vunpack.c.l.b16 %v208
    %v1256 = vunpack.c.h.b16 %v208
    %v1257 = vunpack.c.l.b16 %v209
    %v1258 = vunpack.c.h.b16 %v209
    %v1259 = vunpack.c.l.b16 %v210
    %v1260 = vunpack.c.h.b16 %v210
    %v1261 = vunpack.c.l.b16 %v211
    %v1262 = vunpack.c.h.b16 %v211
    %v1263 = vunpack.c.l.b16 %v212
    %v1264 = vunpack.c.h.b16 %v212
    %v1265 = vunpack.c.l.b16 %v213
    %v1266 = vunpack.c.h.b16 %v213
    %v1267 = vunpack.c.l.b16 %v214
    %v1268 = vunpack.c.h.b16 %v214
    %v1269 = vunpack.c.l.b16 %v215
    %v1270 = vunpack.c.h.b16 %v215
    %v1271 = vunpack.c.l.b16 %v216
    %v1272 = vunpack.c.h.b16 %v216
    %v1273 = vunpack.c.l.b16 %v217
    %v1274 = vunpack.c.h.b16 %v217
    %v1275 = vunpack.c.l.b16 %v218
    %v1276 = vunpack.c.h.b16 %v218
    %v1277 = vunpack.c.l.b16 %v219
    %v1278 = vunpack.c.h.b16 %v219
    %v1279 = vunpack.c.l.b16 %v220
    %v1280 = vunpack.c.h.b16 %v220
    %v1281 = vunpack.c.l.b16 %v221
    %v1282 = vunpack.c.h.b16 %v221
    %v1283 = vunpack.c.l.b16 %v222
    %v1284 = vunpack.c.h.b16 %v222
    %v1285 = vunpack.c.l.b16 %v223
    %v1286 = vunpack.c.h.b16 %v223
    %v1287 = vunpack.c.l.b16 %v224
    %v1288 = vunpack.c.h.b16 %v224
    %v1289 = vunpack.c.l.b16 %v225
    %v1290 = vunpack.c.h.b16 %v225
    %v1291 = vunpack.c.l.b16 %v226
    %v1292 = vunpack.c.h.b16 %v226
    %v1293 = vunpack.c.l.b16 %v227
    %v1294 = vunpack.c.h.b16 %v227
    %v1295 = vunpack.c.l.b16 %v228
    %v1296 = vunpack.c.h.b16 %v228
    %v1297 = vunpack.c.l.b16 %v229
    %v1298 = vunpack.c.h.b16 %v229
    %v1299 = vunpack.c.l.b16 %v230
    %v1300 = vunpack.c.h.b16 %v230
    %v1301 = vunpack.c.l.b16 %v231
    %v1302 = vunpack.c.h.b16 %v231
    %v1303 = vunpack.c.l.b16 %v232
    %v1304 = vunpack.c.h.b16 %v232
    %v1305 = vunpack.c.l.b16 %v233
    %v1306 = vunpack.c.h.b16 %v233
    %v1307 = vunpack.c.l.b16 %v234
    %v1308 = vunpack.c.h.b16 %v234
    %v1309 = vunpack.c.l.b16 %v235
    %v1310 = vunpack.c.h.b16 %v235
    %v1311 = vunpack.c.l.b16 %v236
    %v1312 = vunpack.c.h.b16 %v236
    %v1313 = vunpack.c.l.b16 %v237
    %v1314 = vunpack.c.h.b16 %v237
    %v1315 = vunpack.c.l.b16 %v238
    %v1316 = vunpack.c.h.b16 %v238
    %v1317 = vunpack.c.l.b16 %v239
    %v1318 = vunpack.c.h.b16 %v239
    %v1319 = vunpack.c.l.b16 %v240
    %v1320 = vunpack.c.h.b16 %v240
    %v1321 = vunpack.c.l.b16 %v241
    %v1322 = vunpack.c.h.b16 %v241
    %v1323 = vunpack.c.l.b16 %v242
    %v1324 = vunpack.c.h.b16 %v242
    %v1325 = vunpack.c.l.b16 %v243
    %v1326 = vunpack.c.h.b16 %v243
    %v1327 = vunpack.c.l.b16 %v244
    %v1328 = vunpack.c.h.b16 %v244
    %v1329 = vunpack.c.l.b16 %v245
    %v1330 = vunpack.c.h.b16 %v245
    %v1331 = vunpack.c.l.b16 %v246
    %v1332 = vunpack.c.h.b16 %v246
    %v1333 = vunpack.c.l.b16 %v247
    %v1334 = vunpack.c.h.b16 %v247
    %v1335 = vunpack.c.l.b16 %v248
    %v1336 = vunpack.c.h.b16 %v248
    %v1337 = vunpack.c.l.b16 %v249
    %v1338 = vunpack.c.h.b16 %v249
    %v1339 = vunpack.c.l.b16 %v250
    %v1340 = vunpack.c.h.b16 %v250
    %v1341 = vunpack.c.l.b16 %v251
    %v1342 = vunpack.c.h.b16 %v251
    %v1343 = vunpack.c.l.b16 %v252
    %v1344 = vunpack.c.h.b16 %v252
    %v1345 = vunpack.c.l.b16 %v253
    %v1346 = vunpack.c.h.b16 %v253
    %v1347 = vunpack.c.l.b16 %v254
    %v1348 = vunpack.c.h.b16 %v254
    %v1349 = vunpack.c.l.b16 %v255
    %v1350 = vunpack.c.h.b16 %v255
    %v1351 = vunpack.c.l.b16 %v256
    %v1352 = vunpack.c.h.b16 %v256
    %v1353 = vunpack.c.l.b16 %v257
    %v1354 = vunpack.c.h.b16 %v257
    %v1355 = vunpack.c.l.b16 %v258
    %v1356 = vunpack.c.h.b16 %v258
    %v1357 = vunpack.c.l.b16 %v259
    %v1358 = vunpack.c.h.b16 %v259
    %v1359 = vunpack.c.l.b16 %v260
    %v1360 = vunpack.c.h.b16 %v260
    %v1361 = vunpack.c.l.b16 %v261
    %v1362 = vunpack.c.h.b16 %v261
    %v1363 = vunpack.c.l.b16 %v262
    %v1364 = vunpack.c.h.b16 %v262
    %v1365 = vunpack.c.l.b16 %v263
    %v1366 = vunpack.c.h.b16 %v263
    %v1367 = vunpack.c.l.b16 %v264
    %v1368 = vunpack.c.h.b16 %v264
    %v1369 = vunpack.c.l.b16 %v265
    %v1370 = vunpack.c.h.b16 %v265
    %v1371 = vunpack.c.l.b16 %v266
    %v1372 = vunpack.c.h.b16 %v266
    %v1373 = vunpack.c.l.b16 %v267
    %v1374 = vunpack.c.h.b16 %v267
    %v1375 = vunpack.c.l.b16 %v268
    %v1376 = vunpack.c.h.b16 %v268
    %v1377 = vunpack.c.l.b16 %v269
    %v1378 = vunpack.c.h.b16 %v269
    %v1379 = vunpack.c.l.b16 %v270
    %v1380 = vunpack.c.h.b16 %v270
    %v1381 = vunpack.c.l.b16 %v271
    %v1382 = vunpack.c.h.b16 %v271
    %v1383 = vunpack.c.l.b16 %v272
    %v1384 = vunpack.c.h.b16 %v272
    %v1385 = vunpack.c.l.b16 %v273
    %v1386 = vunpack.c.h.b16 %v273
    %v1387 = vunpack.c.l.b16 %v274
    %v1388 = vunpack.c.h.b16 %v274
    %v1389 = vunpack.c.l.b16 %v275
    %v1390 = vunpack.c.h.b16 %v275
    %v1391 = vunpack.c.l.b16 %v276
    %v1392 = vunpack.c.h.b16 %v276
    %v1393 = vunpack.c.l.b16 %v277
    %v1394 = vunpack.c.h.b16 %v277
    %v1395 = vunpack.c.l.b16 %v278
    %v1396 = vunpack.c.h.b16 %v278
    %v1397 = vunpack.c.l.b16 %v279
    %v1398 = vunpack.c.h.b16 %v279
    %v1399 = vunpack.c.l.b16 %v280
    %v1400 = vunpack.c.h.b16 %v280
    %v1401 = vunpack.c.l.b16 %v281
    %v1402 = vunpack.c.h.b16 %v281
    %v1403 = vunpack.c.l.b16 %v282
    %v1404 = vunpack.c.h.b16 %v282
    %v1405 = vunpack.c.l.b16 %v283
    %v1406 = vunpack.c.h.b16 %v283
    %v1407 = vunpack.c.l.b16 %v284
    %v1408 = vunpack.c.h.b16 %v284
    %v1409 = vunpack.c.l.b16 %v285
    %v1410 = vunpack.c.h.b16 %v285
    %v1411 = vunpack.c.l.b16 %v286
    %v1412 = vunpack.c.h.b16 %v286
    %v1413 = vunpack.c.l.b16 %v287
    %v1414 = vunpack.c.h.b16 %v287
    %v1415 = vunpack.c.l.b16 %v288
    %v1416 = vunpack.c.h.b16 %v288
    %v1417 = vunpack.c.l.b16 %v289
    %v1418 = vunpack.c.h.b16 %v289
    %v1419 = vunpack.c.l.b16 %v290
    %v1420 = vunpack.c.h.b16 %v290
    %v1421 = vunpack.c.l.b16 %v291
    %v1422 = vunpack.c.h.b16 %v291
    %v1423 = vunpack.c.l.b16 %v292
    %v1424 = vunpack.c.h.b16 %v292
    %v1425 = vunpack.c.l.b16 %v293
    %v1426 = vunpack.c.h.b16 %v293
    %v1427 = vunpack.c.l.b16 %v294
    %v1428 = vunpack.c.h.b16 %v294
    %v1429 = vunpack.c.l.b16 %v295
    %v1430 = vunpack.c.h.b16 %v295
    %v1431 = vunpack.c.l.b16 %v296
    %v1432 = vunpack.c.h.b16 %v296
    %v1433 = vunpack.c.l.b16 %v297
    %v1434 = vunpack.c.h.b16 %v297
    %v1435 = vunpack.c.l.b16 %v298
    %v1436 = vunpack.c.h.b16 %v298
    %v1437 = vunpack.c.l.b16 %v299
    %v1438 = vunpack.c.h.b16 %v299
    %v1439 = vunpack.c.l.b16 %v300
    %v1440 = vunpack.c.h.b16 %v300
    %v1441 = vunpack.c.l.b16 %v301
    %v1442 = vunpack.c.h.b16 %v301
    %v1443 = vunpack.c.l.b16 %v302
    %v1444 = vunpack.c.h.b16 %v302
    %v1445 = vunpack.c.l.b16 %v303
    %v1446 = vunpack.c.h.b16 %v303
    %v1447 = vunpack.c.l.b16 %v304
    %v1448 = vunpack.c.h.b16 %v304
    %v1449 = vunpack.c.l.b16 %v305
    %v1450 = vunpack.c.h.b16 %v305
    %v1451 = vunpack.c.l.b16 %v306
    %v1452 = vunpack.c.h.b16 %v306
    %v1453 = vunpack.c.l.b16 %v307
    %v1454 = vunpack.c.h.b16 %v307
    %v1455 = vunpack.c.l.b16 %v308
    %v1456 = vunpack.c.h.b16 %v308
    %v1457 = vunpack.c.l.b16 %v309
    %v1458 = vunpack.c.h.b16 %v309
    %v1459 = vunpack.c.l.b16 %v310
    %v1460 = vunpack.c.h.b16 %v310
    %v1461 = vunpack.c.l.b16 %v311
    %v1462 = vunpack.c.h.b16 %v311
    %v1463 = vunpack.c.l.b16 %v312
    %v1464 = vunpack.c.h.b16 %v312
    %v1465 = vunpack.c.l.b16 %v313
    %v1466 = vunpack.c.h.b16 %v313
    %v1467 = vunpack.c.l.b16 %v314
    %v1468 = vunpack.c.h.b16 %v314
    %v1469 = vunpack.c.l.b16 %v315
    %v1470 = vunpack.c.h.b16 %v315
    %v1471 = vunpack.c.l.b16 %v316
    %v1472 = vunpack.c.h.b16 %v316
    %v1473 = vunpack.c.l.b16 %v317
    %v1474 = vunpack.c.h.b16 %v317
    %v1475 = vunpack.c.l.b16 %v318
    %v1476 = vunpack.c.h.b16 %v318
    %v1477 = vunpack.c.l.b16 %v319
    %v1478 = vunpack.c.h.b16 %v319
    %v1479 = vunpack.c.l.b16 %v320
    %v1480 = vunpack.c.h.b16 %v320
    %v1481 = vunpack.c.l.b16 %v321
    %v1482 = vunpack.c.h.b16 %v321
    %v1483 = vunpack.c.l.b16 %v322
    %v1484 = vunpack.c.h.b16 %v322
    %v1485 = vunpack.c.l.b16 %v323
    %v1486 = vunpack.c.h.b16 %v323
    %v1487 = vunpack.c.l.b16 %v324
    %v1488 = vunpack.c.h.b16 %v324
    %v1489 = vunpack.c.l.b16 %v325
    %v1490 = vunpack.c.h.b16 %v325
    %v1491 = vunpack.c.l.b16 %v326
    %v1492 = vunpack.c.h.b16 %v326
    %v1493 = vunpack.c.l.b16 %v327
    %v1494 = vunpack.c.h.b16 %v327
    %v1495 = vunpack.c.l.b16 %v328
    %v1496 = vunpack.c.h.b16 %v328
    %v1497 = vunpack.c.l.b16 %v329
    %v1498 = vunpack.c.h.b16 %v329
    %v1499 = vunpack.c.l.b16 %v330
    %v1500 = vunpack.c.h.b16 %v330
    %v1501 = vunpack.c.l.b16 %v331
    %v1502 = vunpack.c.h.b16 %v331
    %v1503 = vunpack.c.l.b16 %v332
    %v1504 = vunpack.c.h.b16 %v332
    %v1505 = vunpack.c.l.b16 %v333
    %v1506 = vunpack.c.h.b16 %v333
    %v1507 = vunpack.c.l.b16 %v334
    %v1508 = vunpack.c.h.b16 %v334
    %v1509 = vunpack.c.l.b16 %v335
    %v1510 = vunpack.c.h.b16 %v335
    %v1511 = vunpack.c.l.b16 %v336
    %v1512 = vunpack.c.h.b16 %v336
    %v1513 = vunpack.c.l.b16 %v337
    %v1514 = vunpack.c.h.b16 %v337
    %v1515 = vunpack.c.l.b16 %v338
    %v1516 = vunpack.c.h.b16 %v338
    %v1517 = vunpack.c.l.b16 %v339
    %v1518 = vunpack.c.h.b16 %v339
    %v1519 = vunpack.c.l.b16 %v340
    %v1520 = vunpack.c.h.b16 %v340
    %v1521 = vunpack.c.l.b16 %v341
    %v1522 = vunpack.c.h.b16 %v341
    %v1523 = vunpack.c.l.b16 %v342
    %v1524 = vunpack.c.h.b16 %v342
    %v1525 = vunpack.c.l.b16 %v343
    %v1526 = vunpack.c.h.b16 %v343
    %v1527 = vunpack.c.l.b16 %v344
    %v1528 = vunpack.c.h.b16 %v344
    %v1529 = vunpack.c.l.b16 %v345
    %v1530 = vunpack.c.h.b16 %v345
    %v1531 = vunpack.c.l.b16 %v346
    %v1532 = vunpack.c.h.b16 %v346
    %v1533 = vunpack.c.l.b16 %v347
    %v1534 = vunpack.c.h.b16 %v347
    %v1535 = vunpack.c.l.b16 %v348
    %v1536 = vunpack.c.h.b16 %v348
    %v1537 = vunpack.c.l.b16 %v349
    %v1538 = vunpack.c.h.b16 %v349
    %v1539 = vunpack.c.l.b16 %v350
    %v1540 = vunpack.c.h.b16 %v350
    %v1541 = vunpack.c.l.b16 %v351
    %v1542 = vunpack.c.h.b16 %v351
    %v1543 = vunpack.c.l.b16 %v352
    %v1544 = vunpack.c.h.b16 %v352
    %v1545 = vunpack.c.l.b16 %v353
    %v1546 = vunpack.c.h.b16 %v353
    %v1547 = vunpack.c.l.b16 %v354
    %v1548 = vunpack.c.h.b16 %v354
    %v1549 = vunpack.c.l.b16 %v355
    %v1550 = vunpack.c.h.b16 %v355
    %v1551 = vunpack.c.l.b16 %v356
    %v1552 = vunpack.c.h.b16 %v356
    %v1553 = vunpack.c.l.b16 %v357
    %v1554 = vunpack.c.h.b16 %v357
    %v1555 = vunpack.c.l.b16 %v358
    %v1556 = vunpack.c.h.b16 %v358
    %v1557 = vunpack.c.l.b16 %v359
    %v1558 = vunpack.c.h.b16 %v359
    %v1559 = vunpack.c.l.b16 %v360
    %v1560 = vunpack.c.h.b16 %v360
    %v1561 = vunpack.c.l.b16 %v361
    %v1562 = vunpack.c.h.b16 %v361
    %v1563 = vunpack.c.l.b16 %v362
    %v1564 = vunpack.c.h.b16 %v362
    %v1565 = vunpack.c.l.b16 %v363
    %v1566 = vunpack.c.h.b16 %v363
    %v1567 = vunpack.c.l.b16 %v364
    %v1568 = vunpack.c.h.b16 %v364
    %v1569 = vunpack.c.l.b16 %v365
    %v1570 = vunpack.c.h.b16 %v365
    %v1571 = vunpack.c.l.b16 %v366
    %v1572 = vunpack.c.h.b16 %v366
    %v1573 = vunpack.c.l.b16 %v367
    %v1574 = vunpack.c.h.b16 %v367
    %v1575 = vunpack.c.l.b16 %v368
    %v1576 = vunpack.c.h.b16 %v368
    %v1577 = vunpack.c.l.b16 %v369
    %v1578 = vunpack.c.h.b16 %v369
    %v1579 = vunpack.c.l.b16 %v370
    %v1580 = vunpack.c.h.b16 %v370
    %v1581 = vunpack.c.l.b16 %v371
    %v1582 = vunpack.c.h.b16 %v371
    %v1583 = vunpack.c.l.b16 %v372
    %v1584 = vunpack.c.h.b16 %v372
    %v1585 = vunpack.c.l.b16 %v373
    %v1586 = vunpack.c.h.b16 %v373
    %v1587 = vunpack.c.l.b16 %v374
    %v1588 = vunpack.c.h.b16 %v374
    %v1589 = vunpack.c.l.b16 %v375
    %v1590 = vunpack.c.h.b16 %v375
    %v1591 = vunpack.c.l.b16 %v376
    %v1592 = vunpack.c.h.b16 %v376
    %v1593 = vunpack.c.l.b16 %v377
    %v1594 = vunpack.c.h.b16 %v377
    %v1595 = vunpack.c.l.b16 %v378
    %v1596 = vunpack.c.h.b16 %v378
    %v1597 = vunpack.c.l.b16 %v379
    %v1598 = vunpack.c.h.b16 %v379
    %v1599 = vunpack.c.l.b16 %v380
    %v1600 = vunpack.c.h.b16 %v380
    %v1601 = vunpack.c.l.b16 %v381
    %v1602 = vunpack.c.h.b16 %v381
    %v1603 = vunpack.c.l.b16 %v382
    %v1604 = vunpack.c.h.b16 %v382
    %v1605 = vunpack.c.l.b16 %v383
    %v1606 = vunpack.c.h.b16 %v383
    %v1607 = vunpack.c.l.b16 %v384
    %v1608 = vunpack.c.h.b16 %v384
    %v1609 = vunpack.c.l.b16 %v385
    %v1610 = vunpack.c.h.b16 %v385
    %v1611 = vunpack.c.l.b16 %v386
    %v1612 = vunpack.c.h.b16 %v386
    %v1613 = vunpack.c.l.b16 %v387
    %v1614 = vunpack.c.h.b16 %v387
    %v1615 = vunpack.c.l.b16 %v388
    %v1616 = vunpack.c.h.b16 %v388
    %v1617 = vunpack.c.l.b16 %v389
    %v1618 = vunpack.c.h.b16 %v389
    %v1619 = vunpack.c.l.b16 %v390
    %v1620 = vunpack.c.h.b16 %v390
    %v1621 = vunpack.c.l.b16 %v391
    %v1622 = vunpack.c.h.b16 %v391
    %v1623 = vunpack.c.l.b16 %v392
    %v1624 = vunpack.c.h.b16 %v392
    %v1625 = vunpack.c.l.b16 %v393
    %v1626 = vunpack.c.h.b16 %v393
    %v1627 = vunpack.c.l.b16 %v394
    %v1628 = vunpack.c.h.b16 %v394
    %v1629 = vunpack.c.l.b16 %v395
    %v1630 = vunpack.c.h.b16 %v395
    %v1631 = vunpack.c.l.b16 %v396
    %v1632 = vunpack.c.h.b16 %v396
    %v1633 = vunpack.c.l.b16 %v397
    %v1634 = vunpack.c.h.b16 %v397
    %v1635 = vunpack.c.l.b16 %v398
    %v1636 = vunpack.c.h.b16 %v398
    %v1637 = vunpack.c.l.b16 %v399
    %v1638 = vunpack.c.h.b16 %v399
    %v1639 = vunpack.c.l.b16 %v400
    %v1640 = vunpack.c.h.b16 %v400
    %v1641 = vunpack.c.l.b16 %v401
    %v1642 = vunpack.c.h.b16 %v401
    %v1643 = vunpack.c.l.b16 %v402
    %v1644 = vunpack.c.h.b16 %v402
    %v1645 = vunpack.c.l.b16 %v403
    %v1646 = vunpack.c.h.b16 %v403
    %v1647 = vunpack.c.l.b16 %v404
    %v1648 = vunpack.c.h.b16 %v404
    %v1649 = vunpack.c.l.b16 %v405
    %v1650 = vunpack.c.h.b16 %v405
    %v1651 = vunpack.c.l.b16 %v406
    %v1652 = vunpack.c.h.b16 %v406
    %v1653 = vunpack.c.l.b16 %v407
    %v1654 = vunpack.c.h.b16 %v407
    %v1655 = vunpack.c.l.b16 %v408
    %v1656 = vunpack.c.h.b16 %v408
    %v1657 = vunpack.c.l.b16 %v409
    %v1658 = vunpack.c.h.b16 %v409
    %v1659 = vunpack.c.l.b16 %v410
    %v1660 = vunpack.c.h.b16 %v410
    %v1661 = vunpack.c.l.b16 %v411
    %v1662 = vunpack.c.h.b16 %v411
    %v1663 = vunpack.c.l.b16 %v412
    %v1664 = vunpack.c.h.b16 %v412
    %v1665 = vunpack.c.l.b16 %v413
    %v1666 = vunpack.c.h.b16 %v413
    %v1667 = vunpack.c.l.b16 %v414
    %v1668 = vunpack.c.h.b16 %v414
    %v1669 = vunpack.c.l.b16 %v415
    %v1670 = vunpack.c.h.b16 %v415
    %v1671 = vunpack.c.l.b16 %v416
    %v1672 = vunpack.c.h.b16 %v416
    %v1673 = vunpack.c.l.b16 %v417
    %v1674 = vunpack.c.h.b16 %v417
    %v1675 = vunpack.c.l.b16 %v418
    %v1676 = vunpack.c.h.b16 %v418
    %v1677 = vunpack.c.l.b16 %v419
    %v1678 = vunpack.c.h.b16 %v419
    %v1679 = vunpack.c.l.b16 %v420
    %v1680 = vunpack.c.h.b16 %v420
    %v1681 = vunpack.c.l.b16 %v421
    %v1682 = vunpack.c.h.b16 %v421
    %v1683 = vunpack.c.l.b16 %v422
    %v1684 = vunpack.c.h.b16 %v422
    %v1685 = vunpack.c.l.b16 %v423
    %v1686 = vunpack.c.h.b16 %v423
    %v1687 = vunpack.c.l.b16 %v424
    %v1688 = vunpack.c.h.b16 %v424
    %v1689 = vunpack.c.l.b16 %v425
    %v1690 = vunpack.c.h.b16 %v425
    %v1691 = vunpack.c.l.b16 %v426
    %v1692 = vunpack.c.h.b16 %v426
    %v1693 = vunpack.c.l.b16 %v427
    %v1694 = vunpack.c.h.b16 %v427
    %v1695 = vunpack.c.l.b16 %v428
    %v1696 = vunpack.c.h.b16 %v428
    %v1697 = vunpack.c.l.b16 %v429
    %v1698 = vunpack.c.h.b16 %v429
    %v1699 = vunpack.c.l.b16 %v430
    %v1700 = vunpack.c.h.b16 %v430
    %v1701 = vunpack.c.l.b16 %v431
    %v1702 = vunpack.c.h.b16 %v431
    %v1703 = vunpack.c.l.b16 %v432
    %v1704 = vunpack.c.h.b16 %v432
    %v1705 = vunpack.c.l.b16 %v433
    %v1706 = vunpack.c.h.b16 %v433
    %v1707 = vunpack.c.l.b16 %v434
    %v1708 = vunpack.c.h.b16 %v434
    %v1709 = vunpack.c.l.b16 %v435
    %v1710 = vunpack.c.h.b16 %v435
    %v1711 = vunpack.c.l.b16 %v436
    %v1712 = vunpack.c.h.b16 %v436
    %v1713 = vunpack.c.l.b16 %v437
    %v1714 = vunpack.c.h.b16 %v437
    %v1715 = vunpack.c.l.b16 %v438
    %v1716 = vunpack.c.h.b16 %v438
    %v1717 = vunpack.c.l.b16 %v439
    %v1718 = vunpack.c.h.b16 %v439
    %v1719 = vunpack.c.l.b16 %v440
    %v1720 = vunpack.c.h.b16 %v440
    %v1721 = vunpack.c.l.b16 %v441
    %v1722 = vunpack.c.h.b16 %v441
    %v1723 = vunpack.c.l.b16 %v442
    %v1724 = vunpack.c.h.b16 %v442
    %v1725 = vunpack.c.l.b16 %v443
    %v1726 = vunpack.c.h.b16 %v443
    %v1727 = vunpack.c.l.b16 %v444
    %v1728 = vunpack.c.h.b16 %v444
    %v1729 = vunpack.c.l.b16 %v445
    %v1730 = vunpack.c.h.b16 %v445
    %v1731 = vunpack.c.l.b16 %v446
    %v1732 = vunpack.c.h.b16 %v446
    %v1733 = vunpack.c.l.b16 %v447
    %v1734 = vunpack.c.h.b16 %v447
    %v1735 = vunpack.c.l.b16 %v448
    %v1736 = vunpack.c.h.b16 %v448
    %v1737 = vunpack.c.l.b16 %v449
    %v1738 = vunpack.c.h.b16 %v449
    %v1739 = vunpack.c.l.b16 %v450
    %v1740 = vunpack.c.h.b16 %v450
    %v1741 = vunpack.c.l.b16 %v451
    %v1742 = vunpack.c.h.b16 %v451
    %v1743 = vunpack.c.l.b16 %v452
    %v1744 = vunpack.c.h.b16 %v452
    %v1745 = vunpack.c.l.b16 %v453
    %v1746 = vunpack.c.h.b16 %v453
    %v1747 = vunpack.c.l.b16 %v454
    %v1748 = vunpack.c.h.b16 %v454
    %v1749 = vunpack.c.l.b16 %v455
    %v1750 = vunpack.c.h.b16 %v455
    %v1751 = vunpack.c.l.b16 %v456
    %v1752 = vunpack.c.h.b16 %v456
    %v1753 = vunpack.c.l.b16 %v457
    %v1754 = vunpack.c.h.b16 %v457
    %v1755 = vunpack.c.l.b16 %v458
    %v1756 = vunpack.c.h.b16 %v458
    %v1757 = vunpack.c.l.b16 %v459
    %v1758 = vunpack.c.h.b16 %v459
    %v1759 = vunpack.c.l.b16 %v460
    %v1760 = vunpack.c.h.b16 %v460
    %v1761 = vunpack.c.l.b16 %v461
    %v1762 = vunpack.c.h.b16 %v461
    %v1763 = vunpack.c.l.b16 %v462
    %v1764 = vunpack.c.h.b16 %v462
    %v1765 = vunpack.c.l.b16 %v463
    %v1766 = vunpack.c.h.b16 %v463
    %v1767 = vunpack.c.l.b16 %v464
    %v1768 = vunpack.c.h.b16 %v464
    %v1769 = vunpack.c.l.b16 %v465
    %v1770 = vunpack.c.h.b16 %v465
    %v1771 = vunpack.c.l.b16 %v466
    %v1772 = vunpack.c.h.b16 %v466
    %v1773 = vunpack.c.l.b16 %v467
    %v1774 = vunpack.c.h.b16 %v467
    %v1775 = vunpack.c.l.b16 %v468
    %v1776 = vunpack.c.h.b16 %v468
    %v1777 = vunpack.c.l.b16 %v469
    %v1778 = vunpack.c.h.b16 %v469
    %v1779 = vunpack.c.l.b16 %v470
    %v1780 = vunpack.c.h.b16 %v470
    %v1781 = vunpack.c.l.b16 %v471
    %v1782 = vunpack.c.h.b16 %v471
    %v1783 = vunpack.c.l.b16 %v472
    %v1784 = vunpack.c.h.b16 %v472
    %v1785 = vunpack.c.l.b16 %v473
    %v1786 = vunpack.c.h.b16 %v473
    %v1787 = vunpack.c.l.b16 %v474
    %v1788 = vunpack.c.h.b16 %v474
    %v1789 = vunpack.c.l.b16 %v475
    %v1790 = vunpack.c.h.b16 %v475
    %v1791 = vunpack.c.l.b16 %v476
    %v1792 = vunpack.c.h.b16 %v476
    %v1793 = vunpack.c.l.b16 %v477
    %v1794 = vunpack.c.h.b16 %v477
    %v1795 = vunpack.c.l.b16 %v478
    %v1796 = vunpack.c.h.b16 %v478
    %v1797 = vunpack.c.l.b16 %v479
    %v1798 = vunpack.c.h.b16 %v479
    %v1799 = vunpack.c.l.b16 %v480
    %v1800 = vunpack.c.h.b16 %v480
    %v1801 = vunpack.c.l.b16 %v481
    %v1802 = vunpack.c.h.b16 %v481
    %v1803 = vunpack.c.l.b16 %v482
    %v1804 = vunpack.c.h.b16 %v482
    %v1805 = vunpack.c.l.b16 %v483
    %v1806 = vunpack.c.h.b16 %v483
    %v1807 = vunpack.c.l.b16 %v484
    %v1808 = vunpack.c.h.b16 %v484
    %v1809 = vunpack.c.l.b16 %v485
    %v1810 = vunpack.c.h.b16 %v485
    %v1811 = vunpack.c.l.b16 %v486
    %v1812 = vunpack.c.h.b16 %v486
    %v1813 = vunpack.c.l.b16 %v487
    %v1814 = vunpack.c.h.b16 %v487
    %v1815 = vunpack.c.l.b16 %v488
    %v1816 = vunpack.c.h.b16 %v488
    %v1817 = vunpack.c.l.b16 %v489
    %v1818 = vunpack.c.h.b16 %v489
    %v1819 = vunpack.c.l.b16 %v490
    %v1820 = vunpack.c.h.b16 %v490
    %v1821 = vunpack.c.l.b16 %v491
    %v1822 = vunpack.c.h.b16 %v491
    %v1823 = vunpack.c.l.b16 %v492
    %v1824 = vunpack.c.h.b16 %v492
    %v1825 = vunpack.c.l.b16 %v493
    %v1826 = vunpack.c.h.b16 %v493
    %v1827 = vunpack.c.l.b16 %v494
    %v1828 = vunpack.c.h.b16 %v494
    %v1829 = vunpack.c.l.b16 %v495
    %v1830 = vunpack.c.h.b16 %v495
    %v1831 = vunpack.c.l.b16 %v496
    %v1832 = vunpack.c.h.b16 %v496
    %v1833 = vunpack.c.l.b16 %v497
    %v1834 = vunpack.c.h.b16 %v497
    %v1835 = vunpack.c.l.b16 %v498
    %v1836 = vunpack.c.h.b16 %v498
    %v1837 = vunpack.c.l.b16 %v499
    %v1838 = vunpack.c.h.b16 %v499
    %v1839 = vunpack.c.l.b16 %v500
    %v1840 = vunpack.c.h.b16 %v500
    %v1841 = vunpack.c.l.b16 %v501
    %v1842 = vunpack.c.h.b16 %v501
    %v1843 = vunpack.c.l.b16 %v502
    %v1844 = vunpack.c.h.b16 %v502
    %v1845 = vunpack.c.l.b16 %v503
    %v1846 = vunpack.c.h.b16 %v503
    %v1847 = vunpack.c.l.b16 %v504
    %v1848 = vunpack.c.h.b16 %v504
    %v1849 = vunpack.c.l.b16 %v505
    %v1850 = vunpack.c.h.b16 %v505
    %v1851 = vunpack.c.l.b16 %v506
    %v1852 = vunpack.c.h.b16 %v506
    %v1853 = vunpack.c.l.b16 %v507
    %v1854 = vunpack.c.h.b16 %v507
    %v1855 = vunpack.c.l.b16 %v508
    %v1856 = vunpack.c.h.b16 %v508
    %v1857 = vunpack.c.l.b16 %v509
    %v1858 = vunpack.c.h.b16 %v509
    %v1859 = vunpack.c.l.b16 %v510
    %v1860 = vunpack.c.h.b16 %v510
    %v1861 = vunpack.c.l.b16 %v511
    %v1862 = vunpack.c.h.b16 %v511
    %v1863 = vunpack.c.l.b16 %v512
    %v1864 = vunpack.c.h.b16 %v512
    %v1865 = vunpack.c.l.b16 %v513
    %v1866 = vunpack.c.h.b16 %v513
    %v1867 = vunpack.c.l.b16 %v514
    %v1868 = vunpack.c.h.b16 %v514
    %v1869 = vunpack.c.l.b16 %v515
    %v1870 = vunpack.c.h.b16 %v515
    %v1871 = vunpack.c.l.b16 %v516
    %v1872 = vunpack.c.h.b16 %v516
    %v1873 = vunpack.c.l.b16 %v517
    %v1874 = vunpack.c.h.b16 %v517
    %v1875 = vunpack.c.l.b16 %v518
    %v1876 = vunpack.c.h.b16 %v518
    %v1877 = vunpack.c.l.b16 %v519
    %v1878 = vunpack.c.h.b16 %v519
    %v1879 = vunpack.c.l.b16 %v520
    %v1880 = vunpack.c.h.b16 %v520
    %v1881 = vunpack.c.l.b16 %v521
    %v1882 = vunpack.c.h.b16 %v521
    %v1883 = vunpack.c.l.b16 %v522
    %v1884 = vunpack.c.h.b16 %v522
    %v1885 = vunpack.c.l.b16 %v523
    %v1886 = vunpack.c.h.b16 %v523
    %v1887 = vunpack.c.l.b16 %v524
    %v1888 = vunpack.c.h.b16 %v524
    %v1889 = vunpack.c.l.b16 %v525
    %v1890 = vunpack.c.h.b16 %v525
    %v1891 = vunpack.c.l.b16 %v526
    %v1892 = vunpack.c.h.b16 %v526
    %v1893 = vunpack.c.l.b16 %v527
    %v1894 = vunpack.c.h.b16 %v527
    %v1895 = vunpack.c.l.b16 %v528
    %v1896 = vunpack.c.h.b16 %v528
    %v1897 = vunpack.c.l.b16 %v529
    %v1898 = vunpack.c.h.b16 %v529
    %v1899 = vunpack.c.l.b16 %v530
    %v1900 = vunpack.c.h.b16 %v530
    %v1901 = vunpack.c.l.b16 %v531
    %v1902 = vunpack.c.h.b16 %v531
    %v1903 = vunpack.c.l.b16 %v532
    %v1904 = vunpack.c.h.b16 %v532
    %v1905 = vunpack.c.l.b16 %v533
    %v1906 = vunpack.c.h.b16 %v533
    %v1907 = vunpack.c.l.b16 %v534
    %v1908 = vunpack.c.h.b16 %v534
    %v1909 = vunpack.c.l.b16 %v535
    %v1910 = vunpack.c.h.b16 %v535
    %v1911 = vunpack.c.l.b16 %v536
    %v1912 = vunpack.c.h.b16 %v536
    %v1913 = vunpack.c.l.b16 %v537
    %v1914 = vunpack.c.h.b16 %v537
    %v1915 = vunpack.c.l.b16 %v538
    %v1916 = vunpack.c.h.b16 %v538
    %v1917 = vunpack.c.l.b16 %v539
    %v1918 = vunpack.c.h.b16 %v539
    %v1919 = vunpack.c.l.b16 %v540
    %v1920 = vunpack.c.h.b16 %v540
    %v1921 = vunpack.c.l.b16 %v541
    %v1922 = vunpack.c.h.b16 %v541
    %v1923 = vunpack.c.l.b16 %v542
    %v1924 = vunpack.c.h.b16 %v542
    %v1925 = vunpack.c.l.b16 %v543
    %v1926 = vunpack.c.h.b16 %v543
    %v1927 = vunpack.c.l.b16 %v544
    %v1928 = vunpack.c.h.b16 %v544
    %v1929 = vunpack.c.l.b16 %v545
    %v1930 = vunpack.c.h.b16 %v545
    %v1931 = vunpack.c.l.b16 %v546
    %v1932 = vunpack.c.h.b16 %v546
    %v1933 = vunpack.c.l.b16 %v547
    %v1934 = vunpack.c.h.b16 %v547
    %v1935 = vunpack.c.l.b16 %v548
    %v1936 = vunpack.c.h.b16 %v548
    %v1937 = vunpack.c.l.b16 %v549
    %v1938 = vunpack.c.h.b16 %v549
    %v1939 = vunpack.c.l.b16 %v550
    %v1940 = vunpack.c.h.b16 %v550
    %v1941 = vunpack.c.l.b16 %v551
    %v1942 = vunpack.c.h.b16 %v551
    %v1943 = vunpack.c.l.b16 %v552
    %v1944 = vunpack.c.h.b16 %v552
    %v1945 = vunpack.c.l.b16 %v553
    %v1946 = vunpack.c.h.b16 %v553
    %v1947 = vunpack.c.l.b16 %v554
    %v1948 = vunpack.c.h.b16 %v554
    %v1949 = vunpack.c.l.b16 %v555
    %v1950 = vunpack.c.h.b16 %v555
    %v1951 = vunpack.c.l.b16 %v556
    %v1952 = vunpack.c.h.b16 %v556
    %v1953 = vunpack.c.l.b16 %v557
    %v1954 = vunpack.c.h.b16 %v557
    %v1955 = vunpack.c.l.b16 %v558
    %v1956 = vunpack.c.h.b16 %v558
    %v1957 = vunpack.c.l.b16 %v559
    %v1958 = vunpack.c.h.b16 %v559
    %v1959 = vunpack.c.l.b16 %v560
    %v1960 = vunpack.c.h.b16 %v560
    %v1961 = vunpack.c.l.b16 %v561
    %v1962 = vunpack.c.h.b16 %v561
    %v1963 = vunpack.c.l.b16 %v562
    %v1964 = vunpack.c.h.b16 %v562
    %v1965 = vunpack.c.l.b16 %v563
    %v1966 = vunpack.c.h.b16 %v563
    %v1967 = vunpack.c.l.b16 %v564
    %v1968 = vunpack.c.h.b16 %v564
    %v1969 = vunpack.c.l.b16 %v565
    %v1970 = vunpack.c.h.b16 %v565
    %v1971 = vunpack.c.l.b16 %v566
    %v1972 = vunpack.c.h.b16 %v566
    %v1973 = vunpack.c.l.b16 %v567
    %v1974 = vunpack.c.h.b16 %v567
    %v1975 = vunpack.c.l.b16 %v568
    %v1976 = vunpack.c.h.b16 %v568
    %v1977 = vunpack.c.l.b16 %v569
    %v1978 = vunpack.c.h.b16 %v569
    %v1979 = vunpack.c.l.b16 %v570
    %v1980 = vunpack.c.h.b16 %v570
    %v1981 = vunpack.c.l.b16 %v571
    %v1982 = vunpack.c.h.b16 %v571
    %v1983 = vunpack.c.l.b16 %v572
    %v1984 = vunpack.c.h.b16 %v572
    %v1985 = vunpack.c.l.b16 %v573
    %v1986 = vunpack.c.h.b16 %v573
    %v1987 = vunpack.c.l.b16 %v574
    %v1988 = vunpack.c.h.b16 %v574
    %v1989 = vunpack.c.l.b16 %v575
    %v1990 = vunpack.c.h.b16 %v575
    %v1991 = vunpack.c.l.b16 %v576
    %v1992 = vunpack.c.h.b16 %v576
    %v1993 = vunpack.c.l.b16 %v577
    %v1994 = vunpack.c.h.b16 %v577
    %v1995 = vunpack.c.l.b16 %v578
    %v1996 = vunpack.c.h.b16 %v578
    %v1997 = vunpack.c.l.b16 %v579
    %v1998 = vunpack.c.h.b16 %v579
    %v1999 = vunpack.c.l.b16 %v580
    %v2000 = vunpack.c.h.b16 %v580
    %v2001 = vunpack.c.l.b16 %v581
    %v2002 = vunpack.c.h.b16 %v581
    %v2003 = vunpack.c.l.b16 %v582
    %v2004 = vunpack.c.h.b16 %v582
    %v2005 = vunpack.c.l.b16 %v583
    %v2006 = vunpack.c.h.b16 %v583
    %v2007 = vunpack.c.l.b16 %v584
    %v2008 = vunpack.c.h.b16 %v584
    %v2009 = vunpack.c.l.b16 %v585
    %v2010 = vunpack.c.h.b16 %v585
    %v2011 = vunpack.c.l.b16 %v586
    %v2012 = vunpack.c.h.b16 %v586
    %v2013 = vunpack.c.l.b16 %v587
    %v2014 = vunpack.c.h.b16 %v587
    %v2015 = vunpack.c.l.b16 %v588
    %v2016 = vunpack.c.h.b16 %v588
    %v2017 = vunpack.c.l.b16 %v589
    %v2018 = vunpack.c.h.b16 %v589
    %v2019 = vunpack.c.l.b16 %v590
    %v2020 = vunpack.c.h.b16 %v590
    %v2021 = vunpack.c.l.b16 %v591
    %v2022 = vunpack.c.h.b16 %v591
    %v2023 = vunpack.c.l.b16 %v592
    %v2024 = vunpack.c.h.b16 %v592
    %v2025 = vunpack.c.l.b16 %v593
    %v2026 = vunpack.c.h.b16 %v593
    %v2027 = vunpack.c.l.b16 %v594
    %v2028 = vunpack.c.h.b16 %v594
    %v2029 = vunpack.c.l.b16 %v595
    %v2030 = vunpack.c.h.b16 %v595
    %v2031 = vunpack.c.l.b16 %v596
    %v2032 = vunpack.c.h.b16 %v596
    %v2033 = vunpack.c.l.b16 %v597
    %v2034 = vunpack.c.h.b16 %v597
    %v2035 = vunpack.c.l.b16 %v598
    %v2036 = vunpack.c.h.b16 %v598
    %v2037 = vunpack.c.l.b16 %v599
    %v2038 = vunpack.c.h.b16 %v599
    %v2039 = vunpack.c.l.b16 %v600
    %v2040 = vunpack.c.h.b16 %v600
    %v2041 = vunpack.c.l.b16 %v601
    %v2042 = vunpack.c.h.b16 %v601
    %v2043 = vunpack.c.l.b16 %v602
    %v2044 = vunpack.c.h.b16 %v602
    %v2045 = vunpack.c.l.b16 %v603
    %v2046 = vunpack.c.h.b16 %v603
    %v2047 = vunpack.c.l.b16 %v604
    %v2048 = vunpack.c.h.b16 %v604
    %v2049 = vunpack.c.l.b16 %v605
    %v2050 = vunpack.c.h.b16 %v605
    %v2051 = vunpack.c.l.b16 %v606
    %v2052 = vunpack.c.h.b16 %v606
    %v2053 = vunpack.c.l.b16 %v607
    %v2054 = vunpack.c.h.b16 %v607
    %v2055 = vunpack.c.l.b16 %v608
    %v2056 = vunpack.c.h.b16 %v608
    %v2057 = vunpack.c.l.b16 %v609
    %v2058 = vunpack.c.h.b16 %v609
    %v2059 = vunpack.c.l.b16 %v610
    %v2060 = vunpack.c.h.b16 %v610
    %v2061 = vunpack.c.l.b16 %v611
    %v2062 = vunpack.c.h.b16 %v611
    %v2063 = vunpack.c.l.b16 %v612
    %v2064 = vunpack.c.h.b16 %v612
    %v2065 = vunpack.c.l.b16 %v613
    %v2066 = vunpack.c.h.b16 %v613
    %v2067 = vunpack.c.l.b16 %v614
    %v2068 = vunpack.c.h.b16 %v614
    %v2069 = vunpack.c.l.b16 %v615
    %v2070 = vunpack.c.h.b16 %v615
    %v2071 = vunpack.c.l.b16 %v616
    %v2072 = vunpack.c.h.b16 %v616
    %v2073 = vunpack.c.l.b16 %v617
    %v2074 = vunpack.c.h.b16 %v617
    %v2075 = vunpack.c.l.b16 %v618
    %v2076 = vunpack.c.h.b16 %v618
    %v2077 = vunpack.c.l.b16 %v619
    %v2078 = vunpack.c.h.b16 %v619
    %v2079 = vunpack.c.l.b16 %v620
    %v2080 = vunpack.c.h.b16 %v620
    %v2081 = vunpack.c.l.b16 %v621
    %v2082 = vunpack.c.h.b16 %v621
    %v2083 = vunpack.c.l.b16 %v622
    %v2084 = vunpack.c.h.b16 %v622
    %v2085 = vunpack.c.l.b16 %v623
    %v2086 = vunpack.c.h.b16 %v623
    %v2087 = vunpack.c.l.b16 %v624
    %v2088 = vunpack.c.h.b16 %v624
    %v2089 = vunpack.c.l.b16 %v625
    %v2090 = vunpack.c.h.b16 %v625
    %v2091 = vunpack.c.l.b16 %v626
    %v2092 = vunpack.c.h.b16 %v626
    %v2093 = vunpack.c.l.b16 %v627
    %v2094 = vunpack.c.h.b16 %v627
    %v2095 = vunpack.c.l.b16 %v628
    %v2096 = vunpack.c.h.b16 %v628
    %v2097 = vunpack.c.l.b16 %v629
    %v2098 = vunpack.c.h.b16 %v629
    %v2099 = vunpack.c.l.b16 %v630
    %v2100 = vunpack.c.h.b16 %v630
    %v2101 = vunpack.c.l.b16 %v631
    %v2102 = vunpack.c.h.b16 %v631
    %v2103 = vunpack.c.l.b16 %v632
    %v2104 = vunpack.c.h.b16 %v632
    %v2105 = vunpack.c.l.b16 %v633
    %v2106 = vunpack.c.h.b16 %v633
    %v2107 = vunpack.c.l.b16 %v634
    %v2108 = vunpack.c.h.b16 %v634
    %v2109 = vunpack.c.l.b16 %v635
    %v2110 = vunpack.c.h.b16 %v635
    %v2111 = vunpack.c.l.b16 %v636
    %v2112 = vunpack.c.h.b16 %v636
    %v2113 = vunpack.c.l.b16 %v637
    %v2114 = vunpack.c.h.b16 %v637
    %v2115 = vunpack.c.l.b16 %v638
    %v2116 = vunpack.c.h.b16 %v638
    %v2117 = vunpack.c.l.b16 %v639
    %v2118 = vunpack.c.h.b16 %v639
    %v2119 = vunpack.c.l.b16 %v640
    %v2120 = vunpack.c.h.b16 %v640
    %v2121 = vunpack.c.l.b16 %v641
    %v2122 = vunpack.c.h.b16 %v641
    %v2123 = vunpack.c.l.b16 %v642
    %v2124 = vunpack.c.h.b16 %v642
    %v2125 = vunpack.c.l.b16 %v643
    %v2126 = vunpack.c.h.b16 %v643
    %v2127 = vunpack.c.l.b16 %v644
    %v2128 = vunpack.c.h.b16 %v644
    %v2129 = vunpack.c.l.b16 %v645
    %v2130 = vunpack.c.h.b16 %v645
    %v2131 = vunpack.c.l.b16 %v646
    %v2132 = vunpack.c.h.b16 %v646
    %v2133 = vunpack.c.l.b16 %v647
    %v2134 = vunpack.c.h.b16 %v647
    %v2135 = vunpack.c.l.b16 %v648
    %v2136 = vunpack.c.h.b16 %v648
    %v2137 = vunpack.c.l.b16 %v649
    %v2138 = vunpack.c.h.b16 %v649
    %v2139 = vunpack.c.l.b16 %v650
    %v2140 = vunpack.c.h.b16 %v650
    %v2141 = vunpack.c.l.b16 %v651
    %v2142 = vunpack.c.h.b16 %v651
    %v2143 = vunpack.c.l.b16 %v652
    %v2144 = vunpack.c.h.b16 %v652
    %v2145 = vunpack.c.l.b16 %v653
    %v2146 = vunpack.c.h.b16 %v653
    %v2147 = vunpack.c.l.b16 %v654
    %v2148 = vunpack.c.h.b16 %v654
    %v2149 = vunpack.c.l.b16 %v655
    %v2150 = vunpack.c.h.b16 %v655
    %v2151 = vunpack.c.l.b16 %v656
    %v2152 = vunpack.c.h.b16 %v656
    %v2153 = vunpack.c.l.b16 %v657
    %v2154 = vunpack.c.h.b16 %v657
    %v2155 = vunpack.c.l.b16 %v658
    %v2156 = vunpack.c.h.b16 %v658
    %v2157 = vunpack.c.l.b16 %v659
    %v2158 = vunpack.c.h.b16 %v659
    %v2159 = vunpack.c.l.b16 %v660
    %v2160 = vunpack.c.h.b16 %v660
    %v2161 = vunpack.c.l.b16 %v661
    %v2162 = vunpack.c.h.b16 %v661
    %v2163 = vunpack.c.l.b16 %v662
    %v2164 = vunpack.c.h.b16 %v662
    %v2165 = vunpack.c.l.b16 %v663
    %v2166 = vunpack.c.h.b16 %v663
    %v2167 = vunpack.c.l.b16 %v664
    %v2168 = vunpack.c.h.b16 %v664
    %v2169 = vunpack.c.l.b16 %v665
    %v2170 = vunpack.c.h.b16 %v665
    %v2171 = vunpack.c.l.b16 %v666
    %v2172 = vunpack.c.h.b16 %v666
    %v2173 = vunpack.c.l.b16 %v667
    %v2174 = vunpack.c.h.b16 %v667
    %v2175 = vunpack.c.l.b16 %v668
    %v2176 = vunpack.c.h.b16 %v668
    %v2177 = vunpack.c.l.b16 %v669
    %v2178 = vunpack.c.h.b16 %v669
    %v2179 = vunpack.c.l.b16 %v670
    %v2180 = vunpack.c.h.b16 %v670
    %v2181 = vunpack.c.l.b16 %v671
    %v2182 = vunpack.c.h.b16 %v671
    %v2183 = vunpack.c.l.b16 %v672
    %v2184 = vunpack.c.h.b16 %v672
    %v2185 = vunpack.c.l.b16 %v673
    %v2186 = vunpack.c.h.b16 %v673
    %v2187 = vunpack.c.l.b16 %v674
    %v2188 = vunpack.c.h.b16 %v674
    %v2189 = vunpack.c.l.b16 %v675
    %v2190 = vunpack.c.h.b16 %v675
    %v2191 = vunpack.c.l.b16 %v676
    %v2192 = vunpack.c.h.b16 %v676
    %v2193 = vunpack.c.l.b16 %v677
    %v2194 = vunpack.c.h.b16 %v677
    %v2195 = vunpack.c.l.b16 %v678
    %v2196 = vunpack.c.h.b16 %v678
    %v2197 = vunpack.c.l.b16 %v679
    %v2198 = vunpack.c.h.b16 %v679
    %v2199 = vunpack.c.l.b16 %v680
    %v2200 = vunpack.c.h.b16 %v680
    %v2201 = vunpack.c.l.b16 %v681
    %v2202 = vunpack.c.h.b16 %v681
    %v2203 = vunpack.c.l.b16 %v682
    %v2204 = vunpack.c.h.b16 %v682
    %v2205 = vunpack.c.l.b16 %v683
    %v2206 = vunpack.c.h.b16 %v683
    %v2207 = vunpack.c.l.b16 %v684
    %v2208 = vunpack.c.h.b16 %v684
    %v2209 = vunpack.c.l.b16 %v685
    %v2210 = vunpack.c.h.b16 %v685
    %v2211 = vunpack.c.l.b16 %v686
    %v2212 = vunpack.c.h.b16 %v686
    %v2213 = vunpack.c.l.b16 %v687
    %v2214 = vunpack.c.h.b16 %v687
    %v2215 = vunpack.c.l.b16 %v688
    %v2216 = vunpack.c.h.b16 %v688
    %v2217 = vunpack.c.l.b16 %v689
    %v2218 = vunpack.c.h.b16 %v689
    %v2219 = vunpack.c.l.b16 %v690
    %v2220 = vunpack.c.h.b16 %v690
    %v2221 = vunpack.c.l.b16 %v691
    %v2222 = vunpack.c.h.b16 %v691
    %v2223 = vunpack.c.l.b16 %v692
    %v2224 = vunpack.c.h.b16 %v692
    %v2225 = vunpack.c.l.b16 %v693
    %v2226 = vunpack.c.h.b16 %v693
    %v2227 = vunpack.c.l.b16 %v694
    %v2228 = vunpack.c.h.b16 %v694
    %v2229 = vunpack.c.l.b16 %v695
    %v2230 = vunpack.c.h.b16 %v695
    %v2231 = vunpack.c.l.b16 %v696
    %v2232 = vunpack.c.h.b16 %v696
    %v2233 = vunpack.c.l.b16 %v697
    %v2234 = vunpack.c.h.b16 %v697
    %v2235 = vunpack.c.l.b16 %v698
    %v2236 = vunpack.c.h.b16 %v698
    %v2237 = vunpack.c.l.b16 %v699
    %v2238 = vunpack.c.h.b16 %v699
    %v2239 = vunpack.c.l.b16 %v700
    %v2240 = vunpack.c.h.b16 %v700
    %v2241 = vunpack.c.l.b16 %v701
    %v2242 = vunpack.c.h.b16 %v701
    %v2243 = vunpack.c.l.b16 %v702
    %v2244 = vunpack.c.h.b16 %v702
    %v2245 = vunpack.c.l.b16 %v703
    %v2246 = vunpack.c.h.b16 %v703
    %v2247 = vunpack.c.l.b16 %v704
    %v2248 = vunpack.c.h.b16 %v704
    %v2249 = vunpack.c.l.b16 %v705
    %v2250 = vunpack.c.h.b16 %v705
    %v2251 = vunpack.c.l.b16 %v706
    %v2252 = vunpack.c.h.b16 %v706
    %v2253 = vpack.c.b16 %v1233, %v1229
    %v2254 = vpack.c.b16 %v1234, %v1230
    %v2255 = vpack.c.b16 %v1235, %v1231
    %v2256 = vpack.c.b16 %v1236, %v1232
    %v2257 = vpack.c.b16 %v1241, %v1237
    %v2258 = vpack.c.b16 %v1242, %v1238
    %v2259 = vpack.c.b16 %v1243, %v1239
    %v2260 = vpack.c.b16 %v1244, %v1240
    %v2261 = vpack.c.b16 %v1249, %v1245
    %v2262 = vpack.c.b16 %v1250, %v1246
    %v2263 = vpack.c.b16 %v1251, %v1247
    %v2264 = vpack.c.b16 %v1252, %v1248
    %v2265 = vpack.c.b16 %v1257, %v1253
    %v2266 = vpack.c.b16 %v1258, %v1254
    %v2267 = vpack.c.b16 %v1259, %v1255
    %v2268 = vpack.c.b16 %v1260, %v1256
    %v2269 = vpack.c.b16 %v1265, %v1261
    %v2270 = vpack.c.b16 %v1266, %v1262
    %v2271 = vpack.c.b16 %v1267, %v1263
    %v2272 = vpack.c.b16 %v1268, %v1264
    %v2273 = vpack.c.b16 %v1273, %v1269
    %v2274 = vpack.c.b16 %v1274, %v1270
    %v2275 = vpack.c.b16 %v1275, %v1271
    %v2276 = vpack.c.b16 %v1276, %v1272
    %v2277 = vpack.c.b16 %v1281, %v1277
    %v2278 = vpack.c.b16 %v1282, %v1278
    %v2279 = vpack.c.b16 %v1283, %v1279
    %v2280 = vpack.c.b16 %v1284, %v1280
    %v2281 = vpack.c.b16 %v1289, %v1285
    %v2282 = vpack.c.b16 %v1290, %v1286
    %v2283 = vpack.c.b16 %v1291, %v1287
    %v2284 = vpack.c.b16 %v1292, %v1288
    %v2285 = vpack.c.b16 %v1297, %v1293
    %v2286 = vpack.c.b16 %v1298, %v1294
    %v2287 = vpack.c.b16 %v1299, %v1295
    %v2288 = vpack.c.b16 %v1300, %v1296
    %v2289 = vpack.c.b16 %v1305, %v1301
    %v2290 = vpack.c.b16 %v1306, %v1302
    %v2291 = vpack.c.b16 %v1307, %v1303
    %v2292 = vpack.c.b16 %v1308, %v1304
    %v2293 = vpack.c.b16 %v1313, %v1309
    %v2294 = vpack.c.b16 %v1314, %v1310
    %v2295 = vpack.c.b16 %v1315, %v1311
    %v2296 = vpack.c.b16 %v1316, %v1312
    %v2297 = vpack.c.b16 %v1321, %v1317
    %v2298 = vpack.c.b16 %v1322, %v1318
    %v2299 = vpack.c.b16 %v1323, %v1319
    %v2300 = vpack.c.b16 %v1324, %v1320
    %v2301 = vpack.c.b16 %v1329, %v1325
    %v2302 = vpack.c.b16 %v1330, %v1326
    %v2303 = vpack.c.b16 %v1331, %v1327
    %v2304 = vpack.c.b16 %v1332, %v1328
    %v2305 = vpack.c.b16 %v1337, %v1333
    %v2306 = vpack.c.b16 %v1338, %v1334
    %v2307 = vpack.c.b16 %v1339, %v1335
    %v2308 = vpack.c.b16 %v1340, %v1336
    %v2309 = vpack.c.b16 %v1345, %v1341
    %v2310 = vpack.c.b16 %v1346, %v1342
    %v2311 = vpack.c.b16 %v1347, %v1343
    %v2312 = vpack.c.b16 %v1348, %v1344
    %v2313 = vpack.c.b16 %v1353, %v1349
    %v2314 = vpack.c.b16 %v1354, %v1350
    %v2315 = vpack.c.b16 %v1355, %v1351
    %v2316 = vpack.c.b16 %v1356, %v1352
    %v2317 = vpack.c.b16 %v1361, %v1357
    %v2318 = vpack.c.b16 %v1362, %v1358
    %v2319 = vpack.c.b16 %v1363, %v1359
    %v2320 = vpack.c.b16 %v1364, %v1360
    %v2321 = vpack.c.b16 %v1369, %v1365
    %v2322 = vpack.c.b16 %v1370, %v1366
    %v2323 = vpack.c.b16 %v1371, %v1367
    %v2324 = vpack.c.b16 %v1372, %v1368
    %v2325 = vpack.c.b16 %v1377, %v1373
    %v2326 = vpack.c.b16 %v1378, %v1374
    %v2327 = vpack.c.b16 %v1379, %v1375
    %v2328 = vpack.c.b16 %v1380, %v1376
    %v2329 = vpack.c.b16 %v1385, %v1381
    %v2330 = vpack.c.b16 %v1386, %v1382
    %v2331 = vpack.c.b16 %v1387, %v1383
    %v2332 = vpack.c.b16 %v1388, %v1384
    %v2333 = vpack.c.b16 %v1393, %v1389
    %v2334 = vpack.c.b16 %v1394, %v1390
    %v2335 = vpack.c.b16 %v1395, %v1391
    %v2336 = vpack.c.b16 %v1396, %v1392
    %v2337 = vpack.c.b16 %v1401, %v1397
    %v2338 = vpack.c.b16 %v1402, %v1398
    %v2339 = vpack.c.b16 %v1403, %v1399
    %v2340 = vpack.c.b16 %v1404, %v1400
    %v2341 = vpack.c.b16 %v1409, %v1405
    %v2342 = vpack.c.b16 %v1410, %v1406
    %v2343 = vpack.c.b16 %v1411, %v1407
    %v2344 = vpack.c.b16 %v1412, %v1408
    %v2345 = vpack.c.b16 %v1417, %v1413
    %v2346 = vpack.c.b16 %v1418, %v1414
    %v2347 = vpack.c.b16 %v1419, %v1415
    %v2348 = vpack.c.b16 %v1420, %v1416
    %v2349 = vpack.c.b16 %v1425, %v1421
    %v2350 = vpack.c.b16 %v1426, %v1422
    %v2351 = vpack.c.b16 %v1427, %v1423
    %v2352 = vpack.c.b16 %v1428, %v1424
    %v2353 = vpack.c.b16 %v1433, %v1429
    %v2354 = vpack.c.b16 %v1434, %v1430
    %v2355 = vpack.c.b16 %v1435, %v1431
    %v2356 = vpack.c.b16 %v1436, %v1432
    %v2357 = vpack.c.b16 %v1441, %v1437
    %v2358 = vpack.c.b16 %v1442, %v1438
    %v2359 = vpack.c.b16 %v1443, %v1439
    %v2360 = vpack.c.b16 %v1444, %v1440
    %v2361 = vpack.c.b16 %v1449, %v1445
    %v2362 = vpack.c.b16 %v1450, %v1446
    %v2363 = vpack.c.b16 %v1451, %v1447
    %v2364 = vpack.c.b16 %v1452, %v1448
    %v2365 = vpack.c.b16 %v1457, %v1453
    %v2366 = vpack.c.b16 %v1458, %v1454
    %v2367 = vpack.c.b16 %v1459, %v1455
    %v2368 = vpack.c.b16 %v1460, %v1456
    %v2369 = vpack.c.b16 %v1465, %v1461
    %v2370 = vpack.c.b16 %v1466, %v1462
    %v2371 = vpack.c.b16 %v1467, %v1463
    %v2372 = vpack.c.b16 %v1468, %v1464
    %v2373 = vpack.c.b16 %v1473, %v1469
    %v2374 = vpack.c.b16 %v1474, %v1470
    %v2375 = vpack.c.b16 %v1475, %v1471
    %v2376 = vpack.c.b16 %v1476, %v1472
    %v2377 = vpack.c.b16 %v1481, %v1477
    %v2378 = vpack.c.b16 %v1482, %v1478
    %v2379 = vpack.c.b16 %v1483, %v1479
    %v2380 = vpack.c.b16 %v1484, %v1480
    %v2381 = vpack.c.b16 %v1489, %v1485
    %v2382 = vpack.c.b16 %v1490, %v1486
    %v2383 = vpack.c.b16 %v1491, %v1487
    %v2384 = vpack.c.b16 %v1492, %v1488
    %v2385 = vpack.c.b16 %v1497, %v1493
    %v2386 = vpack.c.b16 %v1498, %v1494
    %v2387 = vpack.c.b16 %v1499, %v1495
    %v2388 = vpack.c.b16 %v1500, %v1496
    %v2389 = vpack.c.b16 %v1505, %v1501
    %v2390 = vpack.c.b16 %v1506, %v1502
    %v2391 = vpack.c.b16 %v1507, %v1503
    %v2392 = vpack.c.b16 %v1508, %v1504
    %v2393 = vpack.c.b16 %v1513, %v1509
    %v2394 = vpack.c.b16 %v1514, %v1510
    %v2395 = vpack.c.b16 %v1515, %v1511
    %v2396 = vpack.c.b16 %v1516, %v1512
    %v2397 = vpack.c.b16 %v1521, %v1517
    %v2398 = vpack.c.b16 %v1522, %v1518
    %v2399 = vpack.c.b16 %v1523, %v1519
    %v2400 = vpack.c.b16 %v1524, %v1520
    %v2401 = vpack.c.b16 %v1529, %v1525
    %v2402 = vpack.c.b16 %v1530, %v1526
    %v2403 = vpack.c.b16 %v1531, %v1527
    %v2404 = vpack.c.b16 %v1532, %v1528
    %v2405 = vpack.c.b16 %v1537, %v1533
    %v2406 = vpack.c.b16 %v1538, %v1534
    %v2407 = vpack.c.b16 %v1539, %v1535
    %v2408 = vpack.c.b16 %v1540, %v1536
    %v2409 = vpack.c.b16 %v1545, %v1541
    %v2410 = vpack.c.b16 %v1546, %v1542
    %v2411 = vpack.c.b16 %v1547, %v1543
    %v2412 = vpack.c.b16 %v1548, %v1544
    %v2413 = vpack.c.b16 %v1553, %v1549
    %v2414 = vpack.c.b16 %v1554, %v1550
    %v2415 = vpack.c.b16 %v1555, %v1551
    %v2416 = vpack.c.b16 %v1556, %v1552
    %v2417 = vpack.c.b16 %v1561, %v1557
    %v2418 = vpack.c.b16 %v1562, %v1558
    %v2419 = vpack.c.b16 %v1563, %v1559
    %v2420 = vpack.c.b16 %v1564, %v1560
    %v2421 = vpack.c.b16 %v1569, %v1565
    %v2422 = vpack.c.b16 %v1570, %v1566
    %v2423 = vpack.c.b16 %v1571, %v1567
    %v2424 = vpack.c.b16 %v1572, %v1568
    %v2425 = vpack.c.b16 %v1577, %v1573
    %v2426 = vpack.c.b16 %v1578, %v1574
    %v2427 = vpack.c.b16 %v1579, %v1575
    %v2428 = vpack.c.b16 %v1580, %v1576
    %v2429 = vpack.c.b16 %v1585, %v1581
    %v2430 = vpack.c.b16 %v1586, %v1582
    %v2431 = vpack.c.b16 %v1587, %v1583
    %v2432 = vpack.c.b16 %v1588, %v1584
    %v2433 = vpack.c.b16 %v1593, %v1589
    %v2434 = vpack.c.b16 %v1594, %v1590
    %v2435 = vpack.c.b16 %v1595, %v1591
    %v2436 = vpack.c.b16 %v1596, %v1592
    %v2437 = vpack.c.b16 %v1601, %v1597
    %v2438 = vpack.c.b16 %v1602, %v1598
    %v2439 = vpack.c.b16 %v1603, %v1599
    %v2440 = vpack.c.b16 %v1604, %v1600
    %v2441 = vpack.c.b16 %v1609, %v1605
    %v2442 = vpack.c.b16 %v1610, %v1606
    %v2443 = vpack.c.b16 %v1611, %v1607
    %v2444 = vpack.c.b16 %v1612, %v1608
    %v2445 = vpack.c.b16 %v1617, %v1613
    %v2446 = vpack.c.b16 %v1618, %v1614
    %v2447 = vpack.c.b16 %v1619, %v1615
    %v2448 = vpack.c.b16 %v1620, %v1616
    %v2449 = vpack.c.b16 %v1625, %v1621
    %v2450 = vpack.c.b16 %v1626, %v1622
    %v2451 = vpack.c.b16 %v1627, %v1623
    %v2452 = vpack.c.b16 %v1628, %v1624
    %v2453 = vpack.c.b16 %v1633, %v1629
    %v2454 = vpack.c.b16 %v1634, %v1630
    %v2455 = vpack.c.b16 %v1635, %v1631
    %v2456 = vpack.c.b16 %v1636, %v1632
    %v2457 = vpack.c.b16 %v1641, %v1637
    %v2458 = vpack.c.b16 %v1642, %v1638
    %v2459 = vpack.c.b16 %v1643, %v1639
    %v2460 = vpack.c.b16 %v1644, %v1640
    %v2461 = vpack.c.b16 %v1649, %v1645
    %v2462 = vpack.c.b16 %v1650, %v1646
    %v2463 = vpack.c.b16 %v1651, %v1647
    %v2464 = vpack.c.b16 %v1652, %v1648
    %v2465 = vpack.c.b16 %v1657, %v1653
    %v2466 = vpack.c.b16 %v1658, %v1654
    %v2467 = vpack.c.b16 %v1659, %v1655
    %v2468 = vpack.c.b16 %v1660, %v1656
    %v2469 = vpack.c.b16 %v1665, %v1661
    %v2470 = vpack.c.b16 %v1666, %v1662
    %v2471 = vpack.c.b16 %v1667, %v1663
    %v2472 = vpack.c.b16 %v1668, %v1664
    %v2473 = vpack.c.b16 %v1673, %v1669
    %v2474 = vpack.c.b16 %v1674, %v1670
    %v2475 = vpack.c.b16 %v1675, %v1671
    %v2476 = vpack.c.b16 %v1676, %v1672
    %v2477 = vpack.c.b16 %v1681, %v1677
    %v2478 = vpack.c.b16 %v1682, %v1678
    %v2479 = vpack.c.b16 %v1683, %v1679
    %v2480 = vpack.c.b16 %v1684, %v1680
    %v2481 = vpack.c.b16 %v1689, %v1685
    %v2482 = vpack.c.b16 %v1690, %v1686
    %v2483 = vpack.c.b16 %v1691, %v1687
    %v2484 = vpack.c.b16 %v1692, %v1688
    %v2485 = vpack.c.b16 %v1697, %v1693
    %v2486 = vpack.c.b16 %v1698, %v1694
    %v2487 = vpack.c.b16 %v1699, %v1695
    %v2488 = vpack.c.b16 %v1700, %v1696
    %v2489 = vpack.c.b16 %v1705, %v1701
    %v2490 = vpack.c.b16 %v1706, %v1702
    %v2491 = vpack.c.b16 %v1707, %v1703
    %v2492 = vpack.c.b16 %v1708, %v1704
    %v2493 = vpack.c.b16 %v1713, %v1709
    %v2494 = vpack.c.b16 %v1714, %v1710
    %v2495 = vpack.c.b16 %v1715, %v1711
    %v2496 = vpack.c.b16 %v1716, %v1712
    %v2497 = vpack.c.b16 %v1721, %v1717
    %v2498 = vpack.c.b16 %v1722, %v1718
    %v2499 = vpack.c.b16 %v1723, %v1719
    %v2500 = vpack.c.b16 %v1724, %v1720
    %v2501 = vpack.c.b16 %v1729, %v1725
    %v2502 = vpack.c.b16 %v1730, %v1726
    %v2503 = vpack.c.b16 %v1731, %v1727
    %v2504 = vpack.c.b16 %v1732, %v1728
    %v2505 = vpack.c.b16 %v1737, %v1733
    %v2506 = vpack.c.b16 %v1738, %v1734
    %v2507 = vpack.c.b16 %v1739, %v1735
    %v2508 = vpack.c.b16 %v1740, %v1736
    %v2509 = vpack.c.b16 %v1745, %v1741
    %v2510 = vpack.c.b16 %v1746, %v1742
    %v2511 = vpack.c.b16 %v1747, %v1743
    %v2512 = vpack.c.b16 %v1748, %v1744
    %v2513 = vpack.c.b16 %v1753, %v1749
    %v2514 = vpack.c.b16 %v1754, %v1750
    %v2515 = vpack.c.b16 %v1755, %v1751
    %v2516 = vpack.c.b16 %v1756, %v1752
    %v2517 = vpack.c.b16 %v1761, %v1757
    %v2518 = vpack.c.b16 %v1762, %v1758
    %v2519 = vpack.c.b16 %v1763, %v1759
    %v2520 = vpack.c.b16 %v1764, %v1760
    %v2521 = vpack.c.b16 %v1769, %v1765
    %v2522 = vpack.c.b16 %v1770, %v1766
    %v2523 = vpack.c.b16 %v1771, %v1767
    %v2524 = vpack.c.b16 %v1772, %v1768
    %v2525 = vpack.c.b16 %v1777, %v1773
    %v2526 = vpack.c.b16 %v1778, %v1774
    %v2527 = vpack.c.b16 %v1779, %v1775
    %v2528 = vpack.c.b16 %v1780, %v1776
    %v2529 = vpack.c.b16 %v1785, %v1781
    %v2530 = vpack.c.b16 %v1786, %v1782
    %v2531 = vpack.c.b16 %v1787, %v1783
    %v2532 = vpack.c.b16 %v1788, %v1784
    %v2533 = vpack.c.b16 %v1793, %v1789
    %v2534 = vpack.c.b16 %v1794, %v1790
    %v2535 = vpack.c.b16 %v1795, %v1791
    %v2536 = vpack.c.b16 %v1796, %v1792
    %v2537 = vpack.c.b16 %v1801, %v1797
    %v2538 = vpack.c.b16 %v1802, %v1798
    %v2539 = vpack.c.b16 %v1803, %v1799
    %v2540 = vpack.c.b16 %v1804, %v1800
    %v2541 = vpack.c.b16 %v1809, %v1805
    %v2542 = vpack.c.b16 %v1810, %v1806
    %v2543 = vpack.c.b16 %v1811, %v1807
    %v2544 = vpack.c.b16 %v1812, %v1808
    %v2545 = vpack.c.b16 %v1817, %v1813
    %v2546 = vpack.c.b16 %v1818, %v1814
    %v2547 = vpack.c.b16 %v1819, %v1815
    %v2548 = vpack.c.b16 %v1820, %v1816
    %v2549 = vpack.c.b16 %v1825, %v1821
    %v2550 = vpack.c.b16 %v1826, %v1822
    %v2551 = vpack.c.b16 %v1827, %v1823
    %v2552 = vpack.c.b16 %v1828, %v1824
    %v2553 = vpack.c.b16 %v1833, %v1829
    %v2554 = vpack.c.b16 %v1834, %v1830
    %v2555 = vpack.c.b16 %v1835, %v1831
    %v2556 = vpack.c.b16 %v1836, %v1832
    %v2557 = vpack.c.b16 %v1841, %v1837
    %v2558 = vpack.c.b16 %v1842, %v1838
    %v2559 = vpack.c.b16 %v1843, %v1839
    %v2560 = vpack.c.b16 %v1844, %v1840
    %v2561 = vpack.c.b16 %v1849, %v1845
    %v2562 = vpack.c.b16 %v1850, %v1846
    %v2563 = vpack.c.b16 %v1851, %v1847
    %v2564 = vpack.c.b16 %v1852, %v1848
    %v2565 = vpack.c.b16 %v1857, %v1853
    %v2566 = vpack.c.b16 %v1858, %v1854
    %v2567 = vpack.c.b16 %v1859, %v1855
    %v2568 = vpack.c.b16 %v1860, %v1856
    %v2569 = vpack.c.b16 %v1865, %v1861
    %v2570 = vpack.c.b16 %v1866, %v1862
    %v2571 = vpack.c.b16 %v1867, %v1863
    %v2572 = vpack.c.b16 %v1868, %v1864
    %v2573 = vpack.c.b16 %v1873, %v1869
    %v2574 = vpack.c.b16 %v1874, %v1870
    %v2575 = vpack.c.b16 %v1875, %v1871
    %v2576 = vpack.c.b16 %v1876, %v1872
    %v2577 = vpack.c.b16 %v1881, %v1877
    %v2578 = vpack.c.b16 %v1882, %v1878
    %v2579 = vpack.c.b16 %v1883, %v1879
    %v2580 = vpack.c.b16 %v1884, %v1880
    %v2581 = vpack.c.b16 %v1889, %v1885
    %v2582 = vpack.c.b16 %v1890, %v1886
    %v2583 = vpack.c.b16 %v1891, %v1887
    %v2584 = vpack.c.b16 %v1892, %v1888
    %v2585 = vpack.c.b16 %v1897, %v1893
    %v2586 = vpack.c.b16 %v1898, %v1894
    %v2587 = vpack.c.b16 %v1899, %v1895
    %v2588 = vpack.c.b16 %v1900, %v1896
    %v2589 = vpack.c.b16 %v1905, %v1901
    %v2590 = vpack.c.b16 %v1906, %v1902
    %v2591 = vpack.c.b16 %v1907, %v1903
    %v2592 = vpack.c.b16 %v1908, %v1904
    %v2593 = vpack.c.b16 %v1913, %v1909
    %v2594 = vpack.c.b16 %v1914, %v1910
    %v2595 = vpack.c.b16 %v1915, %v1911
    %v2596 = vpack.c.b16 %v1916, %v1912
    %v2597 = vpack.c.b16 %v1921, %v1917
    %v2598 = vpack.c.b16 %v1922, %v1918
    %v2599 = vpack.c.b16 %v1923, %v1919
    %v2600 = vpack.c.b16 %v1924, %v1920
    %v2601 = vpack.c.b16 %v1929, %v1925
    %v2602 = vpack.c.b16 %v1930, %v1926
    %v2603 = vpack.c.b16 %v1931, %v1927
    %v2604 = vpack.c.b16 %v1932, %v1928
    %v2605 = vpack.c.b16 %v1937, %v1933
    %v2606 = vpack.c.b16 %v1938, %v1934
    %v2607 = vpack.c.b16 %v1939, %v1935
    %v2608 = vpack.c.b16 %v1940, %v1936
    %v2609 = vpack.c.b16 %v1945, %v1941
    %v2610 = vpack.c.b16 %v1946, %v1942
    %v2611 = vpack.c.b16 %v1947, %v1943
    %v2612 = vpack.c.b16 %v1948, %v1944
    %v2613 = vpack.c.b16 %v1953, %v1949
    %v2614 = vpack.c.b16 %v1954, %v1950
    %v2615 = vpack.c.b16 %v1955, %v1951
    %v2616 = vpack.c.b16 %v1956, %v1952
    %v2617 = vpack.c.b16 %v1961, %v1957
    %v2618 = vpack.c.b16 %v1962, %v1958
    %v2619 = vpack.c.b16 %v1963, %v1959
    %v2620 = vpack.c.b16 %v1964, %v1960
    %v2621 = vpack.c.b16 %v1969, %v1965
    %v2622 = vpack.c.b16 %v1970, %v1966
    %v2623 = vpack.c.b16 %v1971, %v1967
    %v2624 = vpack.c.b16 %v1972, %v1968
    %v2625 = vpack.c.b16 %v1977, %v1973
    %v2626 = vpack.c.b16 %v1978, %v1974
    %v2627 = vpack.c.b16 %v1979, %v1975
    %v2628 = vpack.c.b16 %v1980, %v1976
    %v2629 = vpack.c.b16 %v1985, %v1981
    %v2630 = vpack.c.b16 %v1986, %v1982
    %v2631 = vpack.c.b16 %v1987, %v1983
    %v2632 = vpack.c.b16 %v1988, %v1984
    %v2633 = vpack.c.b16 %v1993, %v1989
    %v2634 = vpack.c.b16 %v1994, %v1990
    %v2635 = vpack.c.b16 %v1995, %v1991
    %v2636 = vpack.c.b16 %v1996, %v1992
    %v2637 = vpack.c.b16 %v2001, %v1997
    %v2638 = vpack.c.b16 %v2002, %v1998
    %v2639 = vpack.c.b16 %v2003, %v1999
    %v2640 = vpack.c.b16 %v2004, %v2000
    %v2641 = vpack.c.b16 %v2009, %v2005
    %v2642 = vpack.c.b16 %v2010, %v2006
    %v2643 = vpack.c.b16 %v2011, %v2007
    %v2644 = vpack.c.b16 %v2012, %v2008
    %v2645 = vpack.c.b16 %v2017, %v2013
    %v2646 = vpack.c.b16 %v2018, %v2014
    %v2647 = vpack.c.b16 %v2019, %v2015
    %v2648 = vpack.c.b16 %v2020, %v2016
    %v2649 = vpack.c.b16 %v2025, %v2021
    %v2650 = vpack.c.b16 %v2026, %v2022
    %v2651 = vpack.c.b16 %v2027, %v2023
    %v2652 = vpack.c.b16 %v2028, %v2024
    %v2653 = vpack.c.b16 %v2033, %v2029
    %v2654 = vpack.c.b16 %v2034, %v2030
    %v2655 = vpack.c.b16 %v2035, %v2031
    %v2656 = vpack.c.b16 %v2036, %v2032
    %v2657 = vpack.c.b16 %v2041, %v2037
    %v2658 = vpack.c.b16 %v2042, %v2038
    %v2659 = vpack.c.b16 %v2043, %v2039
    %v2660 = vpack.c.b16 %v2044, %v2040
    %v2661 = vpack.c.b16 %v2049, %v2045
    %v2662 = vpack.c.b16 %v2050, %v2046
    %v2663 = vpack.c.b16 %v2051, %v2047
    %v2664 = vpack.c.b16 %v2052, %v2048
    %v2665 = vpack.c.b16 %v2057, %v2053
    %v2666 = vpack.c.b16 %v2058, %v2054
    %v2667 = vpack.c.b16 %v2059, %v2055
    %v2668 = vpack.c.b16 %v2060, %v2056
    %v2669 = vpack.c.b16 %v2065, %v2061
    %v2670 = vpack.c.b16 %v2066, %v2062
    %v2671 = vpack.c.b16 %v2067, %v2063
    %v2672 = vpack.c.b16 %v2068, %v2064
    %v2673 = vpack.c.b16 %v2073, %v2069
    %v2674 = vpack.c.b16 %v2074, %v2070
    %v2675 = vpack.c.b16 %v2075, %v2071
    %v2676 = vpack.c.b16 %v2076, %v2072
    %v2677 = vpack.c.b16 %v2081, %v2077
    %v2678 = vpack.c.b16 %v2082, %v2078
    %v2679 = vpack.c.b16 %v2083, %v2079
    %v2680 = vpack.c.b16 %v2084, %v2080
    %v2681 = vpack.c.b16 %v2089, %v2085
    %v2682 = vpack.c.b16 %v2090, %v2086
    %v2683 = vpack.c.b16 %v2091, %v2087
    %v2684 = vpack.c.b16 %v2092, %v2088
    %v2685 = vpack.c.b16 %v2097, %v2093
    %v2686 = vpack.c.b16 %v2098, %v2094
    %v2687 = vpack.c.b16 %v2099, %v2095
    %v2688 = vpack.c.b16 %v2100, %v2096
    %v2689 = vpack.c.b16 %v2105, %v2101
    %v2690 = vpack.c.b16 %v2106, %v2102
    %v2691 = vpack.c.b16 %v2107, %v2103
    %v2692 = vpack.c.b16 %v2108, %v2104
    %v2693 = vpack.c.b16 %v2113, %v2109
    %v2694 = vpack.c.b16 %v2114, %v2110
    %v2695 = vpack.c.b16 %v2115, %v2111
    %v2696 = vpack.c.b16 %v2116, %v2112
    %v2697 = vpack.c.b16 %v2121, %v2117
    %v2698 = vpack.c.b16 %v2122, %v2118
    %v2699 = vpack.c.b16 %v2123, %v2119
    %v2700 = vpack.c.b16 %v2124, %v2120
    %v2701 = vpack.c.b16 %v2129, %v2125
    %v2702 = vpack.c.b16 %v2130, %v2126
    %v2703 = vpack.c.b16 %v2131, %v2127
    %v2704 = vpack.c.b16 %v2132, %v2128
    %v2705 = vpack.c.b16 %v2137, %v2133
    %v2706 = vpack.c.b16 %v2138, %v2134
    %v2707 = vpack.c.b16 %v2139, %v2135
    %v2708 = vpack.c.b16 %v2140, %v2136
    %v2709 = vpack.c.b16 %v2145, %v2141
    %v2710 = vpack.c.b16 %v2146, %v2142
    %v2711 = vpack.c.b16 %v2147, %v2143
    %v2712 = vpack.c.b16 %v2148, %v2144
    %v2713 = vpack.c.b16 %v2153, %v2149
    %v2714 = vpack.c.b16 %v2154, %v2150
    %v2715 = vpack.c.b16 %v2155, %v2151
    %v2716 = vpack.c.b16 %v2156, %v2152
    %v2717 = vpack.c.b16 %v2161, %v2157
    %v2718 = vpack.c.b16 %v2162, %v2158
    %v2719 = vpack.c.b16 %v2163, %v2159
    %v2720 = vpack.c.b16 %v2164, %v2160
    %v2721 = vpack.c.b16 %v2169, %v2165
    %v2722 = vpack.c.b16 %v2170, %v2166
    %v2723 = vpack.c.b16 %v2171, %v2167
    %v2724 = vpack.c.b16 %v2172, %v2168
    %v2725 = vpack.c.b16 %v2177, %v2173
    %v2726 = vpack.c.b16 %v2178, %v2174
    %v2727 = vpack.c.b16 %v2179, %v2175
    %v2728 = vpack.c.b16 %v2180, %v2176
    %v2729 = vpack.c.b16 %v2185, %v2181
    %v2730 = vpack.c.b16 %v2186, %v2182
    %v2731 = vpack.c.b16 %v2187, %v2183
    %v2732 = vpack.c.b16 %v2188, %v2184
    %v2733 = vpack.c.b16 %v2193, %v2189
    %v2734 = vpack.c.b16 %v2194, %v2190
    %v2735 = vpack.c.b16 %v2195, %v2191
    %v2736 = vpack.c.b16 %v2196, %v2192
    %v2737 = vpack.c.b16 %v2201, %v2197
    %v2738 = vpack.c.b16 %v2202, %v2198
    %v2739 = vpack.c.b16 %v2203, %v2199
    %v2740 = vpack.c.b16 %v2204, %v2200
    %v2741 = vpack.c.b16 %v2209, %v2205
    %v2742 = vpack.c.b16 %v2210, %v2206
    %v2743 = vpack.c.b16 %v2211, %v2207
    %v2744 = vpack.c.b16 %v2212, %v2208
    %v2745 = vpack.c.b16 %v2217, %v2213
    %v2746 = vpack.c.b16 %v2218, %v2214
    %v2747 = vpack.c.b16 %v2219, %v2215
    %v2748 = vpack.c.b16 %v2220, %v2216
    %v2749 = vpack.c.b16 %v2225, %v2221
    %v2750 = vpack.c.b16 %v2226, %v2222
    %v2751 = vpack.c.b16 %v2227, %v2223
    %v2752 = vpack.c.b16 %v2228, %v2224
    %v2753 = vpack.c.b16 %v2233, %v2229
    %v2754 = vpack.c.b16 %v2234, %v2230
    %v2755 = vpack.c.b16 %v2235, %v2231
    %v2756 = vpack.c.b16 %v2236, %v2232
    %v2757 = vpack.c.b16 %v2241, %v2237
    %v2758 = vpack.c.b16 %v2242, %v2238
    %v2759 = vpack.c.b16 %v2243, %v2239
    %v2760 = vpack.c.b16 %v2244, %v2240
    %v2761 = vpack.c.b16 %v2249, %v2245
    %v2762 = vpack.c.b16 %v2250, %v2246
    %v2763 = vpack.c.b16 %v2251, %v2247
    %v2764 = vpack.c.b16 %v2252, %v2248
    %3277 = vmatpush.bf16.msra.mxu0 %v2281
    %3278 = vmatpush.bf16.msra.mxu0 %v2277
    %3279 = vmatpush.bf16.msra.mxu0 %v2273
    %3280 = vmatpush.bf16.msra.mxu0 %v2269
    %3281 = vmatpush.bf16.msra.mxu0 %v2265
    %3282 = vmatpush.bf16.msra.mxu0 %v2261
    %3283 = vmatpush.bf16.msra.mxu0 %v2257
    %3284 = vmatpush.bf16.msra.mxu0 %v2253
    %3285 = vmatmul.bf16.gmra.mxu0 %v179
    %v3286 = vpop.f32.mrf.mxu0
    %v3287 = vadd.f32 %v709, %v3286
    %v3288 = vpop.f32.mrf.mxu0
    %3289 = vdwg.mxu0
    %3290 = vmatpush.bf16.msra.mxu0 %v2313
    %3291 = vmatpush.bf16.msra.mxu0 %v2309
    %3292 = vmatpush.bf16.msra.mxu0 %v2305
    %3293 = vmatpush.bf16.msra.mxu0 %v2301
    %3294 = vmatpush.bf16.msra.mxu0 %v2297
    %3295 = vmatpush.bf16.msra.mxu0 %v2293
    %3296 = vmatpush.bf16.msra.mxu0 %v2289
    %3297 = vmatpush.bf16.msra.mxu0 %v2285
    %3298 = vmatmul.bf16.gmra.mxu0 %v180
    %v3299 = vpop.f32.mrf.mxu0
    %v3300 = vadd.f32 %v3287, %v3299
    %v3301 = vpop.f32.mrf.mxu0
    %3302 = vdwg.mxu0
    %3303 = vmatpush.bf16.msra.mxu0 %v2345
    %3304 = vmatpush.bf16.msra.mxu0 %v2341
    %3305 = vmatpush.bf16.msra.mxu0 %v2337
    %3306 = vmatpush.bf16.msra.mxu0 %v2333
    %3307 = vmatpush.bf16.msra.mxu0 %v2329
    %3308 = vmatpush.bf16.msra.mxu0 %v2325
    %3309 = vmatpush.bf16.msra.mxu0 %v2321
    %3310 = vmatpush.bf16.msra.mxu0 %v2317
    %3311 = vmatmul.bf16.gmra.mxu0 %v181
    %v3312 = vpop.f32.mrf.mxu0
    %v3313 = vadd.f32 %v3300, %v3312
    %v3314 = vpop.f32.mrf.mxu0
    %3315 = vdwg.mxu0
    %3316 = vmatpush.bf16.msra.mxu0 %v2377
    %3317 = vmatpush.bf16.msra.mxu0 %v2373
    %3318 = vmatpush.bf16.msra.mxu0 %v2369
    %3319 = vmatpush.bf16.msra.mxu0 %v2365
    %3320 = vmatpush.bf16.msra.mxu0 %v2361
    %3321 = vmatpush.bf16.msra.mxu0 %v2357
    %3322 = vmatpush.bf16.msra.mxu0 %v2353
    %3323 = vmatpush.bf16.msra.mxu0 %v2349
    %3324 = vmatmul.bf16.gmra.mxu0 %v182
    %v3325 = vpop.f32.mrf.mxu0
    %v3326 = vadd.f32 %v3313, %v3325
    %v3327 = vpop.f32.mrf.mxu0
    %3328 = vdwg.mxu0
    %3329 = vmatpush.bf16.msra.mxu0 %v2409
    %3330 = vmatpush.bf16.msra.mxu0 %v2405
    %3331 = vmatpush.bf16.msra.mxu0 %v2401
    %3332 = vmatpush.bf16.msra.mxu0 %v2397
    %3333 = vmatpush.bf16.msra.mxu0 %v2393
    %3334 = vmatpush.bf16.msra.mxu0 %v2389
    %3335 = vmatpush.bf16.msra.mxu0 %v2385
    %3336 = vmatpush.bf16.msra.mxu0 %v2381
    %3337 = vmatmul.bf16.gmra.mxu0 %v183
    %v3338 = vpop.f32.mrf.mxu0
    %v3339 = vadd.f32 %v3326, %v3338
    %v3340 = vpop.f32.mrf.mxu0
    %3341 = vdwg.mxu0
    %3342 = vmatpush.bf16.msra.mxu0 %v2441
    %3343 = vmatpush.bf16.msra.mxu0 %v2437
    %3344 = vmatpush.bf16.msra.mxu0 %v2433
    %3345 = vmatpush.bf16.msra.mxu0 %v2429
    %3346 = vmatpush.bf16.msra.mxu0 %v2425
    %3347 = vmatpush.bf16.msra.mxu0 %v2421
    %3348 = vmatpush.bf16.msra.mxu0 %v2417
    %3349 = vmatpush.bf16.msra.mxu0 %v2413
    %3350 = vmatmul.bf16.gmra.mxu0 %v184
    %v3351 = vpop.f32.mrf.mxu0
    %v3352 = vadd.f32 %v3339, %v3351
    %v3353 = vpop.f32.mrf.mxu0
    %3354 = vdwg.mxu0
    %3355 = vmatpush.bf16.msra.mxu0 %v2473
    %3356 = vmatpush.bf16.msra.mxu0 %v2469
    %3357 = vmatpush.bf16.msra.mxu0 %v2465
    %3358 = vmatpush.bf16.msra.mxu0 %v2461
    %3359 = vmatpush.bf16.msra.mxu0 %v2457
    %3360 = vmatpush.bf16.msra.mxu0 %v2453
    %3361 = vmatpush.bf16.msra.mxu0 %v2449
    %3362 = vmatpush.bf16.msra.mxu0 %v2445
    %3363 = vmatmul.bf16.gmra.mxu0 %v185
    %v3364 = vpop.f32.mrf.mxu0
    %v3365 = vadd.f32 %v3352, %v3364
    %v3366 = vpop.f32.mrf.mxu0
    %3367 = vdwg.mxu0
    %3368 = vmatpush.bf16.msra.mxu0 %v2505
    %3369 = vmatpush.bf16.msra.mxu0 %v2501
    %3370 = vmatpush.bf16.msra.mxu0 %v2497
    %3371 = vmatpush.bf16.msra.mxu0 %v2493
    %3372 = vmatpush.bf16.msra.mxu0 %v2489
    %3373 = vmatpush.bf16.msra.mxu0 %v2485
    %3374 = vmatpush.bf16.msra.mxu0 %v2481
    %3375 = vmatpush.bf16.msra.mxu0 %v2477
    %3376 = vmatmul.bf16.gmra.mxu0 %v186
    %v3377 = vpop.f32.mrf.mxu0
    %v3378 = vadd.f32 %v3365, %v3377
    %v3379 = vpop.f32.mrf.mxu0
    %3380 = vdwg.mxu0
    %3381 = vmatpush.bf16.msra.mxu0 %v2537
    %3382 = vmatpush.bf16.msra.mxu0 %v2533
    %3383 = vmatpush.bf16.msra.mxu0 %v2529
    %3384 = vmatpush.bf16.msra.mxu0 %v2525
    %3385 = vmatpush.bf16.msra.mxu0 %v2521
    %3386 = vmatpush.bf16.msra.mxu0 %v2517
    %3387 = vmatpush.bf16.msra.mxu0 %v2513
    %3388 = vmatpush.bf16.msra.mxu0 %v2509
    %3389 = vmatmul.bf16.gmra.mxu0 %v187
    %v3390 = vpop.f32.mrf.mxu0
    %v3391 = vadd.f32 %v3378, %v3390
    %v3392 = vpop.f32.mrf.mxu0
    %3393 = vdwg.mxu0
    %3394 = vmatpush.bf16.msra.mxu0 %v2569
    %3395 = vmatpush.bf16.msra.mxu0 %v2565
    %3396 = vmatpush.bf16.msra.mxu0 %v2561
    %3397 = vmatpush.bf16.msra.mxu0 %v2557
    %3398 = vmatpush.bf16.msra.mxu0 %v2553
    %3399 = vmatpush.bf16.msra.mxu0 %v2549
    %3400 = vmatpush.bf16.msra.mxu0 %v2545
    %3401 = vmatpush.bf16.msra.mxu0 %v2541
    %3402 = vmatmul.bf16.gmra.mxu0 %v188
    %v3403 = vpop.f32.mrf.mxu0
    %v3404 = vadd.f32 %v3391, %v3403
    %v3405 = vpop.f32.mrf.mxu0
    %3406 = vdwg.mxu0
    %3407 = vmatpush.bf16.msra.mxu0 %v2601
    %3408 = vmatpush.bf16.msra.mxu0 %v2597
    %3409 = vmatpush.bf16.msra.mxu0 %v2593
    %3410 = vmatpush.bf16.msra.mxu0 %v2589
    %3411 = vmatpush.bf16.msra.mxu0 %v2585
    %3412 = vmatpush.bf16.msra.mxu0 %v2581
    %3413 = vmatpush.bf16.msra.mxu0 %v2577
    %3414 = vmatpush.bf16.msra.mxu0 %v2573
    %3415 = vmatmul.bf16.gmra.mxu0 %v189
    %v3416 = vpop.f32.mrf.mxu0
    %v3417 = vadd.f32 %v3404, %v3416
    %v3418 = vpop.f32.mrf.mxu0
    %3419 = vdwg.mxu0
    %3420 = vmatpush.bf16.msra.mxu0 %v2633
    %3421 = vmatpush.bf16.msra.mxu0 %v2629
    %3422 = vmatpush.bf16.msra.mxu0 %v2625
    %3423 = vmatpush.bf16.msra.mxu0 %v2621
    %3424 = vmatpush.bf16.msra.mxu0 %v2617
    %3425 = vmatpush.bf16.msra.mxu0 %v2613
    %3426 = vmatpush.bf16.msra.mxu0 %v2609
    %3427 = vmatpush.bf16.msra.mxu0 %v2605
    %3428 = vmatmul.bf16.gmra.mxu0 %v190
    %v3429 = vpop.f32.mrf.mxu0
    %v3430 = vadd.f32 %v3417, %v3429
    %v3431 = vpop.f32.mrf.mxu0
    %3432 = vdwg.mxu0
    %3433 = vmatpush.bf16.msra.mxu0 %v2665
    %3434 = vmatpush.bf16.msra.mxu0 %v2661
    %3435 = vmatpush.bf16.msra.mxu0 %v2657
    %3436 = vmatpush.bf16.msra.mxu0 %v2653
    %3437 = vmatpush.bf16.msra.mxu0 %v2649
    %3438 = vmatpush.bf16.msra.mxu0 %v2645
    %3439 = vmatpush.bf16.msra.mxu0 %v2641
    %3440 = vmatpush.bf16.msra.mxu0 %v2637
    %3441 = vmatmul.bf16.gmra.mxu0 %v191
    %v3442 = vpop.f32.mrf.mxu0
    %v3443 = vadd.f32 %v3430, %v3442
    %v3444 = vpop.f32.mrf.mxu0
    %3445 = vdwg.mxu0
    %3446 = vmatpush.bf16.msra.mxu0 %v2697
    %3447 = vmatpush.bf16.msra.mxu0 %v2693
    %3448 = vmatpush.bf16.msra.mxu0 %v2689
    %3449 = vmatpush.bf16.msra.mxu0 %v2685
    %3450 = vmatpush.bf16.msra.mxu0 %v2681
    %3451 = vmatpush.bf16.msra.mxu0 %v2677
    %3452 = vmatpush.bf16.msra.mxu0 %v2673
    %3453 = vmatpush.bf16.msra.mxu0 %v2669
    %3454 = vmatmul.bf16.gmra.mxu0 %v192
    %v3455 = vpop.f32.mrf.mxu0
    %v3456 = vadd.f32 %v3443, %v3455
    %v3457 = vpop.f32.mrf.mxu0
    %3458 = vdwg.mxu0
    %3459 = vmatpush.bf16.msra.mxu0 %v2729
    %3460 = vmatpush.bf16.msra.mxu0 %v2725
    %3461 = vmatpush.bf16.msra.mxu0 %v2721
    %3462 = vmatpush.bf16.msra.mxu0 %v2717
    %3463 = vmatpush.bf16.msra.mxu0 %v2713
    %3464 = vmatpush.bf16.msra.mxu0 %v2709
    %3465 = vmatpush.bf16.msra.mxu0 %v2705
    %3466 = vmatpush.bf16.msra.mxu0 %v2701
    %3467 = vmatmul.bf16.gmra.mxu0 %v193
    %v3468 = vpop.f32.mrf.mxu0
    %v3469 = vadd.f32 %v3456, %v3468
    %v3470 = vpop.f32.mrf.mxu0
    %3471 = vdwg.mxu0
    %3472 = vmatpush.bf16.msra.mxu0 %v2761
    %3473 = vmatpush.bf16.msra.mxu0 %v2757
    %3474 = vmatpush.bf16.msra.mxu0 %v2753
    %3475 = vmatpush.bf16.msra.mxu0 %v2749
    %3476 = vmatpush.bf16.msra.mxu0 %v2745
    %3477 = vmatpush.bf16.msra.mxu0 %v2741
    %3478 = vmatpush.bf16.msra.mxu0 %v2737
    %3479 = vmatpush.bf16.msra.mxu0 %v2733
    %3480 = vmatmul.bf16.gmra.mxu0 %v194
    %v3481 = vpop.f32.mrf.mxu0
    %v3482 = vadd.f32 %v3469, %v3481
    %v3483 = vpop.f32.mrf.mxu0
    %3484 = vdwg.mxu0
    %3485 = vmatpush.bf16.msra.mxu0 %v2282
    %3486 = vmatpush.bf16.msra.mxu0 %v2278
    %3487 = vmatpush.bf16.msra.mxu0 %v2274
    %3488 = vmatpush.bf16.msra.mxu0 %v2270
    %3489 = vmatpush.bf16.msra.mxu0 %v2266
    %3490 = vmatpush.bf16.msra.mxu0 %v2262
    %3491 = vmatpush.bf16.msra.mxu0 %v2258
    %3492 = vmatpush.bf16.msra.mxu0 %v2254
    %3493 = vmatmul.bf16.gmra.mxu0 %v179
    %v3494 = vpop.f32.mrf.mxu0
    %v3495 = vadd.f32 %v710, %v3494
    %v3496 = vpop.f32.mrf.mxu0
    %3497 = vdwg.mxu0
    %3498 = vmatpush.bf16.msra.mxu0 %v2314
    %3499 = vmatpush.bf16.msra.mxu0 %v2310
    %3500 = vmatpush.bf16.msra.mxu0 %v2306
    %3501 = vmatpush.bf16.msra.mxu0 %v2302
    %3502 = vmatpush.bf16.msra.mxu0 %v2298
    %3503 = vmatpush.bf16.msra.mxu0 %v2294
    %3504 = vmatpush.bf16.msra.mxu0 %v2290
    %3505 = vmatpush.bf16.msra.mxu0 %v2286
    %3506 = vmatmul.bf16.gmra.mxu0 %v180
    %v3507 = vpop.f32.mrf.mxu0
    %v3508 = vadd.f32 %v3495, %v3507
    %v3509 = vpop.f32.mrf.mxu0
    %3510 = vdwg.mxu0
    %3511 = vmatpush.bf16.msra.mxu0 %v2346
    %3512 = vmatpush.bf16.msra.mxu0 %v2342
    %3513 = vmatpush.bf16.msra.mxu0 %v2338
    %3514 = vmatpush.bf16.msra.mxu0 %v2334
    %3515 = vmatpush.bf16.msra.mxu0 %v2330
    %3516 = vmatpush.bf16.msra.mxu0 %v2326
    %3517 = vmatpush.bf16.msra.mxu0 %v2322
    %3518 = vmatpush.bf16.msra.mxu0 %v2318
    %3519 = vmatmul.bf16.gmra.mxu0 %v181
    %v3520 = vpop.f32.mrf.mxu0
    %v3521 = vadd.f32 %v3508, %v3520
    %v3522 = vpop.f32.mrf.mxu0
    %3523 = vdwg.mxu0
    %3524 = vmatpush.bf16.msra.mxu0 %v2378
    %3525 = vmatpush.bf16.msra.mxu0 %v2374
    %3526 = vmatpush.bf16.msra.mxu0 %v2370
    %3527 = vmatpush.bf16.msra.mxu0 %v2366
    %3528 = vmatpush.bf16.msra.mxu0 %v2362
    %3529 = vmatpush.bf16.msra.mxu0 %v2358
    %3530 = vmatpush.bf16.msra.mxu0 %v2354
    %3531 = vmatpush.bf16.msra.mxu0 %v2350
    %3532 = vmatmul.bf16.gmra.mxu0 %v182
    %v3533 = vpop.f32.mrf.mxu0
    %v3534 = vadd.f32 %v3521, %v3533
    %v3535 = vpop.f32.mrf.mxu0
    %3536 = vdwg.mxu0
    %3537 = vmatpush.bf16.msra.mxu0 %v2410
    %3538 = vmatpush.bf16.msra.mxu0 %v2406
    %3539 = vmatpush.bf16.msra.mxu0 %v2402
    %3540 = vmatpush.bf16.msra.mxu0 %v2398
    %3541 = vmatpush.bf16.msra.mxu0 %v2394
    %3542 = vmatpush.bf16.msra.mxu0 %v2390
    %3543 = vmatpush.bf16.msra.mxu0 %v2386
    %3544 = vmatpush.bf16.msra.mxu0 %v2382
    %3545 = vmatmul.bf16.gmra.mxu0 %v183
    %v3546 = vpop.f32.mrf.mxu0
    %v3547 = vadd.f32 %v3534, %v3546
    %v3548 = vpop.f32.mrf.mxu0
    %3549 = vdwg.mxu0
    %3550 = vmatpush.bf16.msra.mxu0 %v2442
    %3551 = vmatpush.bf16.msra.mxu0 %v2438
    %3552 = vmatpush.bf16.msra.mxu0 %v2434
    %3553 = vmatpush.bf16.msra.mxu0 %v2430
    %3554 = vmatpush.bf16.msra.mxu0 %v2426
    %3555 = vmatpush.bf16.msra.mxu0 %v2422
    %3556 = vmatpush.bf16.msra.mxu0 %v2418
    %3557 = vmatpush.bf16.msra.mxu0 %v2414
    %3558 = vmatmul.bf16.gmra.mxu0 %v184
    %v3559 = vpop.f32.mrf.mxu0
    %v3560 = vadd.f32 %v3547, %v3559
    %v3561 = vpop.f32.mrf.mxu0
    %3562 = vdwg.mxu0
    %3563 = vmatpush.bf16.msra.mxu0 %v2474
    %3564 = vmatpush.bf16.msra.mxu0 %v2470
    %3565 = vmatpush.bf16.msra.mxu0 %v2466
    %3566 = vmatpush.bf16.msra.mxu0 %v2462
    %3567 = vmatpush.bf16.msra.mxu0 %v2458
    %3568 = vmatpush.bf16.msra.mxu0 %v2454
    %3569 = vmatpush.bf16.msra.mxu0 %v2450
    %3570 = vmatpush.bf16.msra.mxu0 %v2446
    %3571 = vmatmul.bf16.gmra.mxu0 %v185
    %v3572 = vpop.f32.mrf.mxu0
    %v3573 = vadd.f32 %v3560, %v3572
    %v3574 = vpop.f32.mrf.mxu0
    %3575 = vdwg.mxu0
    %3576 = vmatpush.bf16.msra.mxu0 %v2506
    %3577 = vmatpush.bf16.msra.mxu0 %v2502
    %3578 = vmatpush.bf16.msra.mxu0 %v2498
    %3579 = vmatpush.bf16.msra.mxu0 %v2494
    %3580 = vmatpush.bf16.msra.mxu0 %v2490
    %3581 = vmatpush.bf16.msra.mxu0 %v2486
    %3582 = vmatpush.bf16.msra.mxu0 %v2482
    %3583 = vmatpush.bf16.msra.mxu0 %v2478
    %3584 = vmatmul.bf16.gmra.mxu0 %v186
    %v3585 = vpop.f32.mrf.mxu0
    %v3586 = vadd.f32 %v3573, %v3585
    %v3587 = vpop.f32.mrf.mxu0
    %3588 = vdwg.mxu0
    %3589 = vmatpush.bf16.msra.mxu0 %v2538
    %3590 = vmatpush.bf16.msra.mxu0 %v2534
    %3591 = vmatpush.bf16.msra.mxu0 %v2530
    %3592 = vmatpush.bf16.msra.mxu0 %v2526
    %3593 = vmatpush.bf16.msra.mxu0 %v2522
    %3594 = vmatpush.bf16.msra.mxu0 %v2518
    %3595 = vmatpush.bf16.msra.mxu0 %v2514
    %3596 = vmatpush.bf16.msra.mxu0 %v2510
    %3597 = vmatmul.bf16.gmra.mxu0 %v187
    %v3598 = vpop.f32.mrf.mxu0
    %v3599 = vadd.f32 %v3586, %v3598
    %v3600 = vpop.f32.mrf.mxu0
    %3601 = vdwg.mxu0
    %3602 = vmatpush.bf16.msra.mxu0 %v2570
    %3603 = vmatpush.bf16.msra.mxu0 %v2566
    %3604 = vmatpush.bf16.msra.mxu0 %v2562
    %3605 = vmatpush.bf16.msra.mxu0 %v2558
    %3606 = vmatpush.bf16.msra.mxu0 %v2554
    %3607 = vmatpush.bf16.msra.mxu0 %v2550
    %3608 = vmatpush.bf16.msra.mxu0 %v2546
    %3609 = vmatpush.bf16.msra.mxu0 %v2542
    %3610 = vmatmul.bf16.gmra.mxu0 %v188
    %v3611 = vpop.f32.mrf.mxu0
    %v3612 = vadd.f32 %v3599, %v3611
    %v3613 = vpop.f32.mrf.mxu0
    %3614 = vdwg.mxu0
    %3615 = vmatpush.bf16.msra.mxu0 %v2602
    %3616 = vmatpush.bf16.msra.mxu0 %v2598
    %3617 = vmatpush.bf16.msra.mxu0 %v2594
    %3618 = vmatpush.bf16.msra.mxu0 %v2590
    %3619 = vmatpush.bf16.msra.mxu0 %v2586
    %3620 = vmatpush.bf16.msra.mxu0 %v2582
    %3621 = vmatpush.bf16.msra.mxu0 %v2578
    %3622 = vmatpush.bf16.msra.mxu0 %v2574
    %3623 = vmatmul.bf16.gmra.mxu0 %v189
    %v3624 = vpop.f32.mrf.mxu0
    %v3625 = vadd.f32 %v3612, %v3624
    %v3626 = vpop.f32.mrf.mxu0
    %3627 = vdwg.mxu0
    %3628 = vmatpush.bf16.msra.mxu0 %v2634
    %3629 = vmatpush.bf16.msra.mxu0 %v2630
    %3630 = vmatpush.bf16.msra.mxu0 %v2626
    %3631 = vmatpush.bf16.msra.mxu0 %v2622
    %3632 = vmatpush.bf16.msra.mxu0 %v2618
    %3633 = vmatpush.bf16.msra.mxu0 %v2614
    %3634 = vmatpush.bf16.msra.mxu0 %v2610
    %3635 = vmatpush.bf16.msra.mxu0 %v2606
    %3636 = vmatmul.bf16.gmra.mxu0 %v190
    %v3637 = vpop.f32.mrf.mxu0
    %v3638 = vadd.f32 %v3625, %v3637
    %v3639 = vpop.f32.mrf.mxu0
    %3640 = vdwg.mxu0
    %3641 = vmatpush.bf16.msra.mxu0 %v2666
    %3642 = vmatpush.bf16.msra.mxu0 %v2662
    %3643 = vmatpush.bf16.msra.mxu0 %v2658
    %3644 = vmatpush.bf16.msra.mxu0 %v2654
    %3645 = vmatpush.bf16.msra.mxu0 %v2650
    %3646 = vmatpush.bf16.msra.mxu0 %v2646
    %3647 = vmatpush.bf16.msra.mxu0 %v2642
    %3648 = vmatpush.bf16.msra.mxu0 %v2638
    %3649 = vmatmul.bf16.gmra.mxu0 %v191
    %v3650 = vpop.f32.mrf.mxu0
    %v3651 = vadd.f32 %v3638, %v3650
    %v3652 = vpop.f32.mrf.mxu0
    %3653 = vdwg.mxu0
    %3654 = vmatpush.bf16.msra.mxu0 %v2698
    %3655 = vmatpush.bf16.msra.mxu0 %v2694
    %3656 = vmatpush.bf16.msra.mxu0 %v2690
    %3657 = vmatpush.bf16.msra.mxu0 %v2686
    %3658 = vmatpush.bf16.msra.mxu0 %v2682
    %3659 = vmatpush.bf16.msra.mxu0 %v2678
    %3660 = vmatpush.bf16.msra.mxu0 %v2674
    %3661 = vmatpush.bf16.msra.mxu0 %v2670
    %3662 = vmatmul.bf16.gmra.mxu0 %v192
    %v3663 = vpop.f32.mrf.mxu0
    %v3664 = vadd.f32 %v3651, %v3663
    %v3665 = vpop.f32.mrf.mxu0
    %3666 = vdwg.mxu0
    %3667 = vmatpush.bf16.msra.mxu0 %v2730
    %3668 = vmatpush.bf16.msra.mxu0 %v2726
    %3669 = vmatpush.bf16.msra.mxu0 %v2722
    %3670 = vmatpush.bf16.msra.mxu0 %v2718
    %3671 = vmatpush.bf16.msra.mxu0 %v2714
    %3672 = vmatpush.bf16.msra.mxu0 %v2710
    %3673 = vmatpush.bf16.msra.mxu0 %v2706
    %3674 = vmatpush.bf16.msra.mxu0 %v2702
    %3675 = vmatmul.bf16.gmra.mxu0 %v193
    %v3676 = vpop.f32.mrf.mxu0
    %v3677 = vadd.f32 %v3664, %v3676
    %v3678 = vpop.f32.mrf.mxu0
    %3679 = vdwg.mxu0
    %3680 = vmatpush.bf16.msra.mxu0 %v2762
    %3681 = vmatpush.bf16.msra.mxu0 %v2758
    %3682 = vmatpush.bf16.msra.mxu0 %v2754
    %3683 = vmatpush.bf16.msra.mxu0 %v2750
    %3684 = vmatpush.bf16.msra.mxu0 %v2746
    %3685 = vmatpush.bf16.msra.mxu0 %v2742
    %3686 = vmatpush.bf16.msra.mxu0 %v2738
    %3687 = vmatpush.bf16.msra.mxu0 %v2734
    %3688 = vmatmul.bf16.gmra.mxu0 %v194
    %v3689 = vpop.f32.mrf.mxu0
    %v3690 = vadd.f32 %v3677, %v3689
    %v3691 = vpop.f32.mrf.mxu0
    %3692 = vdwg.mxu0
    %3693 = vmatpush.bf16.msra.mxu0 %v2283
    %3694 = vmatpush.bf16.msra.mxu0 %v2279
    %3695 = vmatpush.bf16.msra.mxu0 %v2275
    %3696 = vmatpush.bf16.msra.mxu0 %v2271
    %3697 = vmatpush.bf16.msra.mxu0 %v2267
    %3698 = vmatpush.bf16.msra.mxu0 %v2263
    %3699 = vmatpush.bf16.msra.mxu0 %v2259
    %3700 = vmatpush.bf16.msra.mxu0 %v2255
    %3701 = vmatmul.bf16.gmra.mxu0 %v179
    %v3702 = vpop.f32.mrf.mxu0
    %v3703 = vadd.f32 %v711, %v3702
    %v3704 = vpop.f32.mrf.mxu0
    %3705 = vdwg.mxu0
    %3706 = vmatpush.bf16.msra.mxu0 %v2315
    %3707 = vmatpush.bf16.msra.mxu0 %v2311
    %3708 = vmatpush.bf16.msra.mxu0 %v2307
    %3709 = vmatpush.bf16.msra.mxu0 %v2303
    %3710 = vmatpush.bf16.msra.mxu0 %v2299
    %3711 = vmatpush.bf16.msra.mxu0 %v2295
    %3712 = vmatpush.bf16.msra.mxu0 %v2291
    %3713 = vmatpush.bf16.msra.mxu0 %v2287
    %3714 = vmatmul.bf16.gmra.mxu0 %v180
    %v3715 = vpop.f32.mrf.mxu0
    %v3716 = vadd.f32 %v3703, %v3715
    %v3717 = vpop.f32.mrf.mxu0
    %3718 = vdwg.mxu0
    %3719 = vmatpush.bf16.msra.mxu0 %v2347
    %3720 = vmatpush.bf16.msra.mxu0 %v2343
    %3721 = vmatpush.bf16.msra.mxu0 %v2339
    %3722 = vmatpush.bf16.msra.mxu0 %v2335
    %3723 = vmatpush.bf16.msra.mxu0 %v2331
    %3724 = vmatpush.bf16.msra.mxu0 %v2327
    %3725 = vmatpush.bf16.msra.mxu0 %v2323
    %3726 = vmatpush.bf16.msra.mxu0 %v2319
    %3727 = vmatmul.bf16.gmra.mxu0 %v181
    %v3728 = vpop.f32.mrf.mxu0
    %v3729 = vadd.f32 %v3716, %v3728
    %v3730 = vpop.f32.mrf.mxu0
    %3731 = vdwg.mxu0
    %3732 = vmatpush.bf16.msra.mxu0 %v2379
    %3733 = vmatpush.bf16.msra.mxu0 %v2375
    %3734 = vmatpush.bf16.msra.mxu0 %v2371
    %3735 = vmatpush.bf16.msra.mxu0 %v2367
    %3736 = vmatpush.bf16.msra.mxu0 %v2363
    %3737 = vmatpush.bf16.msra.mxu0 %v2359
    %3738 = vmatpush.bf16.msra.mxu0 %v2355
    %3739 = vmatpush.bf16.msra.mxu0 %v2351
    %3740 = vmatmul.bf16.gmra.mxu0 %v182
    %v3741 = vpop.f32.mrf.mxu0
    %v3742 = vadd.f32 %v3729, %v3741
    %v3743 = vpop.f32.mrf.mxu0
    %3744 = vdwg.mxu0
    %3745 = vmatpush.bf16.msra.mxu0 %v2411
    %3746 = vmatpush.bf16.msra.mxu0 %v2407
    %3747 = vmatpush.bf16.msra.mxu0 %v2403
    %3748 = vmatpush.bf16.msra.mxu0 %v2399
    %3749 = vmatpush.bf16.msra.mxu0 %v2395
    %3750 = vmatpush.bf16.msra.mxu0 %v2391
    %3751 = vmatpush.bf16.msra.mxu0 %v2387
    %3752 = vmatpush.bf16.msra.mxu0 %v2383
    %3753 = vmatmul.bf16.gmra.mxu0 %v183
    %v3754 = vpop.f32.mrf.mxu0
    %v3755 = vadd.f32 %v3742, %v3754
    %v3756 = vpop.f32.mrf.mxu0
    %3757 = vdwg.mxu0
    %3758 = vmatpush.bf16.msra.mxu0 %v2443
    %3759 = vmatpush.bf16.msra.mxu0 %v2439
    %3760 = vmatpush.bf16.msra.mxu0 %v2435
    %3761 = vmatpush.bf16.msra.mxu0 %v2431
    %3762 = vmatpush.bf16.msra.mxu0 %v2427
    %3763 = vmatpush.bf16.msra.mxu0 %v2423
    %3764 = vmatpush.bf16.msra.mxu0 %v2419
    %3765 = vmatpush.bf16.msra.mxu0 %v2415
    %3766 = vmatmul.bf16.gmra.mxu0 %v184
    %v3767 = vpop.f32.mrf.mxu0
    %v3768 = vadd.f32 %v3755, %v3767
    %v3769 = vpop.f32.mrf.mxu0
    %3770 = vdwg.mxu0
    %3771 = vmatpush.bf16.msra.mxu0 %v2475
    %3772 = vmatpush.bf16.msra.mxu0 %v2471
    %3773 = vmatpush.bf16.msra.mxu0 %v2467
    %3774 = vmatpush.bf16.msra.mxu0 %v2463
    %3775 = vmatpush.bf16.msra.mxu0 %v2459
    %3776 = vmatpush.bf16.msra.mxu0 %v2455
    %3777 = vmatpush.bf16.msra.mxu0 %v2451
    %3778 = vmatpush.bf16.msra.mxu0 %v2447
    %3779 = vmatmul.bf16.gmra.mxu0 %v185
    %v3780 = vpop.f32.mrf.mxu0
    %v3781 = vadd.f32 %v3768, %v3780
    %v3782 = vpop.f32.mrf.mxu0
    %3783 = vdwg.mxu0
    %3784 = vmatpush.bf16.msra.mxu0 %v2507
    %3785 = vmatpush.bf16.msra.mxu0 %v2503
    %3786 = vmatpush.bf16.msra.mxu0 %v2499
    %3787 = vmatpush.bf16.msra.mxu0 %v2495
    %3788 = vmatpush.bf16.msra.mxu0 %v2491
    %3789 = vmatpush.bf16.msra.mxu0 %v2487
    %3790 = vmatpush.bf16.msra.mxu0 %v2483
    %3791 = vmatpush.bf16.msra.mxu0 %v2479
    %3792 = vmatmul.bf16.gmra.mxu0 %v186
    %v3793 = vpop.f32.mrf.mxu0
    %v3794 = vadd.f32 %v3781, %v3793
    %v3795 = vpop.f32.mrf.mxu0
    %3796 = vdwg.mxu0
    %3797 = vmatpush.bf16.msra.mxu0 %v2539
    %3798 = vmatpush.bf16.msra.mxu0 %v2535
    %3799 = vmatpush.bf16.msra.mxu0 %v2531
    %3800 = vmatpush.bf16.msra.mxu0 %v2527
    %3801 = vmatpush.bf16.msra.mxu0 %v2523
    %3802 = vmatpush.bf16.msra.mxu0 %v2519
    %3803 = vmatpush.bf16.msra.mxu0 %v2515
    %3804 = vmatpush.bf16.msra.mxu0 %v2511
    %3805 = vmatmul.bf16.gmra.mxu0 %v187
    %v3806 = vpop.f32.mrf.mxu0
    %v3807 = vadd.f32 %v3794, %v3806
    %v3808 = vpop.f32.mrf.mxu0
    %3809 = vdwg.mxu0
    %3810 = vmatpush.bf16.msra.mxu0 %v2571
    %3811 = vmatpush.bf16.msra.mxu0 %v2567
    %3812 = vmatpush.bf16.msra.mxu0 %v2563
    %3813 = vmatpush.bf16.msra.mxu0 %v2559
    %3814 = vmatpush.bf16.msra.mxu0 %v2555
    %3815 = vmatpush.bf16.msra.mxu0 %v2551
    %3816 = vmatpush.bf16.msra.mxu0 %v2547
    %3817 = vmatpush.bf16.msra.mxu0 %v2543
    %3818 = vmatmul.bf16.gmra.mxu0 %v188
    %v3819 = vpop.f32.mrf.mxu0
    %v3820 = vadd.f32 %v3807, %v3819
    %v3821 = vpop.f32.mrf.mxu0
    %3822 = vdwg.mxu0
    %3823 = vmatpush.bf16.msra.mxu0 %v2603
    %3824 = vmatpush.bf16.msra.mxu0 %v2599
    %3825 = vmatpush.bf16.msra.mxu0 %v2595
    %3826 = vmatpush.bf16.msra.mxu0 %v2591
    %3827 = vmatpush.bf16.msra.mxu0 %v2587
    %3828 = vmatpush.bf16.msra.mxu0 %v2583
    %3829 = vmatpush.bf16.msra.mxu0 %v2579
    %3830 = vmatpush.bf16.msra.mxu0 %v2575
    %3831 = vmatmul.bf16.gmra.mxu0 %v189
    %v3832 = vpop.f32.mrf.mxu0
    %v3833 = vadd.f32 %v3820, %v3832
    %v3834 = vpop.f32.mrf.mxu0
    %3835 = vdwg.mxu0
    %3836 = vmatpush.bf16.msra.mxu0 %v2635
    %3837 = vmatpush.bf16.msra.mxu0 %v2631
    %3838 = vmatpush.bf16.msra.mxu0 %v2627
    %3839 = vmatpush.bf16.msra.mxu0 %v2623
    %3840 = vmatpush.bf16.msra.mxu0 %v2619
    %3841 = vmatpush.bf16.msra.mxu0 %v2615
    %3842 = vmatpush.bf16.msra.mxu0 %v2611
    %3843 = vmatpush.bf16.msra.mxu0 %v2607
    %3844 = vmatmul.bf16.gmra.mxu0 %v190
    %v3845 = vpop.f32.mrf.mxu0
    %v3846 = vadd.f32 %v3833, %v3845
    %v3847 = vpop.f32.mrf.mxu0
    %3848 = vdwg.mxu0
    %3849 = vmatpush.bf16.msra.mxu0 %v2667
    %3850 = vmatpush.bf16.msra.mxu0 %v2663
    %3851 = vmatpush.bf16.msra.mxu0 %v2659
    %3852 = vmatpush.bf16.msra.mxu0 %v2655
    %3853 = vmatpush.bf16.msra.mxu0 %v2651
    %3854 = vmatpush.bf16.msra.mxu0 %v2647
    %3855 = vmatpush.bf16.msra.mxu0 %v2643
    %3856 = vmatpush.bf16.msra.mxu0 %v2639
    %3857 = vmatmul.bf16.gmra.mxu0 %v191
    %v3858 = vpop.f32.mrf.mxu0
    %v3859 = vadd.f32 %v3846, %v3858
    %v3860 = vpop.f32.mrf.mxu0
    %3861 = vdwg.mxu0
    %3862 = vmatpush.bf16.msra.mxu0 %v2699
    %3863 = vmatpush.bf16.msra.mxu0 %v2695
    %3864 = vmatpush.bf16.msra.mxu0 %v2691
    %3865 = vmatpush.bf16.msra.mxu0 %v2687
    %3866 = vmatpush.bf16.msra.mxu0 %v2683
    %3867 = vmatpush.bf16.msra.mxu0 %v2679
    %3868 = vmatpush.bf16.msra.mxu0 %v2675
    %3869 = vmatpush.bf16.msra.mxu0 %v2671
    %3870 = vmatmul.bf16.gmra.mxu0 %v192
    %v3871 = vpop.f32.mrf.mxu0
    %v3872 = vadd.f32 %v3859, %v3871
    %v3873 = vpop.f32.mrf.mxu0
    %3874 = vdwg.mxu0
    %3875 = vmatpush.bf16.msra.mxu0 %v2731
    %3876 = vmatpush.bf16.msra.mxu0 %v2727
    %3877 = vmatpush.bf16.msra.mxu0 %v2723
    %3878 = vmatpush.bf16.msra.mxu0 %v2719
    %3879 = vmatpush.bf16.msra.mxu0 %v2715
    %3880 = vmatpush.bf16.msra.mxu0 %v2711
    %3881 = vmatpush.bf16.msra.mxu0 %v2707
    %3882 = vmatpush.bf16.msra.mxu0 %v2703
    %3883 = vmatmul.bf16.gmra.mxu0 %v193
    %v3884 = vpop.f32.mrf.mxu0
    %v3885 = vadd.f32 %v3872, %v3884
    %v3886 = vpop.f32.mrf.mxu0
    %3887 = vdwg.mxu0
    %3888 = vmatpush.bf16.msra.mxu0 %v2763
    %3889 = vmatpush.bf16.msra.mxu0 %v2759
    %3890 = vmatpush.bf16.msra.mxu0 %v2755
    %3891 = vmatpush.bf16.msra.mxu0 %v2751
    %3892 = vmatpush.bf16.msra.mxu0 %v2747
    %3893 = vmatpush.bf16.msra.mxu0 %v2743
    %3894 = vmatpush.bf16.msra.mxu0 %v2739
    %3895 = vmatpush.bf16.msra.mxu0 %v2735
    %3896 = vmatmul.bf16.gmra.mxu0 %v194
    %v3897 = vpop.f32.mrf.mxu0
    %v3898 = vadd.f32 %v3885, %v3897
    %v3899 = vpop.f32.mrf.mxu0
    %3900 = vdwg.mxu0
    %3901 = vmatpush.bf16.msra.mxu0 %v2284
    %3902 = vmatpush.bf16.msra.mxu0 %v2280
    %3903 = vmatpush.bf16.msra.mxu0 %v2276
    %3904 = vmatpush.bf16.msra.mxu0 %v2272
    %3905 = vmatpush.bf16.msra.mxu0 %v2268
    %3906 = vmatpush.bf16.msra.mxu0 %v2264
    %3907 = vmatpush.bf16.msra.mxu0 %v2260
    %3908 = vmatpush.bf16.msra.mxu0 %v2256
    %3909 = vmatmul.bf16.gmra.mxu0 %v179
    %v3910 = vpop.f32.mrf.mxu0
    %v3911 = vadd.f32 %v712, %v3910
    %v3912 = vpop.f32.mrf.mxu0
    %3913 = vdwg.mxu0
    %3914 = vmatpush.bf16.msra.mxu0 %v2316
    %3915 = vmatpush.bf16.msra.mxu0 %v2312
    %3916 = vmatpush.bf16.msra.mxu0 %v2308
    %3917 = vmatpush.bf16.msra.mxu0 %v2304
    %3918 = vmatpush.bf16.msra.mxu0 %v2300
    %3919 = vmatpush.bf16.msra.mxu0 %v2296
    %3920 = vmatpush.bf16.msra.mxu0 %v2292
    %3921 = vmatpush.bf16.msra.mxu0 %v2288
    %3922 = vmatmul.bf16.gmra.mxu0 %v180
    %v3923 = vpop.f32.mrf.mxu0
    %v3924 = vadd.f32 %v3911, %v3923
    %v3925 = vpop.f32.mrf.mxu0
    %3926 = vdwg.mxu0
    %3927 = vmatpush.bf16.msra.mxu0 %v2348
    %3928 = vmatpush.bf16.msra.mxu0 %v2344
    %3929 = vmatpush.bf16.msra.mxu0 %v2340
    %3930 = vmatpush.bf16.msra.mxu0 %v2336
    %3931 = vmatpush.bf16.msra.mxu0 %v2332
    %3932 = vmatpush.bf16.msra.mxu0 %v2328
    %3933 = vmatpush.bf16.msra.mxu0 %v2324
    %3934 = vmatpush.bf16.msra.mxu0 %v2320
    %3935 = vmatmul.bf16.gmra.mxu0 %v181
    %v3936 = vpop.f32.mrf.mxu0
    %v3937 = vadd.f32 %v3924, %v3936
    %v3938 = vpop.f32.mrf.mxu0
    %3939 = vdwg.mxu0
    %3940 = vmatpush.bf16.msra.mxu0 %v2380
    %3941 = vmatpush.bf16.msra.mxu0 %v2376
    %3942 = vmatpush.bf16.msra.mxu0 %v2372
    %3943 = vmatpush.bf16.msra.mxu0 %v2368
    %3944 = vmatpush.bf16.msra.mxu0 %v2364
    %3945 = vmatpush.bf16.msra.mxu0 %v2360
    %3946 = vmatpush.bf16.msra.mxu0 %v2356
    %3947 = vmatpush.bf16.msra.mxu0 %v2352
    %3948 = vmatmul.bf16.gmra.mxu0 %v182
    %v3949 = vpop.f32.mrf.mxu0
    %v3950 = vadd.f32 %v3937, %v3949
    %v3951 = vpop.f32.mrf.mxu0
    %3952 = vdwg.mxu0
    %3953 = vmatpush.bf16.msra.mxu0 %v2412
    %3954 = vmatpush.bf16.msra.mxu0 %v2408
    %3955 = vmatpush.bf16.msra.mxu0 %v2404
    %3956 = vmatpush.bf16.msra.mxu0 %v2400
    %3957 = vmatpush.bf16.msra.mxu0 %v2396
    %3958 = vmatpush.bf16.msra.mxu0 %v2392
    %3959 = vmatpush.bf16.msra.mxu0 %v2388
    %3960 = vmatpush.bf16.msra.mxu0 %v2384
    %3961 = vmatmul.bf16.gmra.mxu0 %v183
    %v3962 = vpop.f32.mrf.mxu0
    %v3963 = vadd.f32 %v3950, %v3962
    %v3964 = vpop.f32.mrf.mxu0
    %3965 = vdwg.mxu0
    %3966 = vmatpush.bf16.msra.mxu0 %v2444
    %3967 = vmatpush.bf16.msra.mxu0 %v2440
    %3968 = vmatpush.bf16.msra.mxu0 %v2436
    %3969 = vmatpush.bf16.msra.mxu0 %v2432
    %3970 = vmatpush.bf16.msra.mxu0 %v2428
    %3971 = vmatpush.bf16.msra.mxu0 %v2424
    %3972 = vmatpush.bf16.msra.mxu0 %v2420
    %3973 = vmatpush.bf16.msra.mxu0 %v2416
    %3974 = vmatmul.bf16.gmra.mxu0 %v184
    %v3975 = vpop.f32.mrf.mxu0
    %v3976 = vadd.f32 %v3963, %v3975
    %v3977 = vpop.f32.mrf.mxu0
    %3978 = vdwg.mxu0
    %3979 = vmatpush.bf16.msra.mxu0 %v2476
    %3980 = vmatpush.bf16.msra.mxu0 %v2472
    %3981 = vmatpush.bf16.msra.mxu0 %v2468
    %3982 = vmatpush.bf16.msra.mxu0 %v2464
    %3983 = vmatpush.bf16.msra.mxu0 %v2460
    %3984 = vmatpush.bf16.msra.mxu0 %v2456
    %3985 = vmatpush.bf16.msra.mxu0 %v2452
    %3986 = vmatpush.bf16.msra.mxu0 %v2448
    %3987 = vmatmul.bf16.gmra.mxu0 %v185
    %v3988 = vpop.f32.mrf.mxu0
    %v3989 = vadd.f32 %v3976, %v3988
    %v3990 = vpop.f32.mrf.mxu0
    %3991 = vdwg.mxu0
    %3992 = vmatpush.bf16.msra.mxu0 %v2508
    %3993 = vmatpush.bf16.msra.mxu0 %v2504
    %3994 = vmatpush.bf16.msra.mxu0 %v2500
    %3995 = vmatpush.bf16.msra.mxu0 %v2496
    %3996 = vmatpush.bf16.msra.mxu0 %v2492
    %3997 = vmatpush.bf16.msra.mxu0 %v2488
    %3998 = vmatpush.bf16.msra.mxu0 %v2484
    %3999 = vmatpush.bf16.msra.mxu0 %v2480
    %4000 = vmatmul.bf16.gmra.mxu0 %v186
    %v4001 = vpop.f32.mrf.mxu0
    %v4002 = vadd.f32 %v3989, %v4001
    %v4003 = vpop.f32.mrf.mxu0
    %4004 = vdwg.mxu0
    %4005 = vmatpush.bf16.msra.mxu0 %v2540
    %4006 = vmatpush.bf16.msra.mxu0 %v2536
    %4007 = vmatpush.bf16.msra.mxu0 %v2532
    %4008 = vmatpush.bf16.msra.mxu0 %v2528
    %4009 = vmatpush.bf16.msra.mxu0 %v2524
    %4010 = vmatpush.bf16.msra.mxu0 %v2520
    %4011 = vmatpush.bf16.msra.mxu0 %v2516
    %4012 = vmatpush.bf16.msra.mxu0 %v2512
    %4013 = vmatmul.bf16.gmra.mxu0 %v187
    %v4014 = vpop.f32.mrf.mxu0
    %v4015 = vadd.f32 %v4002, %v4014
    %v4016 = vpop.f32.mrf.mxu0
    %4017 = vdwg.mxu0
    %4018 = vmatpush.bf16.msra.mxu0 %v2572
    %4019 = vmatpush.bf16.msra.mxu0 %v2568
    %4020 = vmatpush.bf16.msra.mxu0 %v2564
    %4021 = vmatpush.bf16.msra.mxu0 %v2560
    %4022 = vmatpush.bf16.msra.mxu0 %v2556
    %4023 = vmatpush.bf16.msra.mxu0 %v2552
    %4024 = vmatpush.bf16.msra.mxu0 %v2548
    %4025 = vmatpush.bf16.msra.mxu0 %v2544
    %4026 = vmatmul.bf16.gmra.mxu0 %v188
    %v4027 = vpop.f32.mrf.mxu0
    %v4028 = vadd.f32 %v4015, %v4027
    %v4029 = vpop.f32.mrf.mxu0
    %4030 = vdwg.mxu0
    %4031 = vmatpush.bf16.msra.mxu0 %v2604
    %4032 = vmatpush.bf16.msra.mxu0 %v2600
    %4033 = vmatpush.bf16.msra.mxu0 %v2596
    %4034 = vmatpush.bf16.msra.mxu0 %v2592
    %4035 = vmatpush.bf16.msra.mxu0 %v2588
    %4036 = vmatpush.bf16.msra.mxu0 %v2584
    %4037 = vmatpush.bf16.msra.mxu0 %v2580
    %4038 = vmatpush.bf16.msra.mxu0 %v2576
    %4039 = vmatmul.bf16.gmra.mxu0 %v189
    %v4040 = vpop.f32.mrf.mxu0
    %v4041 = vadd.f32 %v4028, %v4040
    %v4042 = vpop.f32.mrf.mxu0
    %4043 = vdwg.mxu0
    %4044 = vmatpush.bf16.msra.mxu0 %v2636
    %4045 = vmatpush.bf16.msra.mxu0 %v2632
    %4046 = vmatpush.bf16.msra.mxu0 %v2628
    %4047 = vmatpush.bf16.msra.mxu0 %v2624
    %4048 = vmatpush.bf16.msra.mxu0 %v2620
    %4049 = vmatpush.bf16.msra.mxu0 %v2616
    %4050 = vmatpush.bf16.msra.mxu0 %v2612
    %4051 = vmatpush.bf16.msra.mxu0 %v2608
    %4052 = vmatmul.bf16.gmra.mxu0 %v190
    %v4053 = vpop.f32.mrf.mxu0
    %v4054 = vadd.f32 %v4041, %v4053
    %v4055 = vpop.f32.mrf.mxu0
    %4056 = vdwg.mxu0
    %4057 = vmatpush.bf16.msra.mxu0 %v2668
    %4058 = vmatpush.bf16.msra.mxu0 %v2664
    %4059 = vmatpush.bf16.msra.mxu0 %v2660
    %4060 = vmatpush.bf16.msra.mxu0 %v2656
    %4061 = vmatpush.bf16.msra.mxu0 %v2652
    %4062 = vmatpush.bf16.msra.mxu0 %v2648
    %4063 = vmatpush.bf16.msra.mxu0 %v2644
    %4064 = vmatpush.bf16.msra.mxu0 %v2640
    %4065 = vmatmul.bf16.gmra.mxu0 %v191
    %v4066 = vpop.f32.mrf.mxu0
    %v4067 = vadd.f32 %v4054, %v4066
    %v4068 = vpop.f32.mrf.mxu0
    %4069 = vdwg.mxu0
    %4070 = vmatpush.bf16.msra.mxu0 %v2700
    %4071 = vmatpush.bf16.msra.mxu0 %v2696
    %4072 = vmatpush.bf16.msra.mxu0 %v2692
    %4073 = vmatpush.bf16.msra.mxu0 %v2688
    %4074 = vmatpush.bf16.msra.mxu0 %v2684
    %4075 = vmatpush.bf16.msra.mxu0 %v2680
    %4076 = vmatpush.bf16.msra.mxu0 %v2676
    %4077 = vmatpush.bf16.msra.mxu0 %v2672
    %4078 = vmatmul.bf16.gmra.mxu0 %v192
    %v4079 = vpop.f32.mrf.mxu0
    %v4080 = vadd.f32 %v4067, %v4079
    %v4081 = vpop.f32.mrf.mxu0
    %4082 = vdwg.mxu0
    %4083 = vmatpush.bf16.msra.mxu0 %v2732
    %4084 = vmatpush.bf16.msra.mxu0 %v2728
    %4085 = vmatpush.bf16.msra.mxu0 %v2724
    %4086 = vmatpush.bf16.msra.mxu0 %v2720
    %4087 = vmatpush.bf16.msra.mxu0 %v2716
    %4088 = vmatpush.bf16.msra.mxu0 %v2712
    %4089 = vmatpush.bf16.msra.mxu0 %v2708
    %4090 = vmatpush.bf16.msra.mxu0 %v2704
    %4091 = vmatmul.bf16.gmra.mxu0 %v193
    %v4092 = vpop.f32.mrf.mxu0
    %v4093 = vadd.f32 %v4080, %v4092
    %v4094 = vpop.f32.mrf.mxu0
    %4095 = vdwg.mxu0
    %4096 = vmatpush.bf16.msra.mxu0 %v2764
    %4097 = vmatpush.bf16.msra.mxu0 %v2760
    %4098 = vmatpush.bf16.msra.mxu0 %v2756
    %4099 = vmatpush.bf16.msra.mxu0 %v2752
    %4100 = vmatpush.bf16.msra.mxu0 %v2748
    %4101 = vmatpush.bf16.msra.mxu0 %v2744
    %4102 = vmatpush.bf16.msra.mxu0 %v2740
    %4103 = vmatpush.bf16.msra.mxu0 %v2736
    %4104 = vmatmul.bf16.gmra.mxu0 %v194
    %v4105 = vpop.f32.mrf.mxu0
    %v4106 = vadd.f32 %v4093, %v4105
    %v4107 = vpop.f32.mrf.mxu0
    %4108 = vdwg.mxu0
    %v4109 = vmax.f32 %v3482, 0.0
    %v4110 = vmax.f32 %v3690, 0.0
    %v4111 = vmax.f32 %v3898, 0.0
    %v4112 = vmax.f32 %v4106, 0.0
    %v4113 = vld [vmem:[#allocation5] sm:$0xff]
    %v4114 = vld [vmem:[#allocation5 + $0x8] sm:$0xff]
    %v4115 = vld [vmem:[#allocation5 + $0x10] sm:$0xff]
    %v4116 = vld [vmem:[#allocation5 + $0x18] sm:$0xff]
    %v4117 = vld [vmem:[#allocation5 + $0x20] sm:$0xff]
    %v4118 = vld [vmem:[#allocation5 + $0x28] sm:$0xff]
    %v4119 = vpack.c.bf16 %v4113, %v4113
    %v4120 = vpack.c.bf16 %v4114, %v4114
    %v4121 = vpack.c.bf16 %v4115, %v4115
    %v4122 = vpack.c.bf16 %v4116, %v4116
    %v4123 = vpack.c.bf16 %v4117, %v4117
    %v4124 = vpack.c.bf16 %v4118, %v4118
    %v4125 = vld [vmem:[#allocation10] sm:$0xff]
    %v4126 = vld [vmem:[#allocation10 + $0x8] sm:$0xff]
    %v4127 = vld [vmem:[#allocation10 + $0x10] sm:$0xff]
    %v4128 = vld [vmem:[#allocation10 + $0x18] sm:$0xff]
    %v4129 = vld [vmem:[#allocation10 + $0x20] sm:$0xff]
    %v4130 = vld [vmem:[#allocation10 + $0x28] sm:$0xff]
    %v4131 = vld [vmem:[#allocation10 + $0x30] sm:$0xff]
    %v4132 = vld [vmem:[#allocation10 + $0x38] sm:$0xff]
    %v4133 = vld [vmem:[#allocation10 + $0x40] sm:$0xff]
    %v4134 = vld [vmem:[#allocation10 + $0x48] sm:$0xff]
    %v4135 = vld [vmem:[#allocation10 + $0x50] sm:$0xff]
    %v4136 = vld [vmem:[#allocation10 + $0x58] sm:$0xff]
    %v4137 = vld [vmem:[#allocation10 + $0x60] sm:$0xff]
    %v4138 = vld [vmem:[#allocation10 + $0x68] sm:$0xff]
    %v4139 = vld [vmem:[#allocation10 + $0x70] sm:$0xff]
    %v4140 = vld [vmem:[#allocation10 + $0x78] sm:$0xff]
    %v4141 = vld [vmem:[#allocation10 + $0x80] sm:$0xff]
    %v4142 = vld [vmem:[#allocation10 + $0x88] sm:$0xff]
    %v4143 = vld [vmem:[#allocation10 + $0x90] sm:$0xff]
    %v4144 = vld [vmem:[#allocation10 + $0x98] sm:$0xff]
    %v4145 = vld [vmem:[#allocation10 + $0xa0] sm:$0xff]
    %v4146 = vld [vmem:[#allocation10 + $0xa8] sm:$0xff]
    %v4147 = vld [vmem:[#allocation10 + $0xb0] sm:$0xff]
    %v4148 = vld [vmem:[#allocation10 + $0xb8] sm:$0xff]
    %v4149 = vld [vmem:[#allocation10 + $0xc0] sm:$0xff]
    %v4150 = vld [vmem:[#allocation10 + $0xc8] sm:$0xff]
    %v4151 = vld [vmem:[#allocation10 + $0xd0] sm:$0xff]
    %v4152 = vld [vmem:[#allocation10 + $0xd8] sm:$0xff]
    %v4153 = vld [vmem:[#allocation10 + $0xe0] sm:$0xff]
    %v4154 = vld [vmem:[#allocation10 + $0xe8] sm:$0xff]
    %v4155 = vld [vmem:[#allocation10 + $0xf0] sm:$0xff]
    %v4156 = vld [vmem:[#allocation10 + $0xf8] sm:$0xff]
    %v4157 = vld [vmem:[#allocation10 + $0x100] sm:$0xff]
    %v4158 = vld [vmem:[#allocation10 + $0x108] sm:$0xff]
    %v4159 = vld [vmem:[#allocation10 + $0x110] sm:$0xff]
    %v4160 = vld [vmem:[#allocation10 + $0x118] sm:$0xff]
    %v4161 = vld [vmem:[#allocation10 + $0x120] sm:$0xff]
    %v4162 = vld [vmem:[#allocation10 + $0x128] sm:$0xff]
    %v4163 = vld [vmem:[#allocation10 + $0x130] sm:$0xff]
    %v4164 = vld [vmem:[#allocation10 + $0x138] sm:$0xff]
    %v4165 = vld [vmem:[#allocation10 + $0x140] sm:$0xff]
    %v4166 = vld [vmem:[#allocation10 + $0x148] sm:$0xff]
    %v4167 = vld [vmem:[#allocation10 + $0x150] sm:$0xff]
    %v4168 = vld [vmem:[#allocation10 + $0x158] sm:$0xff]
    %v4169 = vld [vmem:[#allocation10 + $0x160] sm:$0xff]
    %v4170 = vld [vmem:[#allocation10 + $0x168] sm:$0xff]
    %v4171 = vld [vmem:[#allocation10 + $0x170] sm:$0xff]
    %v4172 = vld [vmem:[#allocation10 + $0x178] sm:$0xff]
    %v4173 = vld [vmem:[#allocation10 + $0x180] sm:$0xff]
    %v4174 = vld [vmem:[#allocation10 + $0x188] sm:$0xff]
    %v4175 = vld [vmem:[#allocation10 + $0x190] sm:$0xff]
    %v4176 = vld [vmem:[#allocation10 + $0x198] sm:$0xff]
    %v4177 = vld [vmem:[#allocation10 + $0x1a0] sm:$0xff]
    %v4178 = vld [vmem:[#allocation10 + $0x1a8] sm:$0xff]
    %v4179 = vld [vmem:[#allocation10 + $0x1b0] sm:$0xff]
    %v4180 = vld [vmem:[#allocation10 + $0x1b8] sm:$0xff]
    %v4181 = vld [vmem:[#allocation10 + $0x1c0] sm:$0xff]
    %v4182 = vld [vmem:[#allocation10 + $0x1c8] sm:$0xff]
    %v4183 = vld [vmem:[#allocation10 + $0x1d0] sm:$0xff]
    %v4184 = vld [vmem:[#allocation10 + $0x1d8] sm:$0xff]
    %v4185 = vld [vmem:[#allocation10 + $0x1e0] sm:$0xff]
    %v4186 = vld [vmem:[#allocation10 + $0x1e8] sm:$0xff]
    %v4187 = vld [vmem:[#allocation10 + $0x1f0] sm:$0xff]
    %v4188 = vld [vmem:[#allocation10 + $0x1f8] sm:$0xff]
    %v4189 = vld [vmem:[#allocation10 + $0x200] sm:$0xff]
    %v4190 = vld [vmem:[#allocation10 + $0x208] sm:$0xff]
    %v4191 = vld [vmem:[#allocation10 + $0x210] sm:$0xff]
    %v4192 = vld [vmem:[#allocation10 + $0x218] sm:$0xff]
    %v4193 = vld [vmem:[#allocation10 + $0x220] sm:$0xff]
    %v4194 = vld [vmem:[#allocation10 + $0x228] sm:$0xff]
    %v4195 = vld [vmem:[#allocation10 + $0x230] sm:$0xff]
    %v4196 = vld [vmem:[#allocation10 + $0x238] sm:$0xff]
    %v4197 = vld [vmem:[#allocation10 + $0x240] sm:$0xff]
    %v4198 = vld [vmem:[#allocation10 + $0x248] sm:$0xff]
    %v4199 = vld [vmem:[#allocation10 + $0x250] sm:$0xff]
    %v4200 = vld [vmem:[#allocation10 + $0x258] sm:$0xff]
    %v4201 = vld [vmem:[#allocation10 + $0x260] sm:$0xff]
    %v4202 = vld [vmem:[#allocation10 + $0x268] sm:$0xff]
    %v4203 = vld [vmem:[#allocation10 + $0x270] sm:$0xff]
    %v4204 = vld [vmem:[#allocation10 + $0x278] sm:$0xff]
    %v4205 = vld [vmem:[#allocation10 + $0x280] sm:$0xff]
    %v4206 = vld [vmem:[#allocation10 + $0x288] sm:$0xff]
    %v4207 = vld [vmem:[#allocation10 + $0x290] sm:$0xff]
    %v4208 = vld [vmem:[#allocation10 + $0x298] sm:$0xff]
    %v4209 = vld [vmem:[#allocation10 + $0x2a0] sm:$0xff]
    %v4210 = vld [vmem:[#allocation10 + $0x2a8] sm:$0xff]
    %v4211 = vld [vmem:[#allocation10 + $0x2b0] sm:$0xff]
    %v4212 = vld [vmem:[#allocation10 + $0x2b8] sm:$0xff]
    %v4213 = vld [vmem:[#allocation10 + $0x2c0] sm:$0xff]
    %v4214 = vld [vmem:[#allocation10 + $0x2c8] sm:$0xff]
    %v4215 = vld [vmem:[#allocation10 + $0x2d0] sm:$0xff]
    %v4216 = vld [vmem:[#allocation10 + $0x2d8] sm:$0xff]
    %v4217 = vld [vmem:[#allocation10 + $0x2e0] sm:$0xff]
    %v4218 = vld [vmem:[#allocation10 + $0x2e8] sm:$0xff]
    %v4219 = vld [vmem:[#allocation10 + $0x2f0] sm:$0xff]
    %v4220 = vld [vmem:[#allocation10 + $0x2f8] sm:$0xff]
    %v4221 = vld [vmem:[#allocation10 + $0x300] sm:$0xff]
    %v4222 = vld [vmem:[#allocation10 + $0x308] sm:$0xff]
    %v4223 = vld [vmem:[#allocation10 + $0x310] sm:$0xff]
    %v4224 = vld [vmem:[#allocation10 + $0x318] sm:$0xff]
    %v4225 = vld [vmem:[#allocation10 + $0x320] sm:$0xff]
    %v4226 = vld [vmem:[#allocation10 + $0x328] sm:$0xff]
    %v4227 = vld [vmem:[#allocation10 + $0x330] sm:$0xff]
    %v4228 = vld [vmem:[#allocation10 + $0x338] sm:$0xff]
    %v4229 = vld [vmem:[#allocation10 + $0x340] sm:$0xff]
    %v4230 = vld [vmem:[#allocation10 + $0x348] sm:$0xff]
    %v4231 = vld [vmem:[#allocation10 + $0x350] sm:$0xff]
    %v4232 = vld [vmem:[#allocation10 + $0x358] sm:$0xff]
    %v4233 = vld [vmem:[#allocation10 + $0x360] sm:$0xff]
    %v4234 = vld [vmem:[#allocation10 + $0x368] sm:$0xff]
    %v4235 = vld [vmem:[#allocation10 + $0x370] sm:$0xff]
    %v4236 = vld [vmem:[#allocation10 + $0x378] sm:$0xff]
    %v4237 = vld [vmem:[#allocation10 + $0x380] sm:$0xff]
    %v4238 = vld [vmem:[#allocation10 + $0x388] sm:$0xff]
    %v4239 = vld [vmem:[#allocation10 + $0x390] sm:$0xff]
    %v4240 = vld [vmem:[#allocation10 + $0x398] sm:$0xff]
    %v4241 = vld [vmem:[#allocation10 + $0x3a0] sm:$0xff]
    %v4242 = vld [vmem:[#allocation10 + $0x3a8] sm:$0xff]
    %v4243 = vld [vmem:[#allocation10 + $0x3b0] sm:$0xff]
    %v4244 = vld [vmem:[#allocation10 + $0x3b8] sm:$0xff]
    %v4245 = vld [vmem:[#allocation10 + $0x3c0] sm:$0xff]
    %v4246 = vld [vmem:[#allocation10 + $0x3c8] sm:$0xff]
    %v4247 = vld [vmem:[#allocation10 + $0x3d0] sm:$0xff]
    %v4248 = vld [vmem:[#allocation10 + $0x3d8] sm:$0xff]
    %v4249 = vld [vmem:[#allocation10 + $0x3e0] sm:$0xff]
    %v4250 = vld [vmem:[#allocation10 + $0x3e8] sm:$0xff]
    %v4251 = vld [vmem:[#allocation10 + $0x3f0] sm:$0xff]
    %v4252 = vld [vmem:[#allocation10 + $0x3f8] sm:$0xff]
    %v4253 = vld [vmem:[#allocation10 + $0x400] sm:$0xff]
    %v4254 = vld [vmem:[#allocation10 + $0x408] sm:$0xff]
    %v4255 = vld [vmem:[#allocation10 + $0x410] sm:$0xff]
    %v4256 = vld [vmem:[#allocation10 + $0x418] sm:$0xff]
    %v4257 = vld [vmem:[#allocation10 + $0x420] sm:$0xff]
    %v4258 = vld [vmem:[#allocation10 + $0x428] sm:$0xff]
    %v4259 = vld [vmem:[#allocation10 + $0x430] sm:$0xff]
    %v4260 = vld [vmem:[#allocation10 + $0x438] sm:$0xff]
    %v4261 = vld [vmem:[#allocation10 + $0x440] sm:$0xff]
    %v4262 = vld [vmem:[#allocation10 + $0x448] sm:$0xff]
    %v4263 = vld [vmem:[#allocation10 + $0x450] sm:$0xff]
    %v4264 = vld [vmem:[#allocation10 + $0x458] sm:$0xff]
    %v4265 = vld [vmem:[#allocation10 + $0x460] sm:$0xff]
    %v4266 = vld [vmem:[#allocation10 + $0x468] sm:$0xff]
    %v4267 = vld [vmem:[#allocation10 + $0x470] sm:$0xff]
    %v4268 = vld [vmem:[#allocation10 + $0x478] sm:$0xff]
    %v4269 = vld [vmem:[#allocation10 + $0x480] sm:$0xff]
    %v4270 = vld [vmem:[#allocation10 + $0x488] sm:$0xff]
    %v4271 = vld [vmem:[#allocation10 + $0x490] sm:$0xff]
    %v4272 = vld [vmem:[#allocation10 + $0x498] sm:$0xff]
    %v4273 = vld [vmem:[#allocation10 + $0x4a0] sm:$0xff]
    %v4274 = vld [vmem:[#allocation10 + $0x4a8] sm:$0xff]
    %v4275 = vld [vmem:[#allocation10 + $0x4b0] sm:$0xff]
    %v4276 = vld [vmem:[#allocation10 + $0x4b8] sm:$0xff]
    %v4277 = vld [vmem:[#allocation10 + $0x4c0] sm:$0xff]
    %v4278 = vld [vmem:[#allocation10 + $0x4c8] sm:$0xff]
    %v4279 = vld [vmem:[#allocation10 + $0x4d0] sm:$0xff]
    %v4280 = vld [vmem:[#allocation10 + $0x4d8] sm:$0xff]
    %v4281 = vld [vmem:[#allocation10 + $0x4e0] sm:$0xff]
    %v4282 = vld [vmem:[#allocation10 + $0x4e8] sm:$0xff]
    %v4283 = vld [vmem:[#allocation10 + $0x4f0] sm:$0xff]
    %v4284 = vld [vmem:[#allocation10 + $0x4f8] sm:$0xff]
    %v4285 = vld [vmem:[#allocation10 + $0x500] sm:$0xff]
    %v4286 = vld [vmem:[#allocation10 + $0x508] sm:$0xff]
    %v4287 = vld [vmem:[#allocation10 + $0x510] sm:$0xff]
    %v4288 = vld [vmem:[#allocation10 + $0x518] sm:$0xff]
    %v4289 = vld [vmem:[#allocation10 + $0x520] sm:$0xff]
    %v4290 = vld [vmem:[#allocation10 + $0x528] sm:$0xff]
    %v4291 = vld [vmem:[#allocation10 + $0x530] sm:$0xff]
    %v4292 = vld [vmem:[#allocation10 + $0x538] sm:$0xff]
    %v4293 = vld [vmem:[#allocation10 + $0x540] sm:$0xff]
    %v4294 = vld [vmem:[#allocation10 + $0x548] sm:$0xff]
    %v4295 = vld [vmem:[#allocation10 + $0x550] sm:$0xff]
    %v4296 = vld [vmem:[#allocation10 + $0x558] sm:$0xff]
    %v4297 = vld [vmem:[#allocation10 + $0x560] sm:$0xff]
    %v4298 = vld [vmem:[#allocation10 + $0x568] sm:$0xff]
    %v4299 = vld [vmem:[#allocation10 + $0x570] sm:$0xff]
    %v4300 = vld [vmem:[#allocation10 + $0x578] sm:$0xff]
    %v4301 = vld [vmem:[#allocation10 + $0x580] sm:$0xff]
    %v4302 = vld [vmem:[#allocation10 + $0x588] sm:$0xff]
    %v4303 = vld [vmem:[#allocation10 + $0x590] sm:$0xff]
    %v4304 = vld [vmem:[#allocation10 + $0x598] sm:$0xff]
    %v4305 = vld [vmem:[#allocation10 + $0x5a0] sm:$0xff]
    %v4306 = vld [vmem:[#allocation10 + $0x5a8] sm:$0xff]
    %v4307 = vld [vmem:[#allocation10 + $0x5b0] sm:$0xff]
    %v4308 = vld [vmem:[#allocation10 + $0x5b8] sm:$0xff]
    %v4309 = vld [vmem:[#allocation10 + $0x5c0] sm:$0xff]
    %v4310 = vld [vmem:[#allocation10 + $0x5c8] sm:$0xff]
    %v4311 = vld [vmem:[#allocation10 + $0x5d0] sm:$0xff]
    %v4312 = vld [vmem:[#allocation10 + $0x5d8] sm:$0xff]
    %v4313 = vld [vmem:[#allocation10 + $0x5e0] sm:$0xff]
    %v4314 = vld [vmem:[#allocation10 + $0x5e8] sm:$0xff]
    %v4315 = vld [vmem:[#allocation10 + $0x5f0] sm:$0xff]
    %v4316 = vld [vmem:[#allocation10 + $0x5f8] sm:$0xff]
    %v4317 = vld [vmem:[#allocation11] sm:$0xf]
    %v4319 = vperm.slane %v4317, 0
    %v4320 = vperm.slane %v4317, 1
    %v4321 = vperm.slane %v4317, 2
    %v4322 = vperm.slane %v4317, 3
    %v4519 = vunpack.c.l.b16 %v4125
    %v4520 = vunpack.c.h.b16 %v4125
    %v4521 = vunpack.c.l.b16 %v4126
    %v4522 = vunpack.c.h.b16 %v4126
    %v4523 = vunpack.c.l.b16 %v4127
    %v4524 = vunpack.c.h.b16 %v4127
    %v4525 = vunpack.c.l.b16 %v4128
    %v4526 = vunpack.c.h.b16 %v4128
    %v4527 = vunpack.c.l.b16 %v4129
    %v4528 = vunpack.c.h.b16 %v4129
    %v4529 = vunpack.c.l.b16 %v4130
    %v4530 = vunpack.c.h.b16 %v4130
    %v4531 = vunpack.c.l.b16 %v4131
    %v4532 = vunpack.c.h.b16 %v4131
    %v4533 = vunpack.c.l.b16 %v4132
    %v4534 = vunpack.c.h.b16 %v4132
    %v4535 = vunpack.c.l.b16 %v4133
    %v4536 = vunpack.c.h.b16 %v4133
    %v4537 = vunpack.c.l.b16 %v4134
    %v4538 = vunpack.c.h.b16 %v4134
    %v4539 = vunpack.c.l.b16 %v4135
    %v4540 = vunpack.c.h.b16 %v4135
    %v4541 = vunpack.c.l.b16 %v4136
    %v4542 = vunpack.c.h.b16 %v4136
    %v4543 = vunpack.c.l.b16 %v4137
    %v4544 = vunpack.c.h.b16 %v4137
    %v4545 = vunpack.c.l.b16 %v4138
    %v4546 = vunpack.c.h.b16 %v4138
    %v4547 = vunpack.c.l.b16 %v4139
    %v4548 = vunpack.c.h.b16 %v4139
    %v4549 = vunpack.c.l.b16 %v4140
    %v4550 = vunpack.c.h.b16 %v4140
    %v4551 = vunpack.c.l.b16 %v4141
    %v4552 = vunpack.c.h.b16 %v4141
    %v4553 = vunpack.c.l.b16 %v4142
    %v4554 = vunpack.c.h.b16 %v4142
    %v4555 = vunpack.c.l.b16 %v4143
    %v4556 = vunpack.c.h.b16 %v4143
    %v4557 = vunpack.c.l.b16 %v4144
    %v4558 = vunpack.c.h.b16 %v4144
    %v4559 = vunpack.c.l.b16 %v4145
    %v4560 = vunpack.c.h.b16 %v4145
    %v4561 = vunpack.c.l.b16 %v4146
    %v4562 = vunpack.c.h.b16 %v4146
    %v4563 = vunpack.c.l.b16 %v4147
    %v4564 = vunpack.c.h.b16 %v4147
    %v4565 = vunpack.c.l.b16 %v4148
    %v4566 = vunpack.c.h.b16 %v4148
    %v4567 = vunpack.c.l.b16 %v4149
    %v4568 = vunpack.c.h.b16 %v4149
    %v4569 = vunpack.c.l.b16 %v4150
    %v4570 = vunpack.c.h.b16 %v4150
    %v4571 = vunpack.c.l.b16 %v4151
    %v4572 = vunpack.c.h.b16 %v4151
    %v4573 = vunpack.c.l.b16 %v4152
    %v4574 = vunpack.c.h.b16 %v4152
    %v4575 = vunpack.c.l.b16 %v4153
    %v4576 = vunpack.c.h.b16 %v4153
    %v4577 = vunpack.c.l.b16 %v4154
    %v4578 = vunpack.c.h.b16 %v4154
    %v4579 = vunpack.c.l.b16 %v4155
    %v4580 = vunpack.c.h.b16 %v4155
    %v4581 = vunpack.c.l.b16 %v4156
    %v4582 = vunpack.c.h.b16 %v4156
    %v4583 = vunpack.c.l.b16 %v4157
    %v4584 = vunpack.c.h.b16 %v4157
    %v4585 = vunpack.c.l.b16 %v4158
    %v4586 = vunpack.c.h.b16 %v4158
    %v4587 = vunpack.c.l.b16 %v4159
    %v4588 = vunpack.c.h.b16 %v4159
    %v4589 = vunpack.c.l.b16 %v4160
    %v4590 = vunpack.c.h.b16 %v4160
    %v4591 = vunpack.c.l.b16 %v4161
    %v4592 = vunpack.c.h.b16 %v4161
    %v4593 = vunpack.c.l.b16 %v4162
    %v4594 = vunpack.c.h.b16 %v4162
    %v4595 = vunpack.c.l.b16 %v4163
    %v4596 = vunpack.c.h.b16 %v4163
    %v4597 = vunpack.c.l.b16 %v4164
    %v4598 = vunpack.c.h.b16 %v4164
    %v4599 = vunpack.c.l.b16 %v4165
    %v4600 = vunpack.c.h.b16 %v4165
    %v4601 = vunpack.c.l.b16 %v4166
    %v4602 = vunpack.c.h.b16 %v4166
    %v4603 = vunpack.c.l.b16 %v4167
    %v4604 = vunpack.c.h.b16 %v4167
    %v4605 = vunpack.c.l.b16 %v4168
    %v4606 = vunpack.c.h.b16 %v4168
    %v4607 = vunpack.c.l.b16 %v4169
    %v4608 = vunpack.c.h.b16 %v4169
    %v4609 = vunpack.c.l.b16 %v4170
    %v4610 = vunpack.c.h.b16 %v4170
    %v4611 = vunpack.c.l.b16 %v4171
    %v4612 = vunpack.c.h.b16 %v4171
    %v4613 = vunpack.c.l.b16 %v4172
    %v4614 = vunpack.c.h.b16 %v4172
    %v4615 = vunpack.c.l.b16 %v4173
    %v4616 = vunpack.c.h.b16 %v4173
    %v4617 = vunpack.c.l.b16 %v4174
    %v4618 = vunpack.c.h.b16 %v4174
    %v4619 = vunpack.c.l.b16 %v4175
    %v4620 = vunpack.c.h.b16 %v4175
    %v4621 = vunpack.c.l.b16 %v4176
    %v4622 = vunpack.c.h.b16 %v4176
    %v4623 = vunpack.c.l.b16 %v4177
    %v4624 = vunpack.c.h.b16 %v4177
    %v4625 = vunpack.c.l.b16 %v4178
    %v4626 = vunpack.c.h.b16 %v4178
    %v4627 = vunpack.c.l.b16 %v4179
    %v4628 = vunpack.c.h.b16 %v4179
    %v4629 = vunpack.c.l.b16 %v4180
    %v4630 = vunpack.c.h.b16 %v4180
    %v4631 = vunpack.c.l.b16 %v4181
    %v4632 = vunpack.c.h.b16 %v4181
    %v4633 = vunpack.c.l.b16 %v4182
    %v4634 = vunpack.c.h.b16 %v4182
    %v4635 = vunpack.c.l.b16 %v4183
    %v4636 = vunpack.c.h.b16 %v4183
    %v4637 = vunpack.c.l.b16 %v4184
    %v4638 = vunpack.c.h.b16 %v4184
    %v4639 = vunpack.c.l.b16 %v4185
    %v4640 = vunpack.c.h.b16 %v4185
    %v4641 = vunpack.c.l.b16 %v4186
    %v4642 = vunpack.c.h.b16 %v4186
    %v4643 = vunpack.c.l.b16 %v4187
    %v4644 = vunpack.c.h.b16 %v4187
    %v4645 = vunpack.c.l.b16 %v4188
    %v4646 = vunpack.c.h.b16 %v4188
    %v4647 = vunpack.c.l.b16 %v4189
    %v4648 = vunpack.c.h.b16 %v4189
    %v4649 = vunpack.c.l.b16 %v4190
    %v4650 = vunpack.c.h.b16 %v4190
    %v4651 = vunpack.c.l.b16 %v4191
    %v4652 = vunpack.c.h.b16 %v4191
    %v4653 = vunpack.c.l.b16 %v4192
    %v4654 = vunpack.c.h.b16 %v4192
    %v4655 = vunpack.c.l.b16 %v4193
    %v4656 = vunpack.c.h.b16 %v4193
    %v4657 = vunpack.c.l.b16 %v4194
    %v4658 = vunpack.c.h.b16 %v4194
    %v4659 = vunpack.c.l.b16 %v4195
    %v4660 = vunpack.c.h.b16 %v4195
    %v4661 = vunpack.c.l.b16 %v4196
    %v4662 = vunpack.c.h.b16 %v4196
    %v4663 = vunpack.c.l.b16 %v4197
    %v4664 = vunpack.c.h.b16 %v4197
    %v4665 = vunpack.c.l.b16 %v4198
    %v4666 = vunpack.c.h.b16 %v4198
    %v4667 = vunpack.c.l.b16 %v4199
    %v4668 = vunpack.c.h.b16 %v4199
    %v4669 = vunpack.c.l.b16 %v4200
    %v4670 = vunpack.c.h.b16 %v4200
    %v4671 = vunpack.c.l.b16 %v4201
    %v4672 = vunpack.c.h.b16 %v4201
    %v4673 = vunpack.c.l.b16 %v4202
    %v4674 = vunpack.c.h.b16 %v4202
    %v4675 = vunpack.c.l.b16 %v4203
    %v4676 = vunpack.c.h.b16 %v4203
    %v4677 = vunpack.c.l.b16 %v4204
    %v4678 = vunpack.c.h.b16 %v4204
    %v4679 = vunpack.c.l.b16 %v4205
    %v4680 = vunpack.c.h.b16 %v4205
    %v4681 = vunpack.c.l.b16 %v4206
    %v4682 = vunpack.c.h.b16 %v4206
    %v4683 = vunpack.c.l.b16 %v4207
    %v4684 = vunpack.c.h.b16 %v4207
    %v4685 = vunpack.c.l.b16 %v4208
    %v4686 = vunpack.c.h.b16 %v4208
    %v4687 = vunpack.c.l.b16 %v4209
    %v4688 = vunpack.c.h.b16 %v4209
    %v4689 = vunpack.c.l.b16 %v4210
    %v4690 = vunpack.c.h.b16 %v4210
    %v4691 = vunpack.c.l.b16 %v4211
    %v4692 = vunpack.c.h.b16 %v4211
    %v4693 = vunpack.c.l.b16 %v4212
    %v4694 = vunpack.c.h.b16 %v4212
    %v4695 = vunpack.c.l.b16 %v4213
    %v4696 = vunpack.c.h.b16 %v4213
    %v4697 = vunpack.c.l.b16 %v4214
    %v4698 = vunpack.c.h.b16 %v4214
    %v4699 = vunpack.c.l.b16 %v4215
    %v4700 = vunpack.c.h.b16 %v4215
    %v4701 = vunpack.c.l.b16 %v4216
    %v4702 = vunpack.c.h.b16 %v4216
    %v4703 = vunpack.c.l.b16 %v4217
    %v4704 = vunpack.c.h.b16 %v4217
    %v4705 = vunpack.c.l.b16 %v4218
    %v4706 = vunpack.c.h.b16 %v4218
    %v4707 = vunpack.c.l.b16 %v4219
    %v4708 = vunpack.c.h.b16 %v4219
    %v4709 = vunpack.c.l.b16 %v4220
    %v4710 = vunpack.c.h.b16 %v4220
    %v4711 = vunpack.c.l.b16 %v4221
    %v4712 = vunpack.c.h.b16 %v4221
    %v4713 = vunpack.c.l.b16 %v4222
    %v4714 = vunpack.c.h.b16 %v4222
    %v4715 = vunpack.c.l.b16 %v4223
    %v4716 = vunpack.c.h.b16 %v4223
    %v4717 = vunpack.c.l.b16 %v4224
    %v4718 = vunpack.c.h.b16 %v4224
    %v4719 = vunpack.c.l.b16 %v4225
    %v4720 = vunpack.c.h.b16 %v4225
    %v4721 = vunpack.c.l.b16 %v4226
    %v4722 = vunpack.c.h.b16 %v4226
    %v4723 = vunpack.c.l.b16 %v4227
    %v4724 = vunpack.c.h.b16 %v4227
    %v4725 = vunpack.c.l.b16 %v4228
    %v4726 = vunpack.c.h.b16 %v4228
    %v4727 = vunpack.c.l.b16 %v4229
    %v4728 = vunpack.c.h.b16 %v4229
    %v4729 = vunpack.c.l.b16 %v4230
    %v4730 = vunpack.c.h.b16 %v4230
    %v4731 = vunpack.c.l.b16 %v4231
    %v4732 = vunpack.c.h.b16 %v4231
    %v4733 = vunpack.c.l.b16 %v4232
    %v4734 = vunpack.c.h.b16 %v4232
    %v4735 = vunpack.c.l.b16 %v4233
    %v4736 = vunpack.c.h.b16 %v4233
    %v4737 = vunpack.c.l.b16 %v4234
    %v4738 = vunpack.c.h.b16 %v4234
    %v4739 = vunpack.c.l.b16 %v4235
    %v4740 = vunpack.c.h.b16 %v4235
    %v4741 = vunpack.c.l.b16 %v4236
    %v4742 = vunpack.c.h.b16 %v4236
    %v4743 = vunpack.c.l.b16 %v4237
    %v4744 = vunpack.c.h.b16 %v4237
    %v4745 = vunpack.c.l.b16 %v4238
    %v4746 = vunpack.c.h.b16 %v4238
    %v4747 = vunpack.c.l.b16 %v4239
    %v4748 = vunpack.c.h.b16 %v4239
    %v4749 = vunpack.c.l.b16 %v4240
    %v4750 = vunpack.c.h.b16 %v4240
    %v4751 = vunpack.c.l.b16 %v4241
    %v4752 = vunpack.c.h.b16 %v4241
    %v4753 = vunpack.c.l.b16 %v4242
    %v4754 = vunpack.c.h.b16 %v4242
    %v4755 = vunpack.c.l.b16 %v4243
    %v4756 = vunpack.c.h.b16 %v4243
    %v4757 = vunpack.c.l.b16 %v4244
    %v4758 = vunpack.c.h.b16 %v4244
    %v4759 = vunpack.c.l.b16 %v4245
    %v4760 = vunpack.c.h.b16 %v4245
    %v4761 = vunpack.c.l.b16 %v4246
    %v4762 = vunpack.c.h.b16 %v4246
    %v4763 = vunpack.c.l.b16 %v4247
    %v4764 = vunpack.c.h.b16 %v4247
    %v4765 = vunpack.c.l.b16 %v4248
    %v4766 = vunpack.c.h.b16 %v4248
    %v4767 = vunpack.c.l.b16 %v4249
    %v4768 = vunpack.c.h.b16 %v4249
    %v4769 = vunpack.c.l.b16 %v4250
    %v4770 = vunpack.c.h.b16 %v4250
    %v4771 = vunpack.c.l.b16 %v4251
    %v4772 = vunpack.c.h.b16 %v4251
    %v4773 = vunpack.c.l.b16 %v4252
    %v4774 = vunpack.c.h.b16 %v4252
    %v4775 = vunpack.c.l.b16 %v4253
    %v4776 = vunpack.c.h.b16 %v4253
    %v4777 = vunpack.c.l.b16 %v4254
    %v4778 = vunpack.c.h.b16 %v4254
    %v4779 = vunpack.c.l.b16 %v4255
    %v4780 = vunpack.c.h.b16 %v4255
    %v4781 = vunpack.c.l.b16 %v4256
    %v4782 = vunpack.c.h.b16 %v4256
    %v4783 = vunpack.c.l.b16 %v4257
    %v4784 = vunpack.c.h.b16 %v4257
    %v4785 = vunpack.c.l.b16 %v4258
    %v4786 = vunpack.c.h.b16 %v4258
    %v4787 = vunpack.c.l.b16 %v4259
    %v4788 = vunpack.c.h.b16 %v4259
    %v4789 = vunpack.c.l.b16 %v4260
    %v4790 = vunpack.c.h.b16 %v4260
    %v4791 = vunpack.c.l.b16 %v4261
    %v4792 = vunpack.c.h.b16 %v4261
    %v4793 = vunpack.c.l.b16 %v4262
    %v4794 = vunpack.c.h.b16 %v4262
    %v4795 = vunpack.c.l.b16 %v4263
    %v4796 = vunpack.c.h.b16 %v4263
    %v4797 = vunpack.c.l.b16 %v4264
    %v4798 = vunpack.c.h.b16 %v4264
    %v4799 = vunpack.c.l.b16 %v4265
    %v4800 = vunpack.c.h.b16 %v4265
    %v4801 = vunpack.c.l.b16 %v4266
    %v4802 = vunpack.c.h.b16 %v4266
    %v4803 = vunpack.c.l.b16 %v4267
    %v4804 = vunpack.c.h.b16 %v4267
    %v4805 = vunpack.c.l.b16 %v4268
    %v4806 = vunpack.c.h.b16 %v4268
    %v4807 = vunpack.c.l.b16 %v4269
    %v4808 = vunpack.c.h.b16 %v4269
    %v4809 = vunpack.c.l.b16 %v4270
    %v4810 = vunpack.c.h.b16 %v4270
    %v4811 = vunpack.c.l.b16 %v4271
    %v4812 = vunpack.c.h.b16 %v4271
    %v4813 = vunpack.c.l.b16 %v4272
    %v4814 = vunpack.c.h.b16 %v4272
    %v4815 = vunpack.c.l.b16 %v4273
    %v4816 = vunpack.c.h.b16 %v4273
    %v4817 = vunpack.c.l.b16 %v4274
    %v4818 = vunpack.c.h.b16 %v4274
    %v4819 = vunpack.c.l.b16 %v4275
    %v4820 = vunpack.c.h.b16 %v4275
    %v4821 = vunpack.c.l.b16 %v4276
    %v4822 = vunpack.c.h.b16 %v4276
    %v4823 = vunpack.c.l.b16 %v4277
    %v4824 = vunpack.c.h.b16 %v4277
    %v4825 = vunpack.c.l.b16 %v4278
    %v4826 = vunpack.c.h.b16 %v4278
    %v4827 = vunpack.c.l.b16 %v4279
    %v4828 = vunpack.c.h.b16 %v4279
    %v4829 = vunpack.c.l.b16 %v4280
    %v4830 = vunpack.c.h.b16 %v4280
    %v4831 = vunpack.c.l.b16 %v4281
    %v4832 = vunpack.c.h.b16 %v4281
    %v4833 = vunpack.c.l.b16 %v4282
    %v4834 = vunpack.c.h.b16 %v4282
    %v4835 = vunpack.c.l.b16 %v4283
    %v4836 = vunpack.c.h.b16 %v4283
    %v4837 = vunpack.c.l.b16 %v4284
    %v4838 = vunpack.c.h.b16 %v4284
    %v4839 = vunpack.c.l.b16 %v4285
    %v4840 = vunpack.c.h.b16 %v4285
    %v4841 = vunpack.c.l.b16 %v4286
    %v4842 = vunpack.c.h.b16 %v4286
    %v4843 = vunpack.c.l.b16 %v4287
    %v4844 = vunpack.c.h.b16 %v4287
    %v4845 = vunpack.c.l.b16 %v4288
    %v4846 = vunpack.c.h.b16 %v4288
    %v4847 = vunpack.c.l.b16 %v4289
    %v4848 = vunpack.c.h.b16 %v4289
    %v4849 = vunpack.c.l.b16 %v4290
    %v4850 = vunpack.c.h.b16 %v4290
    %v4851 = vunpack.c.l.b16 %v4291
    %v4852 = vunpack.c.h.b16 %v4291
    %v4853 = vunpack.c.l.b16 %v4292
    %v4854 = vunpack.c.h.b16 %v4292
    %v4855 = vunpack.c.l.b16 %v4293
    %v4856 = vunpack.c.h.b16 %v4293
    %v4857 = vunpack.c.l.b16 %v4294
    %v4858 = vunpack.c.h.b16 %v4294
    %v4859 = vunpack.c.l.b16 %v4295
    %v4860 = vunpack.c.h.b16 %v4295
    %v4861 = vunpack.c.l.b16 %v4296
    %v4862 = vunpack.c.h.b16 %v4296
    %v4863 = vunpack.c.l.b16 %v4297
    %v4864 = vunpack.c.h.b16 %v4297
    %v4865 = vunpack.c.l.b16 %v4298
    %v4866 = vunpack.c.h.b16 %v4298
    %v4867 = vunpack.c.l.b16 %v4299
    %v4868 = vunpack.c.h.b16 %v4299
    %v4869 = vunpack.c.l.b16 %v4300
    %v4870 = vunpack.c.h.b16 %v4300
    %v4871 = vunpack.c.l.b16 %v4301
    %v4872 = vunpack.c.h.b16 %v4301
    %v4873 = vunpack.c.l.b16 %v4302
    %v4874 = vunpack.c.h.b16 %v4302
    %v4875 = vunpack.c.l.b16 %v4303
    %v4876 = vunpack.c.h.b16 %v4303
    %v4877 = vunpack.c.l.b16 %v4304
    %v4878 = vunpack.c.h.b16 %v4304
    %v4879 = vunpack.c.l.b16 %v4305
    %v4880 = vunpack.c.h.b16 %v4305
    %v4881 = vunpack.c.l.b16 %v4306
    %v4882 = vunpack.c.h.b16 %v4306
    %v4883 = vunpack.c.l.b16 %v4307
    %v4884 = vunpack.c.h.b16 %v4307
    %v4885 = vunpack.c.l.b16 %v4308
    %v4886 = vunpack.c.h.b16 %v4308
    %v4887 = vunpack.c.l.b16 %v4309
    %v4888 = vunpack.c.h.b16 %v4309
    %v4889 = vunpack.c.l.b16 %v4310
    %v4890 = vunpack.c.h.b16 %v4310
    %v4891 = vunpack.c.l.b16 %v4311
    %v4892 = vunpack.c.h.b16 %v4311
    %v4893 = vunpack.c.l.b16 %v4312
    %v4894 = vunpack.c.h.b16 %v4312
    %v4895 = vunpack.c.l.b16 %v4313
    %v4896 = vunpack.c.h.b16 %v4313
    %v4897 = vunpack.c.l.b16 %v4314
    %v4898 = vunpack.c.h.b16 %v4314
    %v4899 = vunpack.c.l.b16 %v4315
    %v4900 = vunpack.c.h.b16 %v4315
    %v4901 = vunpack.c.l.b16 %v4316
    %v4902 = vunpack.c.h.b16 %v4316
    %v4903 = vpack.c.b16 %v4523, %v4519
    %v4904 = vpack.c.b16 %v4524, %v4520
    %v4905 = vpack.c.b16 %v4525, %v4521
    %v4906 = vpack.c.b16 %v4526, %v4522
    %v4907 = vpack.c.b16 %v4531, %v4527
    %v4908 = vpack.c.b16 %v4532, %v4528
    %v4909 = vpack.c.b16 %v4533, %v4529
    %v4910 = vpack.c.b16 %v4534, %v4530
    %v4911 = vpack.c.b16 %v4539, %v4535
    %v4912 = vpack.c.b16 %v4540, %v4536
    %v4913 = vpack.c.b16 %v4541, %v4537
    %v4914 = vpack.c.b16 %v4542, %v4538
    %v4915 = vpack.c.b16 %v4547, %v4543
    %v4916 = vpack.c.b16 %v4548, %v4544
    %v4917 = vpack.c.b16 %v4549, %v4545
    %v4918 = vpack.c.b16 %v4550, %v4546
    %v4919 = vpack.c.b16 %v4555, %v4551
    %v4920 = vpack.c.b16 %v4556, %v4552
    %v4921 = vpack.c.b16 %v4557, %v4553
    %v4922 = vpack.c.b16 %v4558, %v4554
    %v4923 = vpack.c.b16 %v4563, %v4559
    %v4924 = vpack.c.b16 %v4564, %v4560
    %v4925 = vpack.c.b16 %v4565, %v4561
    %v4926 = vpack.c.b16 %v4566, %v4562
    %v4927 = vpack.c.b16 %v4571, %v4567
    %v4928 = vpack.c.b16 %v4572, %v4568
    %v4929 = vpack.c.b16 %v4573, %v4569
    %v4930 = vpack.c.b16 %v4574, %v4570
    %v4931 = vpack.c.b16 %v4579, %v4575
    %v4932 = vpack.c.b16 %v4580, %v4576
    %v4933 = vpack.c.b16 %v4581, %v4577
    %v4934 = vpack.c.b16 %v4582, %v4578
    %v4935 = vpack.c.b16 %v4587, %v4583
    %v4936 = vpack.c.b16 %v4588, %v4584
    %v4937 = vpack.c.b16 %v4589, %v4585
    %v4938 = vpack.c.b16 %v4590, %v4586
    %v4939 = vpack.c.b16 %v4595, %v4591
    %v4940 = vpack.c.b16 %v4596, %v4592
    %v4941 = vpack.c.b16 %v4597, %v4593
    %v4942 = vpack.c.b16 %v4598, %v4594
    %v4943 = vpack.c.b16 %v4603, %v4599
    %v4944 = vpack.c.b16 %v4604, %v4600
    %v4945 = vpack.c.b16 %v4605, %v4601
    %v4946 = vpack.c.b16 %v4606, %v4602
    %v4947 = vpack.c.b16 %v4611, %v4607
    %v4948 = vpack.c.b16 %v4612, %v4608
    %v4949 = vpack.c.b16 %v4613, %v4609
    %v4950 = vpack.c.b16 %v4614, %v4610
    %v4951 = vpack.c.b16 %v4619, %v4615
    %v4952 = vpack.c.b16 %v4620, %v4616
    %v4953 = vpack.c.b16 %v4621, %v4617
    %v4954 = vpack.c.b16 %v4622, %v4618
    %v4955 = vpack.c.b16 %v4627, %v4623
    %v4956 = vpack.c.b16 %v4628, %v4624
    %v4957 = vpack.c.b16 %v4629, %v4625
    %v4958 = vpack.c.b16 %v4630, %v4626
    %v4959 = vpack.c.b16 %v4635, %v4631
    %v4960 = vpack.c.b16 %v4636, %v4632
    %v4961 = vpack.c.b16 %v4637, %v4633
    %v4962 = vpack.c.b16 %v4638, %v4634
    %v4963 = vpack.c.b16 %v4643, %v4639
    %v4964 = vpack.c.b16 %v4644, %v4640
    %v4965 = vpack.c.b16 %v4645, %v4641
    %v4966 = vpack.c.b16 %v4646, %v4642
    %v4967 = vpack.c.b16 %v4651, %v4647
    %v4968 = vpack.c.b16 %v4652, %v4648
    %v4969 = vpack.c.b16 %v4653, %v4649
    %v4970 = vpack.c.b16 %v4654, %v4650
    %v4971 = vpack.c.b16 %v4659, %v4655
    %v4972 = vpack.c.b16 %v4660, %v4656
    %v4973 = vpack.c.b16 %v4661, %v4657
    %v4974 = vpack.c.b16 %v4662, %v4658
    %v4975 = vpack.c.b16 %v4667, %v4663
    %v4976 = vpack.c.b16 %v4668, %v4664
    %v4977 = vpack.c.b16 %v4669, %v4665
    %v4978 = vpack.c.b16 %v4670, %v4666
    %v4979 = vpack.c.b16 %v4675, %v4671
    %v4980 = vpack.c.b16 %v4676, %v4672
    %v4981 = vpack.c.b16 %v4677, %v4673
    %v4982 = vpack.c.b16 %v4678, %v4674
    %v4983 = vpack.c.b16 %v4683, %v4679
    %v4984 = vpack.c.b16 %v4684, %v4680
    %v4985 = vpack.c.b16 %v4685, %v4681
    %v4986 = vpack.c.b16 %v4686, %v4682
    %v4987 = vpack.c.b16 %v4691, %v4687
    %v4988 = vpack.c.b16 %v4692, %v4688
    %v4989 = vpack.c.b16 %v4693, %v4689
    %v4990 = vpack.c.b16 %v4694, %v4690
    %v4991 = vpack.c.b16 %v4699, %v4695
    %v4992 = vpack.c.b16 %v4700, %v4696
    %v4993 = vpack.c.b16 %v4701, %v4697
    %v4994 = vpack.c.b16 %v4702, %v4698
    %v4995 = vpack.c.b16 %v4707, %v4703
    %v4996 = vpack.c.b16 %v4708, %v4704
    %v4997 = vpack.c.b16 %v4709, %v4705
    %v4998 = vpack.c.b16 %v4710, %v4706
    %v4999 = vpack.c.b16 %v4715, %v4711
    %v5000 = vpack.c.b16 %v4716, %v4712
    %v5001 = vpack.c.b16 %v4717, %v4713
    %v5002 = vpack.c.b16 %v4718, %v4714
    %v5003 = vpack.c.b16 %v4723, %v4719
    %v5004 = vpack.c.b16 %v4724, %v4720
    %v5005 = vpack.c.b16 %v4725, %v4721
    %v5006 = vpack.c.b16 %v4726, %v4722
    %v5007 = vpack.c.b16 %v4731, %v4727
    %v5008 = vpack.c.b16 %v4732, %v4728
    %v5009 = vpack.c.b16 %v4733, %v4729
    %v5010 = vpack.c.b16 %v4734, %v4730
    %v5011 = vpack.c.b16 %v4739, %v4735
    %v5012 = vpack.c.b16 %v4740, %v4736
    %v5013 = vpack.c.b16 %v4741, %v4737
    %v5014 = vpack.c.b16 %v4742, %v4738
    %v5015 = vpack.c.b16 %v4747, %v4743
    %v5016 = vpack.c.b16 %v4748, %v4744
    %v5017 = vpack.c.b16 %v4749, %v4745
    %v5018 = vpack.c.b16 %v4750, %v4746
    %v5019 = vpack.c.b16 %v4755, %v4751
    %v5020 = vpack.c.b16 %v4756, %v4752
    %v5021 = vpack.c.b16 %v4757, %v4753
    %v5022 = vpack.c.b16 %v4758, %v4754
    %v5023 = vpack.c.b16 %v4763, %v4759
    %v5024 = vpack.c.b16 %v4764, %v4760
    %v5025 = vpack.c.b16 %v4765, %v4761
    %v5026 = vpack.c.b16 %v4766, %v4762
    %v5027 = vpack.c.b16 %v4771, %v4767
    %v5028 = vpack.c.b16 %v4772, %v4768
    %v5029 = vpack.c.b16 %v4773, %v4769
    %v5030 = vpack.c.b16 %v4774, %v4770
    %v5031 = vpack.c.b16 %v4779, %v4775
    %v5032 = vpack.c.b16 %v4780, %v4776
    %v5033 = vpack.c.b16 %v4781, %v4777
    %v5034 = vpack.c.b16 %v4782, %v4778
    %v5035 = vpack.c.b16 %v4787, %v4783
    %v5036 = vpack.c.b16 %v4788, %v4784
    %v5037 = vpack.c.b16 %v4789, %v4785
    %v5038 = vpack.c.b16 %v4790, %v4786
    %v5039 = vpack.c.b16 %v4795, %v4791
    %v5040 = vpack.c.b16 %v4796, %v4792
    %v5041 = vpack.c.b16 %v4797, %v4793
    %v5042 = vpack.c.b16 %v4798, %v4794
    %v5043 = vpack.c.b16 %v4803, %v4799
    %v5044 = vpack.c.b16 %v4804, %v4800
    %v5045 = vpack.c.b16 %v4805, %v4801
    %v5046 = vpack.c.b16 %v4806, %v4802
    %v5047 = vpack.c.b16 %v4811, %v4807
    %v5048 = vpack.c.b16 %v4812, %v4808
    %v5049 = vpack.c.b16 %v4813, %v4809
    %v5050 = vpack.c.b16 %v4814, %v4810
    %v5051 = vpack.c.b16 %v4819, %v4815
    %v5052 = vpack.c.b16 %v4820, %v4816
    %v5053 = vpack.c.b16 %v4821, %v4817
    %v5054 = vpack.c.b16 %v4822, %v4818
    %v5055 = vpack.c.b16 %v4827, %v4823
    %v5056 = vpack.c.b16 %v4828, %v4824
    %v5057 = vpack.c.b16 %v4829, %v4825
    %v5058 = vpack.c.b16 %v4830, %v4826
    %v5059 = vpack.c.b16 %v4835, %v4831
    %v5060 = vpack.c.b16 %v4836, %v4832
    %v5061 = vpack.c.b16 %v4837, %v4833
    %v5062 = vpack.c.b16 %v4838, %v4834
    %v5063 = vpack.c.b16 %v4843, %v4839
    %v5064 = vpack.c.b16 %v4844, %v4840
    %v5065 = vpack.c.b16 %v4845, %v4841
    %v5066 = vpack.c.b16 %v4846, %v4842
    %v5067 = vpack.c.b16 %v4851, %v4847
    %v5068 = vpack.c.b16 %v4852, %v4848
    %v5069 = vpack.c.b16 %v4853, %v4849
    %v5070 = vpack.c.b16 %v4854, %v4850
    %v5071 = vpack.c.b16 %v4859, %v4855
    %v5072 = vpack.c.b16 %v4860, %v4856
    %v5073 = vpack.c.b16 %v4861, %v4857
    %v5074 = vpack.c.b16 %v4862, %v4858
    %v5075 = vpack.c.b16 %v4867, %v4863
    %v5076 = vpack.c.b16 %v4868, %v4864
    %v5077 = vpack.c.b16 %v4869, %v4865
    %v5078 = vpack.c.b16 %v4870, %v4866
    %v5079 = vpack.c.b16 %v4875, %v4871
    %v5080 = vpack.c.b16 %v4876, %v4872
    %v5081 = vpack.c.b16 %v4877, %v4873
    %v5082 = vpack.c.b16 %v4878, %v4874
    %v5083 = vpack.c.b16 %v4883, %v4879
    %v5084 = vpack.c.b16 %v4884, %v4880
    %v5085 = vpack.c.b16 %v4885, %v4881
    %v5086 = vpack.c.b16 %v4886, %v4882
    %v5087 = vpack.c.b16 %v4891, %v4887
    %v5088 = vpack.c.b16 %v4892, %v4888
    %v5089 = vpack.c.b16 %v4893, %v4889
    %v5090 = vpack.c.b16 %v4894, %v4890
    %v5091 = vpack.c.b16 %v4899, %v4895
    %v5092 = vpack.c.b16 %v4900, %v4896
    %v5093 = vpack.c.b16 %v4901, %v4897
    %v5094 = vpack.c.b16 %v4902, %v4898
    %5287 = vmatpush.bf16.msra.mxu0 %v4931
    %5288 = vmatpush.bf16.msra.mxu0 %v4927
    %5289 = vmatpush.bf16.msra.mxu0 %v4923
    %5290 = vmatpush.bf16.msra.mxu0 %v4919
    %5291 = vmatpush.bf16.msra.mxu0 %v4915
    %5292 = vmatpush.bf16.msra.mxu0 %v4911
    %5293 = vmatpush.bf16.msra.mxu0 %v4907
    %5294 = vmatpush.bf16.msra.mxu0 %v4903
    %5295 = vmatmul.bf16.gmra.mxu0 %v4119
    %v5296 = vpop.f32.mrf.mxu0
    %v5297 = vadd.f32 %v4319, %v5296
    %v5298 = vpop.f32.mrf.mxu0
    %5299 = vdwg.mxu0
    %5300 = vmatpush.bf16.msra.mxu0 %v4963
    %5301 = vmatpush.bf16.msra.mxu0 %v4959
    %5302 = vmatpush.bf16.msra.mxu0 %v4955
    %5303 = vmatpush.bf16.msra.mxu0 %v4951
    %5304 = vmatpush.bf16.msra.mxu0 %v4947
    %5305 = vmatpush.bf16.msra.mxu0 %v4943
    %5306 = vmatpush.bf16.msra.mxu0 %v4939
    %5307 = vmatpush.bf16.msra.mxu0 %v4935
    %5308 = vmatmul.bf16.gmra.mxu0 %v4120
    %v5309 = vpop.f32.mrf.mxu0
    %v5310 = vadd.f32 %v5297, %v5309
    %v5311 = vpop.f32.mrf.mxu0
    %5312 = vdwg.mxu0
    %5313 = vmatpush.bf16.msra.mxu0 %v4995
    %5314 = vmatpush.bf16.msra.mxu0 %v4991
    %5315 = vmatpush.bf16.msra.mxu0 %v4987
    %5316 = vmatpush.bf16.msra.mxu0 %v4983
    %5317 = vmatpush.bf16.msra.mxu0 %v4979
    %5318 = vmatpush.bf16.msra.mxu0 %v4975
    %5319 = vmatpush.bf16.msra.mxu0 %v4971
    %5320 = vmatpush.bf16.msra.mxu0 %v4967
    %5321 = vmatmul.bf16.gmra.mxu0 %v4121
    %v5322 = vpop.f32.mrf.mxu0
    %v5323 = vadd.f32 %v5310, %v5322
    %v5324 = vpop.f32.mrf.mxu0
    %5325 = vdwg.mxu0
    %5326 = vmatpush.bf16.msra.mxu0 %v5027
    %5327 = vmatpush.bf16.msra.mxu0 %v5023
    %5328 = vmatpush.bf16.msra.mxu0 %v5019
    %5329 = vmatpush.bf16.msra.mxu0 %v5015
    %5330 = vmatpush.bf16.msra.mxu0 %v5011
    %5331 = vmatpush.bf16.msra.mxu0 %v5007
    %5332 = vmatpush.bf16.msra.mxu0 %v5003
    %5333 = vmatpush.bf16.msra.mxu0 %v4999
    %5334 = vmatmul.bf16.gmra.mxu0 %v4122
    %v5335 = vpop.f32.mrf.mxu0
    %v5336 = vadd.f32 %v5323, %v5335
    %v5337 = vpop.f32.mrf.mxu0
    %5338 = vdwg.mxu0
    %5339 = vmatpush.bf16.msra.mxu0 %v5059
    %5340 = vmatpush.bf16.msra.mxu0 %v5055
    %5341 = vmatpush.bf16.msra.mxu0 %v5051
    %5342 = vmatpush.bf16.msra.mxu0 %v5047
    %5343 = vmatpush.bf16.msra.mxu0 %v5043
    %5344 = vmatpush.bf16.msra.mxu0 %v5039
    %5345 = vmatpush.bf16.msra.mxu0 %v5035
    %5346 = vmatpush.bf16.msra.mxu0 %v5031
    %5347 = vmatmul.bf16.gmra.mxu0 %v4123
    %v5348 = vpop.f32.mrf.mxu0
    %v5349 = vadd.f32 %v5336, %v5348
    %v5350 = vpop.f32.mrf.mxu0
    %5351 = vdwg.mxu0
    %5352 = vmatpush.bf16.msra.mxu0 %v5091
    %5353 = vmatpush.bf16.msra.mxu0 %v5087
    %5354 = vmatpush.bf16.msra.mxu0 %v5083
    %5355 = vmatpush.bf16.msra.mxu0 %v5079
    %5356 = vmatpush.bf16.msra.mxu0 %v5075
    %5357 = vmatpush.bf16.msra.mxu0 %v5071
    %5358 = vmatpush.bf16.msra.mxu0 %v5067
    %5359 = vmatpush.bf16.msra.mxu0 %v5063
    %5360 = vmatmul.bf16.gmra.mxu0 %v4124
    %v5361 = vpop.f32.mrf.mxu0
    %v5362 = vadd.f32 %v5349, %v5361
    %v5363 = vpop.f32.mrf.mxu0
    %5364 = vdwg.mxu0
    %5365 = vmatpush.bf16.msra.mxu0 %v4932
    %5366 = vmatpush.bf16.msra.mxu0 %v4928
    %5367 = vmatpush.bf16.msra.mxu0 %v4924
    %5368 = vmatpush.bf16.msra.mxu0 %v4920
    %5369 = vmatpush.bf16.msra.mxu0 %v4916
    %5370 = vmatpush.bf16.msra.mxu0 %v4912
    %5371 = vmatpush.bf16.msra.mxu0 %v4908
    %5372 = vmatpush.bf16.msra.mxu0 %v4904
    %5373 = vmatmul.bf16.gmra.mxu0 %v4119
    %v5374 = vpop.f32.mrf.mxu0
    %v5375 = vadd.f32 %v4320, %v5374
    %v5376 = vpop.f32.mrf.mxu0
    %5377 = vdwg.mxu0
    %5378 = vmatpush.bf16.msra.mxu0 %v4964
    %5379 = vmatpush.bf16.msra.mxu0 %v4960
    %5380 = vmatpush.bf16.msra.mxu0 %v4956
    %5381 = vmatpush.bf16.msra.mxu0 %v4952
    %5382 = vmatpush.bf16.msra.mxu0 %v4948
    %5383 = vmatpush.bf16.msra.mxu0 %v4944
    %5384 = vmatpush.bf16.msra.mxu0 %v4940
    %5385 = vmatpush.bf16.msra.mxu0 %v4936
    %5386 = vmatmul.bf16.gmra.mxu0 %v4120
    %v5387 = vpop.f32.mrf.mxu0
    %v5388 = vadd.f32 %v5375, %v5387
    %v5389 = vpop.f32.mrf.mxu0
    %5390 = vdwg.mxu0
    %5391 = vmatpush.bf16.msra.mxu0 %v4996
    %5392 = vmatpush.bf16.msra.mxu0 %v4992
    %5393 = vmatpush.bf16.msra.mxu0 %v4988
    %5394 = vmatpush.bf16.msra.mxu0 %v4984
    %5395 = vmatpush.bf16.msra.mxu0 %v4980
    %5396 = vmatpush.bf16.msra.mxu0 %v4976
    %5397 = vmatpush.bf16.msra.mxu0 %v4972
    %5398 = vmatpush.bf16.msra.mxu0 %v4968
    %5399 = vmatmul.bf16.gmra.mxu0 %v4121
    %v5400 = vpop.f32.mrf.mxu0
    %v5401 = vadd.f32 %v5388, %v5400
    %v5402 = vpop.f32.mrf.mxu0
    %5403 = vdwg.mxu0
    %5404 = vmatpush.bf16.msra.mxu0 %v5028
    %5405 = vmatpush.bf16.msra.mxu0 %v5024
    %5406 = vmatpush.bf16.msra.mxu0 %v5020
    %5407 = vmatpush.bf16.msra.mxu0 %v5016
    %5408 = vmatpush.bf16.msra.mxu0 %v5012
    %5409 = vmatpush.bf16.msra.mxu0 %v5008
    %5410 = vmatpush.bf16.msra.mxu0 %v5004
    %5411 = vmatpush.bf16.msra.mxu0 %v5000
    %5412 = vmatmul.bf16.gmra.mxu0 %v4122
    %v5413 = vpop.f32.mrf.mxu0
    %v5414 = vadd.f32 %v5401, %v5413
    %v5415 = vpop.f32.mrf.mxu0
    %5416 = vdwg.mxu0
    %5417 = vmatpush.bf16.msra.mxu0 %v5060
    %5418 = vmatpush.bf16.msra.mxu0 %v5056
    %5419 = vmatpush.bf16.msra.mxu0 %v5052
    %5420 = vmatpush.bf16.msra.mxu0 %v5048
    %5421 = vmatpush.bf16.msra.mxu0 %v5044
    %5422 = vmatpush.bf16.msra.mxu0 %v5040
    %5423 = vmatpush.bf16.msra.mxu0 %v5036
    %5424 = vmatpush.bf16.msra.mxu0 %v5032
    %5425 = vmatmul.bf16.gmra.mxu0 %v4123
    %v5426 = vpop.f32.mrf.mxu0
    %v5427 = vadd.f32 %v5414, %v5426
    %v5428 = vpop.f32.mrf.mxu0
    %5429 = vdwg.mxu0
    %5430 = vmatpush.bf16.msra.mxu0 %v5092
    %5431 = vmatpush.bf16.msra.mxu0 %v5088
    %5432 = vmatpush.bf16.msra.mxu0 %v5084
    %5433 = vmatpush.bf16.msra.mxu0 %v5080
    %5434 = vmatpush.bf16.msra.mxu0 %v5076
    %5435 = vmatpush.bf16.msra.mxu0 %v5072
    %5436 = vmatpush.bf16.msra.mxu0 %v5068
    %5437 = vmatpush.bf16.msra.mxu0 %v5064
    %5438 = vmatmul.bf16.gmra.mxu0 %v4124
    %v5439 = vpop.f32.mrf.mxu0
    %v5440 = vadd.f32 %v5427, %v5439
    %v5441 = vpop.f32.mrf.mxu0
    %5442 = vdwg.mxu0
    %5443 = vmatpush.bf16.msra.mxu0 %v4933
    %5444 = vmatpush.bf16.msra.mxu0 %v4929
    %5445 = vmatpush.bf16.msra.mxu0 %v4925
    %5446 = vmatpush.bf16.msra.mxu0 %v4921
    %5447 = vmatpush.bf16.msra.mxu0 %v4917
    %5448 = vmatpush.bf16.msra.mxu0 %v4913
    %5449 = vmatpush.bf16.msra.mxu0 %v4909
    %5450 = vmatpush.bf16.msra.mxu0 %v4905
    %5451 = vmatmul.bf16.gmra.mxu0 %v4119
    %v5452 = vpop.f32.mrf.mxu0
    %v5453 = vadd.f32 %v4321, %v5452
    %v5454 = vpop.f32.mrf.mxu0
    %5455 = vdwg.mxu0
    %5456 = vmatpush.bf16.msra.mxu0 %v4965
    %5457 = vmatpush.bf16.msra.mxu0 %v4961
    %5458 = vmatpush.bf16.msra.mxu0 %v4957
    %5459 = vmatpush.bf16.msra.mxu0 %v4953
    %5460 = vmatpush.bf16.msra.mxu0 %v4949
    %5461 = vmatpush.bf16.msra.mxu0 %v4945
    %5462 = vmatpush.bf16.msra.mxu0 %v4941
    %5463 = vmatpush.bf16.msra.mxu0 %v4937
    %5464 = vmatmul.bf16.gmra.mxu0 %v4120
    %v5465 = vpop.f32.mrf.mxu0
    %v5466 = vadd.f32 %v5453, %v5465
    %v5467 = vpop.f32.mrf.mxu0
    %5468 = vdwg.mxu0
    %5469 = vmatpush.bf16.msra.mxu0 %v4997
    %5470 = vmatpush.bf16.msra.mxu0 %v4993
    %5471 = vmatpush.bf16.msra.mxu0 %v4989
    %5472 = vmatpush.bf16.msra.mxu0 %v4985
    %5473 = vmatpush.bf16.msra.mxu0 %v4981
    %5474 = vmatpush.bf16.msra.mxu0 %v4977
    %5475 = vmatpush.bf16.msra.mxu0 %v4973
    %5476 = vmatpush.bf16.msra.mxu0 %v4969
    %5477 = vmatmul.bf16.gmra.mxu0 %v4121
    %v5478 = vpop.f32.mrf.mxu0
    %v5479 = vadd.f32 %v5466, %v5478
    %v5480 = vpop.f32.mrf.mxu0
    %5481 = vdwg.mxu0
    %5482 = vmatpush.bf16.msra.mxu0 %v5029
    %5483 = vmatpush.bf16.msra.mxu0 %v5025
    %5484 = vmatpush.bf16.msra.mxu0 %v5021
    %5485 = vmatpush.bf16.msra.mxu0 %v5017
    %5486 = vmatpush.bf16.msra.mxu0 %v5013
    %5487 = vmatpush.bf16.msra.mxu0 %v5009
    %5488 = vmatpush.bf16.msra.mxu0 %v5005
    %5489 = vmatpush.bf16.msra.mxu0 %v5001
    %5490 = vmatmul.bf16.gmra.mxu0 %v4122
    %v5491 = vpop.f32.mrf.mxu0
    %v5492 = vadd.f32 %v5479, %v5491
    %v5493 = vpop.f32.mrf.mxu0
    %5494 = vdwg.mxu0
    %5495 = vmatpush.bf16.msra.mxu0 %v5061
    %5496 = vmatpush.bf16.msra.mxu0 %v5057
    %5497 = vmatpush.bf16.msra.mxu0 %v5053
    %5498 = vmatpush.bf16.msra.mxu0 %v5049
    %5499 = vmatpush.bf16.msra.mxu0 %v5045
    %5500 = vmatpush.bf16.msra.mxu0 %v5041
    %5501 = vmatpush.bf16.msra.mxu0 %v5037
    %5502 = vmatpush.bf16.msra.mxu0 %v5033
    %5503 = vmatmul.bf16.gmra.mxu0 %v4123
    %v5504 = vpop.f32.mrf.mxu0
    %v5505 = vadd.f32 %v5492, %v5504
    %v5506 = vpop.f32.mrf.mxu0
    %5507 = vdwg.mxu0
    %5508 = vmatpush.bf16.msra.mxu0 %v5093
    %5509 = vmatpush.bf16.msra.mxu0 %v5089
    %5510 = vmatpush.bf16.msra.mxu0 %v5085
    %5511 = vmatpush.bf16.msra.mxu0 %v5081
    %5512 = vmatpush.bf16.msra.mxu0 %v5077
    %5513 = vmatpush.bf16.msra.mxu0 %v5073
    %5514 = vmatpush.bf16.msra.mxu0 %v5069
    %5515 = vmatpush.bf16.msra.mxu0 %v5065
    %5516 = vmatmul.bf16.gmra.mxu0 %v4124
    %v5517 = vpop.f32.mrf.mxu0
    %v5518 = vadd.f32 %v5505, %v5517
    %v5519 = vpop.f32.mrf.mxu0
    %5520 = vdwg.mxu0
    %5521 = vmatpush.bf16.msra.mxu0 %v4934
    %5522 = vmatpush.bf16.msra.mxu0 %v4930
    %5523 = vmatpush.bf16.msra.mxu0 %v4926
    %5524 = vmatpush.bf16.msra.mxu0 %v4922
    %5525 = vmatpush.bf16.msra.mxu0 %v4918
    %5526 = vmatpush.bf16.msra.mxu0 %v4914
    %5527 = vmatpush.bf16.msra.mxu0 %v4910
    %5528 = vmatpush.bf16.msra.mxu0 %v4906
    %5529 = vmatmul.bf16.gmra.mxu0 %v4119
    %v5530 = vpop.f32.mrf.mxu0
    %v5531 = vadd.f32 %v4322, %v5530
    %v5532 = vpop.f32.mrf.mxu0
    %5533 = vdwg.mxu0
    %5534 = vmatpush.bf16.msra.mxu0 %v4966
    %5535 = vmatpush.bf16.msra.mxu0 %v4962
    %5536 = vmatpush.bf16.msra.mxu0 %v4958
    %5537 = vmatpush.bf16.msra.mxu0 %v4954
    %5538 = vmatpush.bf16.msra.mxu0 %v4950
    %5539 = vmatpush.bf16.msra.mxu0 %v4946
    %5540 = vmatpush.bf16.msra.mxu0 %v4942
    %5541 = vmatpush.bf16.msra.mxu0 %v4938
    %5542 = vmatmul.bf16.gmra.mxu0 %v4120
    %v5543 = vpop.f32.mrf.mxu0
    %v5544 = vadd.f32 %v5531, %v5543
    %v5545 = vpop.f32.mrf.mxu0
    %5546 = vdwg.mxu0
    %5547 = vmatpush.bf16.msra.mxu0 %v4998
    %5548 = vmatpush.bf16.msra.mxu0 %v4994
    %5549 = vmatpush.bf16.msra.mxu0 %v4990
    %5550 = vmatpush.bf16.msra.mxu0 %v4986
    %5551 = vmatpush.bf16.msra.mxu0 %v4982
    %5552 = vmatpush.bf16.msra.mxu0 %v4978
    %5553 = vmatpush.bf16.msra.mxu0 %v4974
    %5554 = vmatpush.bf16.msra.mxu0 %v4970
    %5555 = vmatmul.bf16.gmra.mxu0 %v4121
    %v5556 = vpop.f32.mrf.mxu0
    %v5557 = vadd.f32 %v5544, %v5556
    %v5558 = vpop.f32.mrf.mxu0
    %5559 = vdwg.mxu0
    %5560 = vmatpush.bf16.msra.mxu0 %v5030
    %5561 = vmatpush.bf16.msra.mxu0 %v5026
    %5562 = vmatpush.bf16.msra.mxu0 %v5022
    %5563 = vmatpush.bf16.msra.mxu0 %v5018
    %5564 = vmatpush.bf16.msra.mxu0 %v5014
    %5565 = vmatpush.bf16.msra.mxu0 %v5010
    %5566 = vmatpush.bf16.msra.mxu0 %v5006
    %5567 = vmatpush.bf16.msra.mxu0 %v5002
    %5568 = vmatmul.bf16.gmra.mxu0 %v4122
    %v5569 = vpop.f32.mrf.mxu0
    %v5570 = vadd.f32 %v5557, %v5569
    %v5571 = vpop.f32.mrf.mxu0
    %5572 = vdwg.mxu0
    %5573 = vmatpush.bf16.msra.mxu0 %v5062
    %5574 = vmatpush.bf16.msra.mxu0 %v5058
    %5575 = vmatpush.bf16.msra.mxu0 %v5054
    %5576 = vmatpush.bf16.msra.mxu0 %v5050
    %5577 = vmatpush.bf16.msra.mxu0 %v5046
    %5578 = vmatpush.bf16.msra.mxu0 %v5042
    %5579 = vmatpush.bf16.msra.mxu0 %v5038
    %5580 = vmatpush.bf16.msra.mxu0 %v5034
    %5581 = vmatmul.bf16.gmra.mxu0 %v4123
    %v5582 = vpop.f32.mrf.mxu0
    %v5583 = vadd.f32 %v5570, %v5582
    %v5584 = vpop.f32.mrf.mxu0
    %5585 = vdwg.mxu0
    %5586 = vmatpush.bf16.msra.mxu0 %v5094
    %5587 = vmatpush.bf16.msra.mxu0 %v5090
    %5588 = vmatpush.bf16.msra.mxu0 %v5086
    %5589 = vmatpush.bf16.msra.mxu0 %v5082
    %5590 = vmatpush.bf16.msra.mxu0 %v5078
    %5591 = vmatpush.bf16.msra.mxu0 %v5074
    %5592 = vmatpush.bf16.msra.mxu0 %v5070
    %5593 = vmatpush.bf16.msra.mxu0 %v5066
    %5594 = vmatmul.bf16.gmra.mxu0 %v4124
    %v5595 = vpop.f32.mrf.mxu0
    %v5596 = vadd.f32 %v5583, %v5595
    %v5597 = vpop.f32.mrf.mxu0
    %5598 = vdwg.mxu0
    %v5599 = vmax.f32 %v5362, 0.0
    %v5600 = vmax.f32 %v5440, 0.0
    %v5601 = vmax.f32 %v5518, 0.0
    %v5602 = vmax.f32 %v5596, 0.0
    %v5603 = vmul.f32 %v4109, %v4109
    %v5604 = vmul.f32 %v4110, %v4110
    %v5605 = vmul.f32 %v4111, %v4111
    %v5606 = vmul.f32 %v4112, %v4112
    %v5607 = vadd.f32 %v5603, %v5604
    %v5608 = vadd.f32 %v5607, %v5605
    %v5609 = vadd.f32 %v5608, %v5606
    %5610 = vadd.xlane.f32.xlu0 %v5609
    %v5611 = vpop.xlane.xlu0 %5610
    %v5612 = vmax.f32 %v5611, 1e-24
    %v5613 = vrsqrt.pop %v5612
    %v5614 = vmul.f32 %v5613, %v5612
    %v5615 = vmul.f32 %v5614, %v5613
    %v5616 = vmul.f32 0.5, %v5615
    %v5617 = vsub.f32 1.5, %v5616
    %v5618 = vmul.f32 %v5613, %v5617
    %vm5619 = vweird.f32 %v5612
    %vm5620 = vweird.f32 %v5613
    %vm5621 = vmor %vm5619, %vm5620
    %v5622 = vsel %vm5621, %v5613, %v5618
    %v5623 = vmul.f32 %v5599, %v5599
    %v5624 = vmul.f32 %v5600, %v5600
    %v5625 = vmul.f32 %v5601, %v5601
    %v5626 = vmul.f32 %v5602, %v5602
    %v5627 = vadd.f32 %v5623, %v5624
    %v5628 = vadd.f32 %v5627, %v5625
    %v5629 = vadd.f32 %v5628, %v5626
    %5630 = vadd.xlane.f32.xlu0 %v5629
    %v5631 = vpop.xlane.xlu0 %5630
    %v5632 = vmax.f32 %v5631, 1e-24
    %v5633 = vrsqrt.pop %v5632
    %v5634 = vmul.f32 %v5633, %v5632
    %v5635 = vmul.f32 %v5634, %v5633
    %v5636 = vmul.f32 0.5, %v5635
    %v5637 = vsub.f32 1.5, %v5636
    %v5638 = vmul.f32 %v5633, %v5637
    %vm5639 = vweird.f32 %v5632
    %vm5640 = vweird.f32 %v5633
    %vm5641 = vmor %vm5639, %vm5640
    %v5642 = vsel %vm5641, %v5633, %v5638
    %v5643 = vpack.c.bf16 %v4109, %v4109
    %v5644 = vpack.c.bf16 %v4110, %v4110
    %v5645 = vpack.c.bf16 %v4111, %v4111
    %v5646 = vpack.c.bf16 %v4112, %v4112
    %v5647 = vld [vmem:[#allocation13] sm:$0xf]
    %v5648 = vld [vmem:[#allocation13 + $0x4] sm:$0xf]
    %v5649 = vld [vmem:[#allocation13 + $0x8] sm:$0xf]
    %v5650 = vld [vmem:[#allocation13 + $0xc] sm:$0xf]
    %v5651 = vld [vmem:[#allocation13 + $0x10] sm:$0xf]
    %v5652 = vld [vmem:[#allocation13 + $0x14] sm:$0xf]
    %v5653 = vld [vmem:[#allocation13 + $0x18] sm:$0xf]
    %v5654 = vld [vmem:[#allocation13 + $0x1c] sm:$0xf]
    %v5655 = vld [vmem:[#allocation13 + $0x20] sm:$0xf]
    %v5656 = vld [vmem:[#allocation13 + $0x24] sm:$0xf]
    %v5657 = vld [vmem:[#allocation13 + $0x28] sm:$0xf]
    %v5658 = vld [vmem:[#allocation13 + $0x2c] sm:$0xf]
    %v5659 = vld [vmem:[#allocation13 + $0x30] sm:$0xf]
    %v5660 = vld [vmem:[#allocation13 + $0x34] sm:$0xf]
    %v5661 = vld [vmem:[#allocation13 + $0x38] sm:$0xf]
    %v5662 = vld [vmem:[#allocation13 + $0x3c] sm:$0xf]
    %v5663 = vld [vmem:[#allocation13 + $0x40] sm:$0xf]
    %v5664 = vld [vmem:[#allocation13 + $0x44] sm:$0xf]
    %v5665 = vld [vmem:[#allocation13 + $0x48] sm:$0xf]
    %v5666 = vld [vmem:[#allocation13 + $0x4c] sm:$0xf]
    %v5667 = vld [vmem:[#allocation13 + $0x50] sm:$0xf]
    %v5668 = vld [vmem:[#allocation13 + $0x54] sm:$0xf]
    %v5669 = vld [vmem:[#allocation13 + $0x58] sm:$0xf]
    %v5670 = vld [vmem:[#allocation13 + $0x5c] sm:$0xf]
    %v5671 = vld [vmem:[#allocation13 + $0x60] sm:$0xf]
    %v5672 = vld [vmem:[#allocation13 + $0x64] sm:$0xf]
    %v5673 = vld [vmem:[#allocation13 + $0x68] sm:$0xf]
    %v5674 = vld [vmem:[#allocation13 + $0x6c] sm:$0xf]
    %v5675 = vld [vmem:[#allocation13 + $0x70] sm:$0xf]
    %v5676 = vld [vmem:[#allocation13 + $0x74] sm:$0xf]
    %v5677 = vld [vmem:[#allocation13 + $0x78] sm:$0xf]
    %v5678 = vld [vmem:[#allocation13 + $0x7c] sm:$0xf]
    %v5679 = vld [vmem:[#allocation13 + $0x80] sm:$0xf]
    %v5680 = vld [vmem:[#allocation13 + $0x84] sm:$0xf]
    %v5681 = vld [vmem:[#allocation13 + $0x88] sm:$0xf]
    %v5682 = vld [vmem:[#allocation13 + $0x8c] sm:$0xf]
    %v5683 = vld [vmem:[#allocation13 + $0x90] sm:$0xf]
    %v5684 = vld [vmem:[#allocation13 + $0x94] sm:$0xf]
    %v5685 = vld [vmem:[#allocation13 + $0x98] sm:$0xf]
    %v5686 = vld [vmem:[#allocation13 + $0x9c] sm:$0xf]
    %v5687 = vld [vmem:[#allocation13 + $0xa0] sm:$0xf]
    %v5688 = vld [vmem:[#allocation13 + $0xa4] sm:$0xf]
    %v5689 = vld [vmem:[#allocation13 + $0xa8] sm:$0xf]
    %v5690 = vld [vmem:[#allocation13 + $0xac] sm:$0xf]
    %v5691 = vld [vmem:[#allocation13 + $0xb0] sm:$0xf]
    %v5692 = vld [vmem:[#allocation13 + $0xb4] sm:$0xf]
    %v5693 = vld [vmem:[#allocation13 + $0xb8] sm:$0xf]
    %v5694 = vld [vmem:[#allocation13 + $0xbc] sm:$0xf]
    %v5695 = vld [vmem:[#allocation13 + $0xc0] sm:$0xf]
    %v5696 = vld [vmem:[#allocation13 + $0xc4] sm:$0xf]
    %v5697 = vld [vmem:[#allocation13 + $0xc8] sm:$0xf]
    %v5698 = vld [vmem:[#allocation13 + $0xcc] sm:$0xf]
    %v5699 = vld [vmem:[#allocation13 + $0xd0] sm:$0xf]
    %v5700 = vld [vmem:[#allocation13 + $0xd4] sm:$0xf]
    %v5701 = vld [vmem:[#allocation13 + $0xd8] sm:$0xf]
    %v5702 = vld [vmem:[#allocation13 + $0xdc] sm:$0xf]
    %v5703 = vld [vmem:[#allocation13 + $0xe0] sm:$0xf]
    %v5704 = vld [vmem:[#allocation13 + $0xe4] sm:$0xf]
    %v5705 = vld [vmem:[#allocation13 + $0xe8] sm:$0xf]
    %v5706 = vld [vmem:[#allocation13 + $0xec] sm:$0xf]
    %v5707 = vld [vmem:[#allocation13 + $0xf0] sm:$0xf]
    %v5708 = vld [vmem:[#allocation13 + $0xf4] sm:$0xf]
    %v5709 = vld [vmem:[#allocation13 + $0xf8] sm:$0xf]
    %v5710 = vld [vmem:[#allocation13 + $0xfc] sm:$0xf]
    %v5775 = vunpack.c.l.b16 %v5647
    %v5776 = vunpack.c.l.b16 %v5648
    %v5777 = vunpack.c.l.b16 %v5649
    %v5778 = vunpack.c.l.b16 %v5650
    %v5779 = vunpack.c.l.b16 %v5651
    %v5780 = vunpack.c.l.b16 %v5652
    %v5781 = vunpack.c.l.b16 %v5653
    %v5782 = vunpack.c.l.b16 %v5654
    %v5783 = vunpack.c.l.b16 %v5655
    %v5784 = vunpack.c.l.b16 %v5656
    %v5785 = vunpack.c.l.b16 %v5657
    %v5786 = vunpack.c.l.b16 %v5658
    %v5787 = vunpack.c.l.b16 %v5659
    %v5788 = vunpack.c.l.b16 %v5660
    %v5789 = vunpack.c.l.b16 %v5661
    %v5790 = vunpack.c.l.b16 %v5662
    %v5791 = vunpack.c.l.b16 %v5663
    %v5792 = vunpack.c.l.b16 %v5664
    %v5793 = vunpack.c.l.b16 %v5665
    %v5794 = vunpack.c.l.b16 %v5666
    %v5795 = vunpack.c.l.b16 %v5667
    %v5796 = vunpack.c.l.b16 %v5668
    %v5797 = vunpack.c.l.b16 %v5669
    %v5798 = vunpack.c.l.b16 %v5670
    %v5799 = vunpack.c.l.b16 %v5671
    %v5800 = vunpack.c.l.b16 %v5672
    %v5801 = vunpack.c.l.b16 %v5673
    %v5802 = vunpack.c.l.b16 %v5674
    %v5803 = vunpack.c.l.b16 %v5675
    %v5804 = vunpack.c.l.b16 %v5676
    %v5805 = vunpack.c.l.b16 %v5677
    %v5806 = vunpack.c.l.b16 %v5678
    %v5807 = vunpack.c.l.b16 %v5679
    %v5808 = vunpack.c.l.b16 %v5680
    %v5809 = vunpack.c.l.b16 %v5681
    %v5810 = vunpack.c.l.b16 %v5682
    %v5811 = vunpack.c.l.b16 %v5683
    %v5812 = vunpack.c.l.b16 %v5684
    %v5813 = vunpack.c.l.b16 %v5685
    %v5814 = vunpack.c.l.b16 %v5686
    %v5815 = vunpack.c.l.b16 %v5687
    %v5816 = vunpack.c.l.b16 %v5688
    %v5817 = vunpack.c.l.b16 %v5689
    %v5818 = vunpack.c.l.b16 %v5690
    %v5819 = vunpack.c.l.b16 %v5691
    %v5820 = vunpack.c.l.b16 %v5692
    %v5821 = vunpack.c.l.b16 %v5693
    %v5822 = vunpack.c.l.b16 %v5694
    %v5823 = vunpack.c.l.b16 %v5695
    %v5824 = vunpack.c.l.b16 %v5696
    %v5825 = vunpack.c.l.b16 %v5697
    %v5826 = vunpack.c.l.b16 %v5698
    %v5827 = vunpack.c.l.b16 %v5699
    %v5828 = vunpack.c.l.b16 %v5700
    %v5829 = vunpack.c.l.b16 %v5701
    %v5830 = vunpack.c.l.b16 %v5702
    %v5831 = vunpack.c.l.b16 %v5703
    %v5832 = vunpack.c.l.b16 %v5704
    %v5833 = vunpack.c.l.b16 %v5705
    %v5834 = vunpack.c.l.b16 %v5706
    %v5835 = vunpack.c.l.b16 %v5707
    %v5836 = vunpack.c.l.b16 %v5708
    %v5837 = vunpack.c.l.b16 %v5709
    %v5838 = vunpack.c.l.b16 %v5710
    %v5839 = vpack.c.b16 %v5776, %v5775
    %v5840 = vpack.c.b16 %v5778, %v5777
    %v5841 = vpack.c.b16 %v5780, %v5779
    %v5842 = vpack.c.b16 %v5782, %v5781
    %v5843 = vpack.c.b16 %v5784, %v5783
    %v5844 = vpack.c.b16 %v5786, %v5785
    %v5845 = vpack.c.b16 %v5788, %v5787
    %v5846 = vpack.c.b16 %v5790, %v5789
    %v5847 = vpack.c.b16 %v5792, %v5791
    %v5848 = vpack.c.b16 %v5794, %v5793
    %v5849 = vpack.c.b16 %v5796, %v5795
    %v5850 = vpack.c.b16 %v5798, %v5797
    %v5851 = vpack.c.b16 %v5800, %v5799
    %v5852 = vpack.c.b16 %v5802, %v5801
    %v5853 = vpack.c.b16 %v5804, %v5803
    %v5854 = vpack.c.b16 %v5806, %v5805
    %v5855 = vpack.c.b16 %v5808, %v5807
    %v5856 = vpack.c.b16 %v5810, %v5809
    %v5857 = vpack.c.b16 %v5812, %v5811
    %v5858 = vpack.c.b16 %v5814, %v5813
    %v5859 = vpack.c.b16 %v5816, %v5815
    %v5860 = vpack.c.b16 %v5818, %v5817
    %v5861 = vpack.c.b16 %v5820, %v5819
    %v5862 = vpack.c.b16 %v5822, %v5821
    %v5863 = vpack.c.b16 %v5824, %v5823
    %v5864 = vpack.c.b16 %v5826, %v5825
    %v5865 = vpack.c.b16 %v5828, %v5827
    %v5866 = vpack.c.b16 %v5830, %v5829
    %v5867 = vpack.c.b16 %v5832, %v5831
    %v5868 = vpack.c.b16 %v5834, %v5833
    %v5869 = vpack.c.b16 %v5836, %v5835
    %v5870 = vpack.c.b16 %v5838, %v5837
    %5903 = vmatpush.bf16.msra.mxu0 %v5846
    %5904 = vmatpush.bf16.msra.mxu0 %v5845
    %5905 = vmatpush.bf16.msra.mxu0 %v5844
    %5906 = vmatpush.bf16.msra.mxu0 %v5843
    %5907 = vmatpush.bf16.msra.mxu0 %v5842
    %5908 = vmatpush.bf16.msra.mxu0 %v5841
    %5909 = vmatpush.bf16.msra.mxu0 %v5840
    %5910 = vmatpush.bf16.msra.mxu0 %v5839
    %5911 = vmatmul.bf16.gmra.mxu0 %v5643
    %v5912 = vpop.f32.mrf.mxu0
    %v5913 = vadd.f32 0.0, %v5912
    %v5914 = vpop.f32.mrf.mxu0
    %5915 = vdwg.mxu0
    %5916 = vmatpush.bf16.msra.mxu0 %v5854
    %5917 = vmatpush.bf16.msra.mxu0 %v5853
    %5918 = vmatpush.bf16.msra.mxu0 %v5852
    %5919 = vmatpush.bf16.msra.mxu0 %v5851
    %5920 = vmatpush.bf16.msra.mxu0 %v5850
    %5921 = vmatpush.bf16.msra.mxu0 %v5849
    %5922 = vmatpush.bf16.msra.mxu0 %v5848
    %5923 = vmatpush.bf16.msra.mxu0 %v5847
    %5924 = vmatmul.bf16.gmra.mxu0 %v5644
    %v5925 = vpop.f32.mrf.mxu0
    %v5926 = vadd.f32 %v5913, %v5925
    %v5927 = vpop.f32.mrf.mxu0
    %5928 = vdwg.mxu0
    %5929 = vmatpush.bf16.msra.mxu0 %v5862
    %5930 = vmatpush.bf16.msra.mxu0 %v5861
    %5931 = vmatpush.bf16.msra.mxu0 %v5860
    %5932 = vmatpush.bf16.msra.mxu0 %v5859
    %5933 = vmatpush.bf16.msra.mxu0 %v5858
    %5934 = vmatpush.bf16.msra.mxu0 %v5857
    %5935 = vmatpush.bf16.msra.mxu0 %v5856
    %5936 = vmatpush.bf16.msra.mxu0 %v5855
    %5937 = vmatmul.bf16.gmra.mxu0 %v5645
    %v5938 = vpop.f32.mrf.mxu0
    %v5939 = vadd.f32 %v5926, %v5938
    %v5940 = vpop.f32.mrf.mxu0
    %5941 = vdwg.mxu0
    %5942 = vmatpush.bf16.msra.mxu0 %v5870
    %5943 = vmatpush.bf16.msra.mxu0 %v5869
    %5944 = vmatpush.bf16.msra.mxu0 %v5868
    %5945 = vmatpush.bf16.msra.mxu0 %v5867
    %5946 = vmatpush.bf16.msra.mxu0 %v5866
    %5947 = vmatpush.bf16.msra.mxu0 %v5865
    %5948 = vmatpush.bf16.msra.mxu0 %v5864
    %5949 = vmatpush.bf16.msra.mxu0 %v5863
    %5950 = vmatmul.bf16.gmra.mxu0 %v5646
    %v5951 = vpop.f32.mrf.mxu0
    %v5952 = vadd.f32 %v5939, %v5951
    %v5953 = vpop.f32.mrf.mxu0
    %5954 = vdwg.mxu0
    %v5955 = vpack.c.bf16 %v5599, %v5599
    %v5956 = vpack.c.bf16 %v5600, %v5600
    %v5957 = vpack.c.bf16 %v5601, %v5601
    %v5958 = vpack.c.bf16 %v5602, %v5602
    %v5959 = vld [vmem:[#allocation14] sm:$0xf]
    %v5960 = vld [vmem:[#allocation14 + $0x4] sm:$0xf]
    %v5961 = vld [vmem:[#allocation14 + $0x8] sm:$0xf]
    %v5962 = vld [vmem:[#allocation14 + $0xc] sm:$0xf]
    %v5963 = vld [vmem:[#allocation14 + $0x10] sm:$0xf]
    %v5964 = vld [vmem:[#allocation14 + $0x14] sm:$0xf]
    %v5965 = vld [vmem:[#allocation14 + $0x18] sm:$0xf]
    %v5966 = vld [vmem:[#allocation14 + $0x1c] sm:$0xf]
    %v5967 = vld [vmem:[#allocation14 + $0x20] sm:$0xf]
    %v5968 = vld [vmem:[#allocation14 + $0x24] sm:$0xf]
    %v5969 = vld [vmem:[#allocation14 + $0x28] sm:$0xf]
    %v5970 = vld [vmem:[#allocation14 + $0x2c] sm:$0xf]
    %v5971 = vld [vmem:[#allocation14 + $0x30] sm:$0xf]
    %v5972 = vld [vmem:[#allocation14 + $0x34] sm:$0xf]
    %v5973 = vld [vmem:[#allocation14 + $0x38] sm:$0xf]
    %v5974 = vld [vmem:[#allocation14 + $0x3c] sm:$0xf]
    %v5975 = vld [vmem:[#allocation14 + $0x40] sm:$0xf]
    %v5976 = vld [vmem:[#allocation14 + $0x44] sm:$0xf]
    %v5977 = vld [vmem:[#allocation14 + $0x48] sm:$0xf]
    %v5978 = vld [vmem:[#allocation14 + $0x4c] sm:$0xf]
    %v5979 = vld [vmem:[#allocation14 + $0x50] sm:$0xf]
    %v5980 = vld [vmem:[#allocation14 + $0x54] sm:$0xf]
    %v5981 = vld [vmem:[#allocation14 + $0x58] sm:$0xf]
    %v5982 = vld [vmem:[#allocation14 + $0x5c] sm:$0xf]
    %v5983 = vld [vmem:[#allocation14 + $0x60] sm:$0xf]
    %v5984 = vld [vmem:[#allocation14 + $0x64] sm:$0xf]
    %v5985 = vld [vmem:[#allocation14 + $0x68] sm:$0xf]
    %v5986 = vld [vmem:[#allocation14 + $0x6c] sm:$0xf]
    %v5987 = vld [vmem:[#allocation14 + $0x70] sm:$0xf]
    %v5988 = vld [vmem:[#allocation14 + $0x74] sm:$0xf]
    %v5989 = vld [vmem:[#allocation14 + $0x78] sm:$0xf]
    %v5990 = vld [vmem:[#allocation14 + $0x7c] sm:$0xf]
    %v5991 = vld [vmem:[#allocation14 + $0x80] sm:$0xf]
    %v5992 = vld [vmem:[#allocation14 + $0x84] sm:$0xf]
    %v5993 = vld [vmem:[#allocation14 + $0x88] sm:$0xf]
    %v5994 = vld [vmem:[#allocation14 + $0x8c] sm:$0xf]
    %v5995 = vld [vmem:[#allocation14 + $0x90] sm:$0xf]
    %v5996 = vld [vmem:[#allocation14 + $0x94] sm:$0xf]
    %v5997 = vld [vmem:[#allocation14 + $0x98] sm:$0xf]
    %v5998 = vld [vmem:[#allocation14 + $0x9c] sm:$0xf]
    %v5999 = vld [vmem:[#allocation14 + $0xa0] sm:$0xf]
    %v6000 = vld [vmem:[#allocation14 + $0xa4] sm:$0xf]
    %v6001 = vld [vmem:[#allocation14 + $0xa8] sm:$0xf]
    %v6002 = vld [vmem:[#allocation14 + $0xac] sm:$0xf]
    %v6003 = vld [vmem:[#allocation14 + $0xb0] sm:$0xf]
    %v6004 = vld [vmem:[#allocation14 + $0xb4] sm:$0xf]
    %v6005 = vld [vmem:[#allocation14 + $0xb8] sm:$0xf]
    %v6006 = vld [vmem:[#allocation14 + $0xbc] sm:$0xf]
    %v6007 = vld [vmem:[#allocation14 + $0xc0] sm:$0xf]
    %v6008 = vld [vmem:[#allocation14 + $0xc4] sm:$0xf]
    %v6009 = vld [vmem:[#allocation14 + $0xc8] sm:$0xf]
    %v6010 = vld [vmem:[#allocation14 + $0xcc] sm:$0xf]
    %v6011 = vld [vmem:[#allocation14 + $0xd0] sm:$0xf]
    %v6012 = vld [vmem:[#allocation14 + $0xd4] sm:$0xf]
    %v6013 = vld [vmem:[#allocation14 + $0xd8] sm:$0xf]
    %v6014 = vld [vmem:[#allocation14 + $0xdc] sm:$0xf]
    %v6015 = vld [vmem:[#allocation14 + $0xe0] sm:$0xf]
    %v6016 = vld [vmem:[#allocation14 + $0xe4] sm:$0xf]
    %v6017 = vld [vmem:[#allocation14 + $0xe8] sm:$0xf]
    %v6018 = vld [vmem:[#allocation14 + $0xec] sm:$0xf]
    %v6019 = vld [vmem:[#allocation14 + $0xf0] sm:$0xf]
    %v6020 = vld [vmem:[#allocation14 + $0xf4] sm:$0xf]
    %v6021 = vld [vmem:[#allocation14 + $0xf8] sm:$0xf]
    %v6022 = vld [vmem:[#allocation14 + $0xfc] sm:$0xf]
    %v6087 = vunpack.c.l.b16 %v5959
    %v6088 = vunpack.c.l.b16 %v5960
    %v6089 = vunpack.c.l.b16 %v5961
    %v6090 = vunpack.c.l.b16 %v5962
    %v6091 = vunpack.c.l.b16 %v5963
    %v6092 = vunpack.c.l.b16 %v5964
    %v6093 = vunpack.c.l.b16 %v5965
    %v6094 = vunpack.c.l.b16 %v5966
    %v6095 = vunpack.c.l.b16 %v5967
    %v6096 = vunpack.c.l.b16 %v5968
    %v6097 = vunpack.c.l.b16 %v5969
    %v6098 = vunpack.c.l.b16 %v5970
    %v6099 = vunpack.c.l.b16 %v5971
    %v6100 = vunpack.c.l.b16 %v5972
    %v6101 = vunpack.c.l.b16 %v5973
    %v6102 = vunpack.c.l.b16 %v5974
    %v6103 = vunpack.c.l.b16 %v5975
    %v6104 = vunpack.c.l.b16 %v5976
    %v6105 = vunpack.c.l.b16 %v5977
    %v6106 = vunpack.c.l.b16 %v5978
    %v6107 = vunpack.c.l.b16 %v5979
    %v6108 = vunpack.c.l.b16 %v5980
    %v6109 = vunpack.c.l.b16 %v5981
    %v6110 = vunpack.c.l.b16 %v5982
    %v6111 = vunpack.c.l.b16 %v5983
    %v6112 = vunpack.c.l.b16 %v5984
    %v6113 = vunpack.c.l.b16 %v5985
    %v6114 = vunpack.c.l.b16 %v5986
    %v6115 = vunpack.c.l.b16 %v5987
    %v6116 = vunpack.c.l.b16 %v5988
    %v6117 = vunpack.c.l.b16 %v5989
    %v6118 = vunpack.c.l.b16 %v5990
    %v6119 = vunpack.c.l.b16 %v5991
    %v6120 = vunpack.c.l.b16 %v5992
    %v6121 = vunpack.c.l.b16 %v5993
    %v6122 = vunpack.c.l.b16 %v5994
    %v6123 = vunpack.c.l.b16 %v5995
    %v6124 = vunpack.c.l.b16 %v5996
    %v6125 = vunpack.c.l.b16 %v5997
    %v6126 = vunpack.c.l.b16 %v5998
    %v6127 = vunpack.c.l.b16 %v5999
    %v6128 = vunpack.c.l.b16 %v6000
    %v6129 = vunpack.c.l.b16 %v6001
    %v6130 = vunpack.c.l.b16 %v6002
    %v6131 = vunpack.c.l.b16 %v6003
    %v6132 = vunpack.c.l.b16 %v6004
    %v6133 = vunpack.c.l.b16 %v6005
    %v6134 = vunpack.c.l.b16 %v6006
    %v6135 = vunpack.c.l.b16 %v6007
    %v6136 = vunpack.c.l.b16 %v6008
    %v6137 = vunpack.c.l.b16 %v6009
    %v6138 = vunpack.c.l.b16 %v6010
    %v6139 = vunpack.c.l.b16 %v6011
    %v6140 = vunpack.c.l.b16 %v6012
    %v6141 = vunpack.c.l.b16 %v6013
    %v6142 = vunpack.c.l.b16 %v6014
    %v6143 = vunpack.c.l.b16 %v6015
    %v6144 = vunpack.c.l.b16 %v6016
    %v6145 = vunpack.c.l.b16 %v6017
    %v6146 = vunpack.c.l.b16 %v6018
    %v6147 = vunpack.c.l.b16 %v6019
    %v6148 = vunpack.c.l.b16 %v6020
    %v6149 = vunpack.c.l.b16 %v6021
    %v6150 = vunpack.c.l.b16 %v6022
    %v6151 = vpack.c.b16 %v6088, %v6087
    %v6152 = vpack.c.b16 %v6090, %v6089
    %v6153 = vpack.c.b16 %v6092, %v6091
    %v6154 = vpack.c.b16 %v6094, %v6093
    %v6155 = vpack.c.b16 %v6096, %v6095
    %v6156 = vpack.c.b16 %v6098, %v6097
    %v6157 = vpack.c.b16 %v6100, %v6099
    %v6158 = vpack.c.b16 %v6102, %v6101
    %v6159 = vpack.c.b16 %v6104, %v6103
    %v6160 = vpack.c.b16 %v6106, %v6105
    %v6161 = vpack.c.b16 %v6108, %v6107
    %v6162 = vpack.c.b16 %v6110, %v6109
    %v6163 = vpack.c.b16 %v6112, %v6111
    %v6164 = vpack.c.b16 %v6114, %v6113
    %v6165 = vpack.c.b16 %v6116, %v6115
    %v6166 = vpack.c.b16 %v6118, %v6117
    %v6167 = vpack.c.b16 %v6120, %v6119
    %v6168 = vpack.c.b16 %v6122, %v6121
    %v6169 = vpack.c.b16 %v6124, %v6123
    %v6170 = vpack.c.b16 %v6126, %v6125
    %v6171 = vpack.c.b16 %v6128, %v6127
    %v6172 = vpack.c.b16 %v6130, %v6129
    %v6173 = vpack.c.b16 %v6132, %v6131
    %v6174 = vpack.c.b16 %v6134, %v6133
    %v6175 = vpack.c.b16 %v6136, %v6135
    %v6176 = vpack.c.b16 %v6138, %v6137
    %v6177 = vpack.c.b16 %v6140, %v6139
    %v6178 = vpack.c.b16 %v6142, %v6141
    %v6179 = vpack.c.b16 %v6144, %v6143
    %v6180 = vpack.c.b16 %v6146, %v6145
    %v6181 = vpack.c.b16 %v6148, %v6147
    %v6182 = vpack.c.b16 %v6150, %v6149
    %6215 = vmatpush.bf16.msra.mxu0 %v6158
    %6216 = vmatpush.bf16.msra.mxu0 %v6157
    %6217 = vmatpush.bf16.msra.mxu0 %v6156
    %6218 = vmatpush.bf16.msra.mxu0 %v6155
    %6219 = vmatpush.bf16.msra.mxu0 %v6154
    %6220 = vmatpush.bf16.msra.mxu0 %v6153
    %6221 = vmatpush.bf16.msra.mxu0 %v6152
    %6222 = vmatpush.bf16.msra.mxu0 %v6151
    %6223 = vmatmul.bf16.gmra.mxu0 %v5955
    %v6224 = vpop.f32.mrf.mxu0
    %v6225 = vadd.f32 0.0, %v6224
    %v6226 = vpop.f32.mrf.mxu0
    %6227 = vdwg.mxu0
    %6228 = vmatpush.bf16.msra.mxu0 %v6166
    %6229 = vmatpush.bf16.msra.mxu0 %v6165
    %6230 = vmatpush.bf16.msra.mxu0 %v6164
    %6231 = vmatpush.bf16.msra.mxu0 %v6163
    %6232 = vmatpush.bf16.msra.mxu0 %v6162
    %6233 = vmatpush.bf16.msra.mxu0 %v6161
    %6234 = vmatpush.bf16.msra.mxu0 %v6160
    %6235 = vmatpush.bf16.msra.mxu0 %v6159
    %6236 = vmatmul.bf16.gmra.mxu0 %v5956
    %v6237 = vpop.f32.mrf.mxu0
    %v6238 = vadd.f32 %v6225, %v6237
    %v6239 = vpop.f32.mrf.mxu0
    %6240 = vdwg.mxu0
    %6241 = vmatpush.bf16.msra.mxu0 %v6174
    %6242 = vmatpush.bf16.msra.mxu0 %v6173
    %6243 = vmatpush.bf16.msra.mxu0 %v6172
    %6244 = vmatpush.bf16.msra.mxu0 %v6171
    %6245 = vmatpush.bf16.msra.mxu0 %v6170
    %6246 = vmatpush.bf16.msra.mxu0 %v6169
    %6247 = vmatpush.bf16.msra.mxu0 %v6168
    %6248 = vmatpush.bf16.msra.mxu0 %v6167
    %6249 = vmatmul.bf16.gmra.mxu0 %v5957
    %v6250 = vpop.f32.mrf.mxu0
    %v6251 = vadd.f32 %v6238, %v6250
    %v6252 = vpop.f32.mrf.mxu0
    %6253 = vdwg.mxu0
    %6254 = vmatpush.bf16.msra.mxu0 %v6182
    %6255 = vmatpush.bf16.msra.mxu0 %v6181
    %6256 = vmatpush.bf16.msra.mxu0 %v6180
    %6257 = vmatpush.bf16.msra.mxu0 %v6179
    %6258 = vmatpush.bf16.msra.mxu0 %v6178
    %6259 = vmatpush.bf16.msra.mxu0 %v6177
    %6260 = vmatpush.bf16.msra.mxu0 %v6176
    %6261 = vmatpush.bf16.msra.mxu0 %v6175
    %6262 = vmatmul.bf16.gmra.mxu0 %v5958
    %v6263 = vpop.f32.mrf.mxu0
    %v6264 = vadd.f32 %v6251, %v6263
    %v6265 = vpop.f32.mrf.mxu0
    %6266 = vdwg.mxu0
    %v6267 = vmul.f32 %v5952, %v5622
    %v6268 = vmul.f32 %v6264, %v5642
    %v6269 = vadd.f32 %v6267, %v6268
    %v6270 = vld [vmem:[#allocation16] sm:$0x1]
    %v6272 = vperm.slane %v6270, 0
    %v6274 = vadd.f32 %v6269, %v6272
    %6275 = vst [vmem:[#allocation17] sm:$0xff] %v6274
    // Predicated region
    $region74: #{tpu_custom_call.1} parent=1 // pred_check
      _
    $region75: #{tpu_custom_call.1} parent=1 // pred_check_branch
      %6277 = sbr.rel (0) target = $region77
    $region76: #{tpu_custom_call.1} parent=1 // pred_region
      %6279 = vsyncadd [#allocation4], 0
      %s6281 = sshll.u32 [#allocation17], 4
      %s6282 = int_to_ptr.vmem [resolvable:$true] %s6281
      %s6283 = sshll.u32 %s9, 4
      %s6284 = int_to_ptr.hbm [resolvable:$true] %s6283
      %6286 = dma.vmem_to_hbm [thread:$0]  %s6282, 128, %s6284, [#allocation4]
    $region77: #{tpu_custom_call.1} parent=1 // pred_fallthru
      _
    // Predicated region
    $region78: #{tpu_custom_call.1} parent=1 // pred_check
      _
    $region79: #{tpu_custom_call.1} parent=1 // pred_check_branch
      %6288 = sbr.rel (0) target = $region81
    $region80: #{tpu_custom_call.1} parent=1 // pred_region
      %6290 = dma.done [#allocation4], 128
    $region81: #{tpu_custom_call.1} parent=1 // pred_fallthru
      _
    %6291 = vsyncpa [#allocation3], 1
    %6292 = vsyncpa [#allocation6], 1
    %6293 = vsyncpa [#allocation9], 1
    %6294 = vsyncpa [#allocation12], 1
    %6295 = vsyncpa [#allocation15], 1
    %6296 = vsyncpa [#allocation4], 1

</llo_original>
